<compile_context>
chip_gen: v7x
topology: tpu7x:2x2x1
jax: 0.10.0
libtpu: 0.0.40
codegen_flags: <defaults>
</compile_context>

<pallas_src>
from functools import partial

import numpy as np
import jax
import jax.numpy as jnp
from jax.experimental import pallas as pl
from jax.experimental.pallas import tpu as pltpu

COMPUTE_DTYPE = jnp.bfloat16     # MXU-native; all accumulation stays f32


def _round_up(x, m):
    return ((x + m - 1) // m) * m


# ----------------------------- fused Pallas kernel ---------------------------

def style_encoder_kernel(t1_ref, w1_ref, b1_ref,
                         g2_ref, w2_ref, b2_ref,
                         g3_ref, w3_ref, b3_ref,
                         wp_ref, bp_ref, o_ref):
    """Entire StyleEncoder forward for ONE sample, fully resident in VMEM.

    t1_ref : (1, P1, K1)  conv1 im2col taps (P1 = H*W, K1 = 9 padded to 16)
    w1_ref : (K1, C1)     conv1 merged-tap weight
    g2_ref : (9, P2, P1)  constant 0/1 gather matrices (stride-2 im2col, conv2)
    w2_ref : (9, C1, C2)  conv2 per-tap weights
    g3_ref : (9, P3, P2)  gather matrices for conv3
    w3_ref : (9, C2, C3)  conv3 per-tap weights
    wp_ref : (C3, Sp)     style projection (style dim padded to 128 lanes)
    bp_ref : (1, Sp)      proj bias + style bias (zero-padded)
    o_ref  : (1, 1, Sp)
    """
    f32 = jnp.float32

    # conv1 (k=3, s=1, p=1) + ReLU : one merged-tap matmul on the MXU.
    a1 = jnp.dot(t1_ref[0], w1_ref[...], preferred_element_type=f32)
    a1 = jnp.maximum(a1 + b1_ref[...], 0.0).astype(COMPUTE_DTYPE)      # (P1, C1)

    # conv2 (k=3, s=2, p=1) + ReLU : 9 x (gather-matmul, weight-matmul).
    p2, c2 = g2_ref.shape[1], w2_ref.shape[2]
    acc2 = jnp.zeros((p2, c2), f32)
    for k in range(9):
        tap = jnp.dot(g2_ref[k], a1, preferred_element_type=f32)       # (P2, C1)
        acc2 += jnp.dot(tap.astype(COMPUTE_DTYPE), w2_ref[k],
                        preferred_element_type=f32)                    # (P2, C2)
    a2 = jnp.maximum(acc2 + b2_ref[...], 0.0).astype(COMPUTE_DTYPE)

    # conv3 (k=3, s=2, p=1) + ReLU.
    p3, c3 = g3_ref.shape[1], w3_ref.shape[2]
    acc3 = jnp.zeros((p3, c3), f32)
    for k in range(9):
        tap = jnp.dot(g3_ref[k], a2, preferred_element_type=f32)       # (P3, C2)
        acc3 += jnp.dot(tap.astype(COMPUTE_DTYPE), w3_ref[k],
                        preferred_element_type=f32)                    # (P3, C3)
    a3 = jnp.maximum(acc3 + b3_ref[...], 0.0)                          # f32

    # AdaptiveAvgPool2d(1) + Linear + proj/style biases + ReLU.
    pooled = jnp.mean(a3, axis=0, keepdims=True)                       # (1, C3)
    style = jnp.dot(pooled.astype(COMPUTE_DTYPE), wp_ref[...],
                    preferred_element_type=f32) + bp_ref[...]
    o_ref[0] = jnp.maximum(style, 0.0).astype(o_ref.dtype)


# ----------------------------- wrapper ---------------------------------------

@partial(jax.jit, static_argnums=(2,))
def style_encoder_forward(x_nchw, kp, style_dim):
    x = x_nchw[:, 0, :, :].astype(jnp.float32)          # (N, H, W), Cin = 1
    N, H, W = x.shape

    # conv1 im2col on the raw image (tiny: 9 taps of the single input channel).
    xp = jnp.pad(x, ((0, 0), (1, 1), (1, 1)))
    taps = [xp[:, ky:ky + H, kx:kx + W].reshape(N, H * W)
            for ky in range(3) for kx in range(3)]
    t1 = jnp.stack(taps, axis=-1)                                       # (N, H*W, 9)
    k1 = kp["w1"].shape[0]                                              # 16
    t1 = jnp.pad(t1, ((0, 0), (0, 0), (0, k1 - 9))).astype(COMPUTE_DTYPE)

    P1 = H * W
    P2 = kp["g2"].shape[1]
    P3 = kp["g3"].shape[1]
    C1 = kp["w1"].shape[1]
    C2 = kp["w2"].shape[2]
    C3 = kp["w3"].shape[2]
    Sp = kp["wp"].shape[1]

    out = pl.pallas_call(
        style_encoder_kernel,
        out_shape=jax.ShapeDtypeStruct((N, 1, Sp), jnp.float32),
        grid=(N,),
        in_specs=[
            pl.BlockSpec((1, P1, k1), lambda i: (i, 0, 0)),     # per-sample taps
            pl.BlockSpec((k1, C1), lambda i: (0, 0)),           # weights: staged once
            pl.BlockSpec((1, C1), lambda i: (0, 0)),
            pl.BlockSpec((9, P2, P1), lambda i: (0, 0, 0)),
            pl.BlockSpec((9, C1, C2), lambda i: (0, 0, 0)),
            pl.BlockSpec((1, C2), lambda i: (0, 0)),
            pl.BlockSpec((9, P3, P2), lambda i: (0, 0, 0)),
            pl.BlockSpec((9, C2, C3), lambda i: (0, 0, 0)),
            pl.BlockSpec((1, C3), lambda i: (0, 0)),
            pl.BlockSpec((C3, Sp), lambda i: (0, 0)),
            pl.BlockSpec((1, Sp), lambda i: (0, 0)),
        ],
        out_specs=pl.BlockSpec((1, 1, Sp), lambda i: (i, 0, 0)),
        compiler_params=pltpu.CompilerParams(
            dimension_semantics=("parallel",)),                 # v7x: 1 sample / TC
    )(t1, kp["w1"], kp["b1"], kp["g2"], kp["w2"], kp["b2"],
      kp["g3"], kp["w3"], kp["b3"], kp["wp"], kp["bp"])

    return out.reshape(N, Sp)[:, :style_dim]


# ----------------------------- parameter prep --------------------------------

def _gather_matrices(h_in, w_in, h_out, w_out, stride):
    """0/1 matrices G[k] (P_out, P_in): stride-`stride`, pad-1, 3x3 im2col."""
    g = np.zeros((9, h_out * w_out, h_in * w_in), np.float32)
    for ky in range(3):
        for kx in range(3):
            k = ky * 3 + kx
            for i in range(h_out):
                hi = stride * i + ky - 1
                if not 0 <= hi < h_in:
                    continue
                for j in range(w_out):
                    wi = stride * j + kx - 1
                    if 0 <= wi < w_in:
                        g[k, i * w_out + j, hi * w_in + wi] = 1.0
    return g


def prepare_params(p, H, W):
    """PyTorch-layout params -> kernel layout (bf16, tap-major, lane-padded)."""
    c1, c2, c3 = p["w1"].shape[0], p["w2"].shape[0], p["w3"].shape[0]
    s = p["wp"].shape[0]
    sp = _round_up(s, 128)
    H2, W2 = (H - 1) // 2 + 1, (W - 1) // 2 + 1
    H3, W3 = (H2 - 1) // 2 + 1, (W2 - 1) // 2 + 1

    def per_tap(w_oihw):
        # (Cout, Cin, 3, 3) -> (9, Cin, Cout), tap k = ky*3 + kx
        cout, cin = w_oihw.shape[0], w_oihw.shape[1]
        return jnp.transpose(w_oihw, (2, 3, 1, 0)).reshape(9, cin, cout)

    w1 = jnp.transpose(p["w1"], (2, 3, 1, 0)).reshape(9, c1)   # Cin = 1
    w1 = jnp.pad(w1, ((0, 16 - 9), (0, 0)))                    # K: 9 -> 16 only

    return {
        "w1": w1.astype(COMPUTE_DTYPE),
        "b1": p["b1"].reshape(1, c1).astype(jnp.float32),
        "g2": jnp.asarray(_gather_matrices(H, W, H2, W2, 2), COMPUTE_DTYPE),
        "w2": per_tap(p["w2"]).astype(COMPUTE_DTYPE),
        "b2": p["b2"].reshape(1, c2).astype(jnp.float32),
        "g3": jnp.asarray(_gather_matrices(H2, W2, H3, W3, 2), COMPUTE_DTYPE),
        "w3": per_tap(p["w3"]).astype(COMPUTE_DTYPE),
        "b3": p["b3"].reshape(1, c3).astype(jnp.float32),
        "wp": jnp.pad(p["wp"].T, ((0, 0), (0, sp - s))).astype(COMPUTE_DTYPE),
        "bp": jnp.pad((p["bp"] + p["sb"]).reshape(1, s),
                      ((0, 0), (0, sp - s))).astype(jnp.float32),
    }


# ----------------------------- parameters ------------------------------------

def spectral_normalize(w, n_iter=30):
    """Divide conv weight by its largest singular value (weight viewed as
    (Cout, -1)) — mirrors torch spectral_norm reparameterization, applied here
    as deterministic one-time parameter setup."""
    cout = w.shape[0]
    wm = w.reshape(cout, -1)
    v = jnp.ones((wm.shape[1],), w.dtype) / jnp.sqrt(wm.shape[1])
    u = jnp.ones((cout,), w.dtype) / jnp.sqrt(cout)
    for _ in range(n_iter):
        u = wm @ v
        u = u / (jnp.linalg.norm(u) + 1e-12)
        v = wm.T @ u
        v = v / (jnp.linalg.norm(v) + 1e-12)
    sigma = u @ (wm @ v)
    return w / sigma


def init_params(key, dim_in, style_dim, max_conv_dim):
    ks = jax.random.split(key, 8)

    def conv_w(k, cout, cin):
        return jax.random.normal(k, (cout, cin, 3, 3), jnp.float32) / np.sqrt(cin * 9)

    return {
        "w1": spectral_normalize(conv_w(ks[0], dim_in, 1)),
        "b1": 0.01 * jax.random.normal(ks[1], (dim_in,), jnp.float32),
        "w2": spectral_normalize(conv_w(ks[2], dim_in * 2, dim_in)),
        "b2": 0.01 * jax.random.normal(ks[3], (dim_in * 2,), jnp.float32),
        "w3": spectral_normalize(conv_w(ks[4], max_conv_dim, dim_in * 2)),
        "b3": 0.01 * jax.random.normal(ks[5], (max_conv_dim,), jnp.float32),
        "wp": jax.random.normal(ks[6], (style_dim, max_conv_dim), jnp.float32)
              / np.sqrt(max_conv_dim),
        "bp": 0.01 * jax.random.normal(ks[7], (style_dim,), jnp.float32),
        "sb": jnp.zeros((style_dim,), jnp.float32),   # self.bias (init zeros)
    }


# ----------------------------- pure-JAX reference ----------------------------

def ref_forward(x_nchw, p):
    def conv(x, w, b, stride):
        y = jax.lax.conv_general_dilated(
            x, w, (stride, stride), [(1, 1), (1, 1)],
            dimension_numbers=("NCHW", "OIHW", "NCHW"),
            precision=jax.lax.Precision.HIGHEST)
        return jax.nn.relu(y + b[None, :, None, None])

    y = conv(x_nchw, p["w1"], p["b1"], 1)
    y = conv(y, p["w2"], p["b2"], 2)
    y = conv(y, p["w3"], p["b3"], 2)
    feat = y.mean(axis=(2, 3))                         # AdaptiveAvgPool2d(1) + view
    style = feat @ p["wp"].T + p["bp"] + p["sb"]
    return jax.nn.relu(style)


# ----------------------------- main -------------------------------------------

if __name__ == "__main__":
    dim_in, style_dim, max_conv_dim = 48, 48, 384       # module defaults
    N, H, W = 2, 16, 16                                  # small spatial size

    key = jax.random.PRNGKey(0)
    k_x, k_p = jax.random.split(key)
    x = jax.random.normal(k_x, (N, 1, H, W), jnp.float32)   # NCHW, 1 input channel
    params = init_params(k_p, dim_in, style_dim, max_conv_dim)
    kparams = prepare_params(params, H, W)

    style = jax.block_until_ready(style_encoder_forward(x, kparams, style_dim))

    assert style.shape == (N, style_dim)
    ref = ref_forward(x, params)
    # bf16 MXU inputs with f32 accumulation: compare at 2e-2.
    np.testing.assert_allclose(np.asarray(style), np.asarray(ref),
                               rtol=2e-2, atol=2e-2)
    print("KERNEL_OK")
</pallas_src>

<mosaic_0001>
module attributes {stable_mosaic.version = 11 : i64} {
  func.func @style_encoder_kernel(%arg0: i32, %arg1: memref<1x256x16xbf16, #tpu.memory_space<vmem>>, %arg2: memref<16x48xbf16, #tpu.memory_space<vmem>>, %arg3: memref<1x48xf32, #tpu.memory_space<vmem>>, %arg4: memref<9x64x256xbf16, #tpu.memory_space<vmem>>, %arg5: memref<9x48x96xbf16, #tpu.memory_space<vmem>>, %arg6: memref<1x96xf32, #tpu.memory_space<vmem>>, %arg7: memref<9x16x64xbf16, #tpu.memory_space<vmem>>, %arg8: memref<9x96x384xbf16, #tpu.memory_space<vmem>>, %arg9: memref<1x384xf32, #tpu.memory_space<vmem>>, %arg10: memref<384x128xbf16, #tpu.memory_space<vmem>>, %arg11: memref<1x128xf32, #tpu.memory_space<vmem>>, %arg12: memref<1x1x128xf32, #tpu.memory_space<vmem>>) attributes {dimension_semantics = [#tpu.dimension_semantics<parallel>], iteration_bounds = array<i64: 2>, scalar_prefetch = 0 : i64, scratch_operands = 0 : i64, tpu.core_type = #tpu.core_type<tc>, window_params = [{transform_indices = @transform_0, window_bounds = array<i64: 1, 256, 16>}, {pipeline_mode = #tpu.pipeline_mode<synchronous>, transform_indices = @transform_1, window_bounds = array<i64: 16, 48>}, {pipeline_mode = #tpu.pipeline_mode<synchronous>, transform_indices = @transform_2, window_bounds = array<i64: 1, 48>}, {pipeline_mode = #tpu.pipeline_mode<synchronous>, transform_indices = @transform_3, window_bounds = array<i64: 9, 64, 256>}, {pipeline_mode = #tpu.pipeline_mode<synchronous>, transform_indices = @transform_4, window_bounds = array<i64: 9, 48, 96>}, {pipeline_mode = #tpu.pipeline_mode<synchronous>, transform_indices = @transform_5, window_bounds = array<i64: 1, 96>}, {pipeline_mode = #tpu.pipeline_mode<synchronous>, transform_indices = @transform_6, window_bounds = array<i64: 9, 16, 64>}, {pipeline_mode = #tpu.pipeline_mode<synchronous>, transform_indices = @transform_7, window_bounds = array<i64: 9, 96, 384>}, {pipeline_mode = #tpu.pipeline_mode<synchronous>, transform_indices = @transform_8, window_bounds = array<i64: 1, 384>}, {pipeline_mode = #tpu.pipeline_mode<synchronous>, transform_indices = @transform_9, window_bounds = array<i64: 384, 128>}, {pipeline_mode = #tpu.pipeline_mode<synchronous>, transform_indices = @transform_10, window_bounds = array<i64: 1, 128>}, {transform_indices = @transform_11, window_bounds = array<i64: 1, 1, 128>}]} {
    %c0 = arith.constant 0 : index
    %c0_0 = arith.constant 0 : index
    %c0_1 = arith.constant 0 : index
    %0 = vector.load %arg1[%c0, %c0_0, %c0_1] : memref<1x256x16xbf16, #tpu.memory_space<vmem>>, vector<1x256x16xbf16>
    %1 = vector.shape_cast %0 : vector<1x256x16xbf16> to vector<256x16xbf16>
    %c0_2 = arith.constant 0 : index
    %c0_3 = arith.constant 0 : index
    %2 = vector.load %arg2[%c0_2, %c0_3] : memref<16x48xbf16, #tpu.memory_space<vmem>>, vector<16x48xbf16>
    %cst = arith.constant dense<0.000000e+00> : vector<256x48xf32>
    %3 = tpu.matmul %1, %2, %cst {dimension_numbers = #tpu.dot_dimension_numbers<[1], [0], [0], [1], [0, 0, 1, 1], [], []>} : vector<256x16xbf16>, vector<16x48xbf16>, vector<256x48xf32> -> vector<256x48xf32>
    %c0_4 = arith.constant 0 : index
    %c0_5 = arith.constant 0 : index
    %4 = vector.load %arg3[%c0_4, %c0_5] : memref<1x48xf32, #tpu.memory_space<vmem>>, vector<1x48xf32>
    %5 = vector.broadcast %4 : vector<1x48xf32> to vector<256x48xf32>
    %6 = arith.addf %3, %5 : vector<256x48xf32>
    %cst_6 = arith.constant 0.000000e+00 : f32
    %7 = vector.broadcast %cst_6 : f32 to vector<256x48xf32>
    %8 = arith.maximumf %6, %7 : vector<256x48xf32>
    %9 = arith.truncf %8 : vector<256x48xf32> to vector<256x48xbf16>
    %cst_7 = arith.constant 0.000000e+00 : f32
    %10 = vector.broadcast %cst_7 : f32 to vector<64x96xf32>
    %c0_8 = arith.constant 0 : index
    %c0_9 = arith.constant 0 : index
    %c0_10 = arith.constant 0 : index
    %11 = vector.load %arg4[%c0_8, %c0_9, %c0_10] : memref<9x64x256xbf16, #tpu.memory_space<vmem>>, vector<1x64x256xbf16>
    %12 = vector.shape_cast %11 : vector<1x64x256xbf16> to vector<64x256xbf16>
    %cst_11 = arith.constant dense<0.000000e+00> : vector<64x48xf32>
    %13 = tpu.matmul %12, %9, %cst_11 {dimension_numbers = #tpu.dot_dimension_numbers<[1], [0], [0], [1], [0, 0, 1, 1], [], []>} : vector<64x256xbf16>, vector<256x48xbf16>, vector<64x48xf32> -> vector<64x48xf32>
    %14 = arith.truncf %13 : vector<64x48xf32> to vector<64x48xbf16>
    %c0_12 = arith.constant 0 : index
    %c0_13 = arith.constant 0 : index
    %c0_14 = arith.constant 0 : index
    %15 = vector.load %arg5[%c0_12, %c0_13, %c0_14] : memref<9x48x96xbf16, #tpu.memory_space<vmem>>, vector<1x48x96xbf16>
    %16 = vector.shape_cast %15 : vector<1x48x96xbf16> to vector<48x96xbf16>
    %cst_15 = arith.constant dense<0.000000e+00> : vector<64x96xf32>
    %17 = tpu.matmul %14, %16, %cst_15 {dimension_numbers = #tpu.dot_dimension_numbers<[1], [0], [0], [1], [0, 0, 1, 1], [], []>} : vector<64x48xbf16>, vector<48x96xbf16>, vector<64x96xf32> -> vector<64x96xf32>
    %18 = arith.addf %10, %17 : vector<64x96xf32>
    %c1 = arith.constant 1 : index
    %c0_16 = arith.constant 0 : index
    %c0_17 = arith.constant 0 : index
    %19 = vector.load %arg4[%c1, %c0_16, %c0_17] : memref<9x64x256xbf16, #tpu.memory_space<vmem>>, vector<1x64x256xbf16>
    %20 = vector.shape_cast %19 : vector<1x64x256xbf16> to vector<64x256xbf16>
    %cst_18 = arith.constant dense<0.000000e+00> : vector<64x48xf32>
    %21 = tpu.matmul %20, %9, %cst_18 {dimension_numbers = #tpu.dot_dimension_numbers<[1], [0], [0], [1], [0, 0, 1, 1], [], []>} : vector<64x256xbf16>, vector<256x48xbf16>, vector<64x48xf32> -> vector<64x48xf32>
    %22 = arith.truncf %21 : vector<64x48xf32> to vector<64x48xbf16>
    %c1_19 = arith.constant 1 : index
    %c0_20 = arith.constant 0 : index
    %c0_21 = arith.constant 0 : index
    %23 = vector.load %arg5[%c1_19, %c0_20, %c0_21] : memref<9x48x96xbf16, #tpu.memory_space<vmem>>, vector<1x48x96xbf16>
    %24 = vector.shape_cast %23 : vector<1x48x96xbf16> to vector<48x96xbf16>
    %cst_22 = arith.constant dense<0.000000e+00> : vector<64x96xf32>
    %25 = tpu.matmul %22, %24, %cst_22 {dimension_numbers = #tpu.dot_dimension_numbers<[1], [0], [0], [1], [0, 0, 1, 1], [], []>} : vector<64x48xbf16>, vector<48x96xbf16>, vector<64x96xf32> -> vector<64x96xf32>
    %26 = arith.addf %18, %25 : vector<64x96xf32>
    %c2 = arith.constant 2 : index
    %c0_23 = arith.constant 0 : index
    %c0_24 = arith.constant 0 : index
    %27 = vector.load %arg4[%c2, %c0_23, %c0_24] : memref<9x64x256xbf16, #tpu.memory_space<vmem>>, vector<1x64x256xbf16>
    %28 = vector.shape_cast %27 : vector<1x64x256xbf16> to vector<64x256xbf16>
    %cst_25 = arith.constant dense<0.000000e+00> : vector<64x48xf32>
    %29 = tpu.matmul %28, %9, %cst_25 {dimension_numbers = #tpu.dot_dimension_numbers<[1], [0], [0], [1], [0, 0, 1, 1], [], []>} : vector<64x256xbf16>, vector<256x48xbf16>, vector<64x48xf32> -> vector<64x48xf32>
    %30 = arith.truncf %29 : vector<64x48xf32> to vector<64x48xbf16>
    %c2_26 = arith.constant 2 : index
    %c0_27 = arith.constant 0 : index
    %c0_28 = arith.constant 0 : index
    %31 = vector.load %arg5[%c2_26, %c0_27, %c0_28] : memref<9x48x96xbf16, #tpu.memory_space<vmem>>, vector<1x48x96xbf16>
    %32 = vector.shape_cast %31 : vector<1x48x96xbf16> to vector<48x96xbf16>
    %cst_29 = arith.constant dense<0.000000e+00> : vector<64x96xf32>
    %33 = tpu.matmul %30, %32, %cst_29 {dimension_numbers = #tpu.dot_dimension_numbers<[1], [0], [0], [1], [0, 0, 1, 1], [], []>} : vector<64x48xbf16>, vector<48x96xbf16>, vector<64x96xf32> -> vector<64x96xf32>
    %34 = arith.addf %26, %33 : vector<64x96xf32>
    %c3 = arith.constant 3 : index
    %c0_30 = arith.constant 0 : index
    %c0_31 = arith.constant 0 : index
    %35 = vector.load %arg4[%c3, %c0_30, %c0_31] : memref<9x64x256xbf16, #tpu.memory_space<vmem>>, vector<1x64x256xbf16>
    %36 = vector.shape_cast %35 : vector<1x64x256xbf16> to vector<64x256xbf16>
    %cst_32 = arith.constant dense<0.000000e+00> : vector<64x48xf32>
    %37 = tpu.matmul %36, %9, %cst_32 {dimension_numbers = #tpu.dot_dimension_numbers<[1], [0], [0], [1], [0, 0, 1, 1], [], []>} : vector<64x256xbf16>, vector<256x48xbf16>, vector<64x48xf32> -> vector<64x48xf32>
    %38 = arith.truncf %37 : vector<64x48xf32> to vector<64x48xbf16>
    %c3_33 = arith.constant 3 : index
    %c0_34 = arith.constant 0 : index
    %c0_35 = arith.constant 0 : index
    %39 = vector.load %arg5[%c3_33, %c0_34, %c0_35] : memref<9x48x96xbf16, #tpu.memory_space<vmem>>, vector<1x48x96xbf16>
    %40 = vector.shape_cast %39 : vector<1x48x96xbf16> to vector<48x96xbf16>
    %cst_36 = arith.constant dense<0.000000e+00> : vector<64x96xf32>
    %41 = tpu.matmul %38, %40, %cst_36 {dimension_numbers = #tpu.dot_dimension_numbers<[1], [0], [0], [1], [0, 0, 1, 1], [], []>} : vector<64x48xbf16>, vector<48x96xbf16>, vector<64x96xf32> -> vector<64x96xf32>
    %42 = arith.addf %34, %41 : vector<64x96xf32>
    %c4 = arith.constant 4 : index
    %c0_37 = arith.constant 0 : index
    %c0_38 = arith.constant 0 : index
    %43 = vector.load %arg4[%c4, %c0_37, %c0_38] : memref<9x64x256xbf16, #tpu.memory_space<vmem>>, vector<1x64x256xbf16>
    %44 = vector.shape_cast %43 : vector<1x64x256xbf16> to vector<64x256xbf16>
    %cst_39 = arith.constant dense<0.000000e+00> : vector<64x48xf32>
    %45 = tpu.matmul %44, %9, %cst_39 {dimension_numbers = #tpu.dot_dimension_numbers<[1], [0], [0], [1], [0, 0, 1, 1], [], []>} : vector<64x256xbf16>, vector<256x48xbf16>, vector<64x48xf32> -> vector<64x48xf32>
    %46 = arith.truncf %45 : vector<64x48xf32> to vector<64x48xbf16>
    %c4_40 = arith.constant 4 : index
    %c0_41 = arith.constant 0 : index
    %c0_42 = arith.constant 0 : index
    %47 = vector.load %arg5[%c4_40, %c0_41, %c0_42] : memref<9x48x96xbf16, #tpu.memory_space<vmem>>, vector<1x48x96xbf16>
    %48 = vector.shape_cast %47 : vector<1x48x96xbf16> to vector<48x96xbf16>
    %cst_43 = arith.constant dense<0.000000e+00> : vector<64x96xf32>
    %49 = tpu.matmul %46, %48, %cst_43 {dimension_numbers = #tpu.dot_dimension_numbers<[1], [0], [0], [1], [0, 0, 1, 1], [], []>} : vector<64x48xbf16>, vector<48x96xbf16>, vector<64x96xf32> -> vector<64x96xf32>
    %50 = arith.addf %42, %49 : vector<64x96xf32>
    %c5 = arith.constant 5 : index
    %c0_44 = arith.constant 0 : index
    %c0_45 = arith.constant 0 : index
    %51 = vector.load %arg4[%c5, %c0_44, %c0_45] : memref<9x64x256xbf16, #tpu.memory_space<vmem>>, vector<1x64x256xbf16>
    %52 = vector.shape_cast %51 : vector<1x64x256xbf16> to vector<64x256xbf16>
    %cst_46 = arith.constant dense<0.000000e+00> : vector<64x48xf32>
    %53 = tpu.matmul %52, %9, %cst_46 {dimension_numbers = #tpu.dot_dimension_numbers<[1], [0], [0], [1], [0, 0, 1, 1], [], []>} : vector<64x256xbf16>, vector<256x48xbf16>, vector<64x48xf32> -> vector<64x48xf32>
    %54 = arith.truncf %53 : vector<64x48xf32> to vector<64x48xbf16>
    %c5_47 = arith.constant 5 : index
    %c0_48 = arith.constant 0 : index
    %c0_49 = arith.constant 0 : index
    %55 = vector.load %arg5[%c5_47, %c0_48, %c0_49] : memref<9x48x96xbf16, #tpu.memory_space<vmem>>, vector<1x48x96xbf16>
    %56 = vector.shape_cast %55 : vector<1x48x96xbf16> to vector<48x96xbf16>
    %cst_50 = arith.constant dense<0.000000e+00> : vector<64x96xf32>
    %57 = tpu.matmul %54, %56, %cst_50 {dimension_numbers = #tpu.dot_dimension_numbers<[1], [0], [0], [1], [0, 0, 1, 1], [], []>} : vector<64x48xbf16>, vector<48x96xbf16>, vector<64x96xf32> -> vector<64x96xf32>
    %58 = arith.addf %50, %57 : vector<64x96xf32>
    %c6 = arith.constant 6 : index
    %c0_51 = arith.constant 0 : index
    %c0_52 = arith.constant 0 : index
    %59 = vector.load %arg4[%c6, %c0_51, %c0_52] : memref<9x64x256xbf16, #tpu.memory_space<vmem>>, vector<1x64x256xbf16>
    %60 = vector.shape_cast %59 : vector<1x64x256xbf16> to vector<64x256xbf16>
    %cst_53 = arith.constant dense<0.000000e+00> : vector<64x48xf32>
    %61 = tpu.matmul %60, %9, %cst_53 {dimension_numbers = #tpu.dot_dimension_numbers<[1], [0], [0], [1], [0, 0, 1, 1], [], []>} : vector<64x256xbf16>, vector<256x48xbf16>, vector<64x48xf32> -> vector<64x48xf32>
    %62 = arith.truncf %61 : vector<64x48xf32> to vector<64x48xbf16>
    %c6_54 = arith.constant 6 : index
    %c0_55 = arith.constant 0 : index
    %c0_56 = arith.constant 0 : index
    %63 = vector.load %arg5[%c6_54, %c0_55, %c0_56] : memref<9x48x96xbf16, #tpu.memory_space<vmem>>, vector<1x48x96xbf16>
    %64 = vector.shape_cast %63 : vector<1x48x96xbf16> to vector<48x96xbf16>
    %cst_57 = arith.constant dense<0.000000e+00> : vector<64x96xf32>
    %65 = tpu.matmul %62, %64, %cst_57 {dimension_numbers = #tpu.dot_dimension_numbers<[1], [0], [0], [1], [0, 0, 1, 1], [], []>} : vector<64x48xbf16>, vector<48x96xbf16>, vector<64x96xf32> -> vector<64x96xf32>
    %66 = arith.addf %58, %65 : vector<64x96xf32>
    %c7 = arith.constant 7 : index
    %c0_58 = arith.constant 0 : index
    %c0_59 = arith.constant 0 : index
    %67 = vector.load %arg4[%c7, %c0_58, %c0_59] : memref<9x64x256xbf16, #tpu.memory_space<vmem>>, vector<1x64x256xbf16>
    %68 = vector.shape_cast %67 : vector<1x64x256xbf16> to vector<64x256xbf16>
    %cst_60 = arith.constant dense<0.000000e+00> : vector<64x48xf32>
    %69 = tpu.matmul %68, %9, %cst_60 {dimension_numbers = #tpu.dot_dimension_numbers<[1], [0], [0], [1], [0, 0, 1, 1], [], []>} : vector<64x256xbf16>, vector<256x48xbf16>, vector<64x48xf32> -> vector<64x48xf32>
    %70 = arith.truncf %69 : vector<64x48xf32> to vector<64x48xbf16>
    %c7_61 = arith.constant 7 : index
    %c0_62 = arith.constant 0 : index
    %c0_63 = arith.constant 0 : index
    %71 = vector.load %arg5[%c7_61, %c0_62, %c0_63] : memref<9x48x96xbf16, #tpu.memory_space<vmem>>, vector<1x48x96xbf16>
    %72 = vector.shape_cast %71 : vector<1x48x96xbf16> to vector<48x96xbf16>
    %cst_64 = arith.constant dense<0.000000e+00> : vector<64x96xf32>
    %73 = tpu.matmul %70, %72, %cst_64 {dimension_numbers = #tpu.dot_dimension_numbers<[1], [0], [0], [1], [0, 0, 1, 1], [], []>} : vector<64x48xbf16>, vector<48x96xbf16>, vector<64x96xf32> -> vector<64x96xf32>
    %74 = arith.addf %66, %73 : vector<64x96xf32>
    %c8 = arith.constant 8 : index
    %c0_65 = arith.constant 0 : index
    %c0_66 = arith.constant 0 : index
    %75 = vector.load %arg4[%c8, %c0_65, %c0_66] : memref<9x64x256xbf16, #tpu.memory_space<vmem>>, vector<1x64x256xbf16>
    %76 = vector.shape_cast %75 : vector<1x64x256xbf16> to vector<64x256xbf16>
    %cst_67 = arith.constant dense<0.000000e+00> : vector<64x48xf32>
    %77 = tpu.matmul %76, %9, %cst_67 {dimension_numbers = #tpu.dot_dimension_numbers<[1], [0], [0], [1], [0, 0, 1, 1], [], []>} : vector<64x256xbf16>, vector<256x48xbf16>, vector<64x48xf32> -> vector<64x48xf32>
    %78 = arith.truncf %77 : vector<64x48xf32> to vector<64x48xbf16>
    %c8_68 = arith.constant 8 : index
    %c0_69 = arith.constant 0 : index
    %c0_70 = arith.constant 0 : index
    %79 = vector.load %arg5[%c8_68, %c0_69, %c0_70] : memref<9x48x96xbf16, #tpu.memory_space<vmem>>, vector<1x48x96xbf16>
    %80 = vector.shape_cast %79 : vector<1x48x96xbf16> to vector<48x96xbf16>
    %cst_71 = arith.constant dense<0.000000e+00> : vector<64x96xf32>
    %81 = tpu.matmul %78, %80, %cst_71 {dimension_numbers = #tpu.dot_dimension_numbers<[1], [0], [0], [1], [0, 0, 1, 1], [], []>} : vector<64x48xbf16>, vector<48x96xbf16>, vector<64x96xf32> -> vector<64x96xf32>
    %82 = arith.addf %74, %81 : vector<64x96xf32>
    %c0_72 = arith.constant 0 : index
    %c0_73 = arith.constant 0 : index
    %83 = vector.load %arg6[%c0_72, %c0_73] : memref<1x96xf32, #tpu.memory_space<vmem>>, vector<1x96xf32>
    %84 = vector.broadcast %83 : vector<1x96xf32> to vector<64x96xf32>
    %85 = arith.addf %82, %84 : vector<64x96xf32>
    %cst_74 = arith.constant 0.000000e+00 : f32
    %86 = vector.broadcast %cst_74 : f32 to vector<64x96xf32>
    %87 = arith.maximumf %85, %86 : vector<64x96xf32>
    %88 = arith.truncf %87 : vector<64x96xf32> to vector<64x96xbf16>
    %cst_75 = arith.constant 0.000000e+00 : f32
    %89 = vector.broadcast %cst_75 : f32 to vector<16x384xf32>
    %c0_76 = arith.constant 0 : index
    %c0_77 = arith.constant 0 : index
    %c0_78 = arith.constant 0 : index
    %90 = vector.load %arg7[%c0_76, %c0_77, %c0_78] : memref<9x16x64xbf16, #tpu.memory_space<vmem>>, vector<1x16x64xbf16>
    %91 = vector.shape_cast %90 : vector<1x16x64xbf16> to vector<16x64xbf16>
    %cst_79 = arith.constant dense<0.000000e+00> : vector<16x96xf32>
    %92 = tpu.matmul %91, %88, %cst_79 {dimension_numbers = #tpu.dot_dimension_numbers<[1], [0], [0], [1], [0, 0, 1, 1], [], []>} : vector<16x64xbf16>, vector<64x96xbf16>, vector<16x96xf32> -> vector<16x96xf32>
    %93 = arith.truncf %92 : vector<16x96xf32> to vector<16x96xbf16>
    %c0_80 = arith.constant 0 : index
    %c0_81 = arith.constant 0 : index
    %c0_82 = arith.constant 0 : index
    %94 = vector.load %arg8[%c0_80, %c0_81, %c0_82] : memref<9x96x384xbf16, #tpu.memory_space<vmem>>, vector<1x96x384xbf16>
    %95 = vector.shape_cast %94 : vector<1x96x384xbf16> to vector<96x384xbf16>
    %cst_83 = arith.constant dense<0.000000e+00> : vector<16x384xf32>
    %96 = tpu.matmul %93, %95, %cst_83 {dimension_numbers = #tpu.dot_dimension_numbers<[1], [0], [0], [1], [0, 0, 1, 1], [], []>} : vector<16x96xbf16>, vector<96x384xbf16>, vector<16x384xf32> -> vector<16x384xf32>
    %97 = arith.addf %89, %96 : vector<16x384xf32>
    %c1_84 = arith.constant 1 : index
    %c0_85 = arith.constant 0 : index
    %c0_86 = arith.constant 0 : index
    %98 = vector.load %arg7[%c1_84, %c0_85, %c0_86] : memref<9x16x64xbf16, #tpu.memory_space<vmem>>, vector<1x16x64xbf16>
    %99 = vector.shape_cast %98 : vector<1x16x64xbf16> to vector<16x64xbf16>
    %cst_87 = arith.constant dense<0.000000e+00> : vector<16x96xf32>
    %100 = tpu.matmul %99, %88, %cst_87 {dimension_numbers = #tpu.dot_dimension_numbers<[1], [0], [0], [1], [0, 0, 1, 1], [], []>} : vector<16x64xbf16>, vector<64x96xbf16>, vector<16x96xf32> -> vector<16x96xf32>
    %101 = arith.truncf %100 : vector<16x96xf32> to vector<16x96xbf16>
    %c1_88 = arith.constant 1 : index
    %c0_89 = arith.constant 0 : index
    %c0_90 = arith.constant 0 : index
    %102 = vector.load %arg8[%c1_88, %c0_89, %c0_90] : memref<9x96x384xbf16, #tpu.memory_space<vmem>>, vector<1x96x384xbf16>
    %103 = vector.shape_cast %102 : vector<1x96x384xbf16> to vector<96x384xbf16>
    %cst_91 = arith.constant dense<0.000000e+00> : vector<16x384xf32>
    %104 = tpu.matmul %101, %103, %cst_91 {dimension_numbers = #tpu.dot_dimension_numbers<[1], [0], [0], [1], [0, 0, 1, 1], [], []>} : vector<16x96xbf16>, vector<96x384xbf16>, vector<16x384xf32> -> vector<16x384xf32>
    %105 = arith.addf %97, %104 : vector<16x384xf32>
    %c2_92 = arith.constant 2 : index
    %c0_93 = arith.constant 0 : index
    %c0_94 = arith.constant 0 : index
    %106 = vector.load %arg7[%c2_92, %c0_93, %c0_94] : memref<9x16x64xbf16, #tpu.memory_space<vmem>>, vector<1x16x64xbf16>
    %107 = vector.shape_cast %106 : vector<1x16x64xbf16> to vector<16x64xbf16>
    %cst_95 = arith.constant dense<0.000000e+00> : vector<16x96xf32>
    %108 = tpu.matmul %107, %88, %cst_95 {dimension_numbers = #tpu.dot_dimension_numbers<[1], [0], [0], [1], [0, 0, 1, 1], [], []>} : vector<16x64xbf16>, vector<64x96xbf16>, vector<16x96xf32> -> vector<16x96xf32>
    %109 = arith.truncf %108 : vector<16x96xf32> to vector<16x96xbf16>
    %c2_96 = arith.constant 2 : index
    %c0_97 = arith.constant 0 : index
    %c0_98 = arith.constant 0 : index
    %110 = vector.load %arg8[%c2_96, %c0_97, %c0_98] : memref<9x96x384xbf16, #tpu.memory_space<vmem>>, vector<1x96x384xbf16>
    %111 = vector.shape_cast %110 : vector<1x96x384xbf16> to vector<96x384xbf16>
    %cst_99 = arith.constant dense<0.000000e+00> : vector<16x384xf32>
    %112 = tpu.matmul %109, %111, %cst_99 {dimension_numbers = #tpu.dot_dimension_numbers<[1], [0], [0], [1], [0, 0, 1, 1], [], []>} : vector<16x96xbf16>, vector<96x384xbf16>, vector<16x384xf32> -> vector<16x384xf32>
    %113 = arith.addf %105, %112 : vector<16x384xf32>
    %c3_100 = arith.constant 3 : index
    %c0_101 = arith.constant 0 : index
    %c0_102 = arith.constant 0 : index
    %114 = vector.load %arg7[%c3_100, %c0_101, %c0_102] : memref<9x16x64xbf16, #tpu.memory_space<vmem>>, vector<1x16x64xbf16>
    %115 = vector.shape_cast %114 : vector<1x16x64xbf16> to vector<16x64xbf16>
    %cst_103 = arith.constant dense<0.000000e+00> : vector<16x96xf32>
    %116 = tpu.matmul %115, %88, %cst_103 {dimension_numbers = #tpu.dot_dimension_numbers<[1], [0], [0], [1], [0, 0, 1, 1], [], []>} : vector<16x64xbf16>, vector<64x96xbf16>, vector<16x96xf32> -> vector<16x96xf32>
    %117 = arith.truncf %116 : vector<16x96xf32> to vector<16x96xbf16>
    %c3_104 = arith.constant 3 : index
    %c0_105 = arith.constant 0 : index
    %c0_106 = arith.constant 0 : index
    %118 = vector.load %arg8[%c3_104, %c0_105, %c0_106] : memref<9x96x384xbf16, #tpu.memory_space<vmem>>, vector<1x96x384xbf16>
    %119 = vector.shape_cast %118 : vector<1x96x384xbf16> to vector<96x384xbf16>
    %cst_107 = arith.constant dense<0.000000e+00> : vector<16x384xf32>
    %120 = tpu.matmul %117, %119, %cst_107 {dimension_numbers = #tpu.dot_dimension_numbers<[1], [0], [0], [1], [0, 0, 1, 1], [], []>} : vector<16x96xbf16>, vector<96x384xbf16>, vector<16x384xf32> -> vector<16x384xf32>
    %121 = arith.addf %113, %120 : vector<16x384xf32>
    %c4_108 = arith.constant 4 : index
    %c0_109 = arith.constant 0 : index
    %c0_110 = arith.constant 0 : index
    %122 = vector.load %arg7[%c4_108, %c0_109, %c0_110] : memref<9x16x64xbf16, #tpu.memory_space<vmem>>, vector<1x16x64xbf16>
    %123 = vector.shape_cast %122 : vector<1x16x64xbf16> to vector<16x64xbf16>
    %cst_111 = arith.constant dense<0.000000e+00> : vector<16x96xf32>
    %124 = tpu.matmul %123, %88, %cst_111 {dimension_numbers = #tpu.dot_dimension_numbers<[1], [0], [0], [1], [0, 0, 1, 1], [], []>} : vector<16x64xbf16>, vector<64x96xbf16>, vector<16x96xf32> -> vector<16x96xf32>
    %125 = arith.truncf %124 : vector<16x96xf32> to vector<16x96xbf16>
    %c4_112 = arith.constant 4 : index
    %c0_113 = arith.constant 0 : index
    %c0_114 = arith.constant 0 : index
    %126 = vector.load %arg8[%c4_112, %c0_113, %c0_114] : memref<9x96x384xbf16, #tpu.memory_space<vmem>>, vector<1x96x384xbf16>
    %127 = vector.shape_cast %126 : vector<1x96x384xbf16> to vector<96x384xbf16>
    %cst_115 = arith.constant dense<0.000000e+00> : vector<16x384xf32>
    %128 = tpu.matmul %125, %127, %cst_115 {dimension_numbers = #tpu.dot_dimension_numbers<[1], [0], [0], [1], [0, 0, 1, 1], [], []>} : vector<16x96xbf16>, vector<96x384xbf16>, vector<16x384xf32> -> vector<16x384xf32>
    %129 = arith.addf %121, %128 : vector<16x384xf32>
    %c5_116 = arith.constant 5 : index
    %c0_117 = arith.constant 0 : index
    %c0_118 = arith.constant 0 : index
    %130 = vector.load %arg7[%c5_116, %c0_117, %c0_118] : memref<9x16x64xbf16, #tpu.memory_space<vmem>>, vector<1x16x64xbf16>
    %131 = vector.shape_cast %130 : vector<1x16x64xbf16> to vector<16x64xbf16>
    %cst_119 = arith.constant dense<0.000000e+00> : vector<16x96xf32>
    %132 = tpu.matmul %131, %88, %cst_119 {dimension_numbers = #tpu.dot_dimension_numbers<[1], [0], [0], [1], [0, 0, 1, 1], [], []>} : vector<16x64xbf16>, vector<64x96xbf16>, vector<16x96xf32> -> vector<16x96xf32>
    %133 = arith.truncf %132 : vector<16x96xf32> to vector<16x96xbf16>
    %c5_120 = arith.constant 5 : index
    %c0_121 = arith.constant 0 : index
    %c0_122 = arith.constant 0 : index
    %134 = vector.load %arg8[%c5_120, %c0_121, %c0_122] : memref<9x96x384xbf16, #tpu.memory_space<vmem>>, vector<1x96x384xbf16>
    %135 = vector.shape_cast %134 : vector<1x96x384xbf16> to vector<96x384xbf16>
    %cst_123 = arith.constant dense<0.000000e+00> : vector<16x384xf32>
    %136 = tpu.matmul %133, %135, %cst_123 {dimension_numbers = #tpu.dot_dimension_numbers<[1], [0], [0], [1], [0, 0, 1, 1], [], []>} : vector<16x96xbf16>, vector<96x384xbf16>, vector<16x384xf32> -> vector<16x384xf32>
    %137 = arith.addf %129, %136 : vector<16x384xf32>
    %c6_124 = arith.constant 6 : index
    %c0_125 = arith.constant 0 : index
    %c0_126 = arith.constant 0 : index
    %138 = vector.load %arg7[%c6_124, %c0_125, %c0_126] : memref<9x16x64xbf16, #tpu.memory_space<vmem>>, vector<1x16x64xbf16>
    %139 = vector.shape_cast %138 : vector<1x16x64xbf16> to vector<16x64xbf16>
    %cst_127 = arith.constant dense<0.000000e+00> : vector<16x96xf32>
    %140 = tpu.matmul %139, %88, %cst_127 {dimension_numbers = #tpu.dot_dimension_numbers<[1], [0], [0], [1], [0, 0, 1, 1], [], []>} : vector<16x64xbf16>, vector<64x96xbf16>, vector<16x96xf32> -> vector<16x96xf32>
    %141 = arith.truncf %140 : vector<16x96xf32> to vector<16x96xbf16>
    %c6_128 = arith.constant 6 : index
    %c0_129 = arith.constant 0 : index
    %c0_130 = arith.constant 0 : index
    %142 = vector.load %arg8[%c6_128, %c0_129, %c0_130] : memref<9x96x384xbf16, #tpu.memory_space<vmem>>, vector<1x96x384xbf16>
    %143 = vector.shape_cast %142 : vector<1x96x384xbf16> to vector<96x384xbf16>
    %cst_131 = arith.constant dense<0.000000e+00> : vector<16x384xf32>
    %144 = tpu.matmul %141, %143, %cst_131 {dimension_numbers = #tpu.dot_dimension_numbers<[1], [0], [0], [1], [0, 0, 1, 1], [], []>} : vector<16x96xbf16>, vector<96x384xbf16>, vector<16x384xf32> -> vector<16x384xf32>
    %145 = arith.addf %137, %144 : vector<16x384xf32>
    %c7_132 = arith.constant 7 : index
    %c0_133 = arith.constant 0 : index
    %c0_134 = arith.constant 0 : index
    %146 = vector.load %arg7[%c7_132, %c0_133, %c0_134] : memref<9x16x64xbf16, #tpu.memory_space<vmem>>, vector<1x16x64xbf16>
    %147 = vector.shape_cast %146 : vector<1x16x64xbf16> to vector<16x64xbf16>
    %cst_135 = arith.constant dense<0.000000e+00> : vector<16x96xf32>
    %148 = tpu.matmul %147, %88, %cst_135 {dimension_numbers = #tpu.dot_dimension_numbers<[1], [0], [0], [1], [0, 0, 1, 1], [], []>} : vector<16x64xbf16>, vector<64x96xbf16>, vector<16x96xf32> -> vector<16x96xf32>
    %149 = arith.truncf %148 : vector<16x96xf32> to vector<16x96xbf16>
    %c7_136 = arith.constant 7 : index
    %c0_137 = arith.constant 0 : index
    %c0_138 = arith.constant 0 : index
    %150 = vector.load %arg8[%c7_136, %c0_137, %c0_138] : memref<9x96x384xbf16, #tpu.memory_space<vmem>>, vector<1x96x384xbf16>
    %151 = vector.shape_cast %150 : vector<1x96x384xbf16> to vector<96x384xbf16>
    %cst_139 = arith.constant dense<0.000000e+00> : vector<16x384xf32>
    %152 = tpu.matmul %149, %151, %cst_139 {dimension_numbers = #tpu.dot_dimension_numbers<[1], [0], [0], [1], [0, 0, 1, 1], [], []>} : vector<16x96xbf16>, vector<96x384xbf16>, vector<16x384xf32> -> vector<16x384xf32>
    %153 = arith.addf %145, %152 : vector<16x384xf32>
    %c8_140 = arith.constant 8 : index
    %c0_141 = arith.constant 0 : index
    %c0_142 = arith.constant 0 : index
    %154 = vector.load %arg7[%c8_140, %c0_141, %c0_142] : memref<9x16x64xbf16, #tpu.memory_space<vmem>>, vector<1x16x64xbf16>
    %155 = vector.shape_cast %154 : vector<1x16x64xbf16> to vector<16x64xbf16>
    %cst_143 = arith.constant dense<0.000000e+00> : vector<16x96xf32>
    %156 = tpu.matmul %155, %88, %cst_143 {dimension_numbers = #tpu.dot_dimension_numbers<[1], [0], [0], [1], [0, 0, 1, 1], [], []>} : vector<16x64xbf16>, vector<64x96xbf16>, vector<16x96xf32> -> vector<16x96xf32>
    %157 = arith.truncf %156 : vector<16x96xf32> to vector<16x96xbf16>
    %c8_144 = arith.constant 8 : index
    %c0_145 = arith.constant 0 : index
    %c0_146 = arith.constant 0 : index
    %158 = vector.load %arg8[%c8_144, %c0_145, %c0_146] : memref<9x96x384xbf16, #tpu.memory_space<vmem>>, vector<1x96x384xbf16>
    %159 = vector.shape_cast %158 : vector<1x96x384xbf16> to vector<96x384xbf16>
    %cst_147 = arith.constant dense<0.000000e+00> : vector<16x384xf32>
    %160 = tpu.matmul %157, %159, %cst_147 {dimension_numbers = #tpu.dot_dimension_numbers<[1], [0], [0], [1], [0, 0, 1, 1], [], []>} : vector<16x96xbf16>, vector<96x384xbf16>, vector<16x384xf32> -> vector<16x384xf32>
    %161 = arith.addf %153, %160 : vector<16x384xf32>
    %c0_148 = arith.constant 0 : index
    %c0_149 = arith.constant 0 : index
    %162 = vector.load %arg9[%c0_148, %c0_149] : memref<1x384xf32, #tpu.memory_space<vmem>>, vector<1x384xf32>
    %163 = vector.broadcast %162 : vector<1x384xf32> to vector<16x384xf32>
    %164 = arith.addf %161, %163 : vector<16x384xf32>
    %cst_150 = arith.constant 0.000000e+00 : f32
    %165 = vector.broadcast %cst_150 : f32 to vector<16x384xf32>
    %166 = arith.maximumf %164, %165 : vector<16x384xf32>
    %cst_151 = arith.constant dense<0.000000e+00> : vector<384xf32>
    %167 = vector.multi_reduction <add>, %166, %cst_151 [0] : vector<16x384xf32> to vector<384xf32>
    %168 = vector.shape_cast %167 : vector<384xf32> to vector<1x384xf32>
    %cst_152 = arith.constant 1.600000e+01 : f32
    %169 = vector.broadcast %cst_152 : f32 to vector<1x384xf32>
    %170 = arith.divf %168, %169 : vector<1x384xf32>
    %171 = arith.truncf %170 : vector<1x384xf32> to vector<1x384xbf16>
    %c0_153 = arith.constant 0 : index
    %c0_154 = arith.constant 0 : index
    %172 = vector.load %arg10[%c0_153, %c0_154] : memref<384x128xbf16, #tpu.memory_space<vmem>>, vector<384x128xbf16>
    %cst_155 = arith.constant dense<0.000000e+00> : vector<1x128xf32>
    %173 = tpu.matmul %171, %172, %cst_155 {dimension_numbers = #tpu.dot_dimension_numbers<[1], [0], [0], [1], [0, 0, 1, 1], [], []>} : vector<1x384xbf16>, vector<384x128xbf16>, vector<1x128xf32> -> vector<1x128xf32>
    %c0_156 = arith.constant 0 : index
    %c0_157 = arith.constant 0 : index
    %174 = vector.load %arg11[%c0_156, %c0_157] : memref<1x128xf32, #tpu.memory_space<vmem>>, vector<1x128xf32>
    %175 = arith.addf %173, %174 : vector<1x128xf32>
    %cst_158 = arith.constant 0.000000e+00 : f32
    %176 = vector.broadcast %cst_158 : f32 to vector<1x128xf32>
    %177 = arith.maximumf %175, %176 : vector<1x128xf32>
    %c0_159 = arith.constant 0 : index
    %c0_160 = arith.constant 0 : index
    %c0_161 = arith.constant 0 : index
    %178 = vector.load %arg12[%c0_159, %c0_160, %c0_161] : memref<1x1x128xf32, #tpu.memory_space<vmem>>, vector<1x1x128xf32>
    %179 = vector.shape_cast %178 : vector<1x1x128xf32> to vector<1x128xf32>
    %180 = vector.shape_cast %177 : vector<1x128xf32> to vector<1x1x128xf32>
    tpu.vector_store %arg12[%c0_159, %c0_160, %c0_161], %180 {strides = array<i32>} : memref<1x1x128xf32, #tpu.memory_space<vmem>>, vector<1x1x128xf32>,
    return
  }
  func.func @transform_0(%arg0: i32) -> (i32, i32, i32) {
    %c0_i32 = arith.constant 0 : i32
    %c0_i32_0 = arith.constant 0 : i32
    %c0_i32_1 = arith.constant 0 : i32
    return %arg0, %c0_i32, %c0_i32_0 : i32, i32, i32
  }
  func.func @transform_1(%arg0: i32) -> (i32, i32) {
    %c0_i32 = arith.constant 0 : i32
    %c0_i32_0 = arith.constant 0 : i32
    %c0_i32_1 = arith.constant 0 : i32
    return %c0_i32, %c0_i32_0 : i32, i32
  }
  func.func @transform_2(%arg0: i32) -> (i32, i32) {
    %c0_i32 = arith.constant 0 : i32
    %c0_i32_0 = arith.constant 0 : i32
    %c0_i32_1 = arith.constant 0 : i32
    return %c0_i32, %c0_i32_0 : i32, i32
  }
  func.func @transform_3(%arg0: i32) -> (i32, i32, i32) {
    %c0_i32 = arith.constant 0 : i32
    %c0_i32_0 = arith.constant 0 : i32
    %c0_i32_1 = arith.constant 0 : i32
    %c0_i32_2 = arith.constant 0 : i32
    return %c0_i32, %c0_i32_0, %c0_i32_1 : i32, i32, i32
  }
  func.func @transform_4(%arg0: i32) -> (i32, i32, i32) {
    %c0_i32 = arith.constant 0 : i32
    %c0_i32_0 = arith.constant 0 : i32
    %c0_i32_1 = arith.constant 0 : i32
    %c0_i32_2 = arith.constant 0 : i32
    return %c0_i32, %c0_i32_0, %c0_i32_1 : i32, i32, i32
  }
  func.func @transform_5(%arg0: i32) -> (i32, i32) {
    %c0_i32 = arith.constant 0 : i32
    %c0_i32_0 = arith.constant 0 : i32
    %c0_i32_1 = arith.constant 0 : i32
    return %c0_i32, %c0_i32_0 : i32, i32
  }
  func.func @transform_6(%arg0: i32) -> (i32, i32, i32) {
    %c0_i32 = arith.constant 0 : i32
    %c0_i32_0 = arith.constant 0 : i32
    %c0_i32_1 = arith.constant 0 : i32
    %c0_i32_2 = arith.constant 0 : i32
    return %c0_i32, %c0_i32_0, %c0_i32_1 : i32, i32, i32
  }
  func.func @transform_7(%arg0: i32) -> (i32, i32, i32) {
    %c0_i32 = arith.constant 0 : i32
    %c0_i32_0 = arith.constant 0 : i32
    %c0_i32_1 = arith.constant 0 : i32
    %c0_i32_2 = arith.constant 0 : i32
    return %c0_i32, %c0_i32_0, %c0_i32_1 : i32, i32, i32
  }
  func.func @transform_8(%arg0: i32) -> (i32, i32) {
    %c0_i32 = arith.constant 0 : i32
    %c0_i32_0 = arith.constant 0 : i32
    %c0_i32_1 = arith.constant 0 : i32
    return %c0_i32, %c0_i32_0 : i32, i32
  }
  func.func @transform_9(%arg0: i32) -> (i32, i32) {
    %c0_i32 = arith.constant 0 : i32
    %c0_i32_0 = arith.constant 0 : i32
    %c0_i32_1 = arith.constant 0 : i32
    return %c0_i32, %c0_i32_0 : i32, i32
  }
  func.func @transform_10(%arg0: i32) -> (i32, i32) {
    %c0_i32 = arith.constant 0 : i32
    %c0_i32_0 = arith.constant 0 : i32
    %c0_i32_1 = arith.constant 0 : i32
    return %c0_i32, %c0_i32_0 : i32, i32
  }
  func.func @transform_11(%arg0: i32) -> (i32, i32, i32) {
    %c0_i32 = arith.constant 0 : i32
    %c0_i32_0 = arith.constant 0 : i32
    %c0_i32_1 = arith.constant 0 : i32
    return %arg0, %c0_i32, %c0_i32_0 : i32, i32, i32
  }
}

</mosaic_0001>

<llo_original>
// kernel: style_encoder_forward.1
$region0: #{style_encoder_forward.1}
  #allocation0 [shape = 'u32[]', space=smem, size = 0x4, offset = 0x4, fixed_abs, tag = 'smem constant byte address 0x4 - core index']
  #allocation1 [shape = 'u32[144,128]{1,0:T(1,128)}', space=vmem, size = 0x12000, scoped, tag = 'internal scratch']
  %s0 = inlined_call_operand.vmem [shape: bf16[2,256,16], index: 0, kind: input, shape index: {}]
  %s1 = inlined_call_operand.vmem [shape: bf16[16,48], index: 1, kind: input, shape index: {}]
  %s2 = inlined_call_operand.vmem [shape: f32[1,48], index: 2, kind: input, shape index: {}]
  %s3 = inlined_call_operand.hbm [shape: bf16[9,64,256], index: 3, kind: input, shape index: {}]
  %s4 = inlined_call_operand.hbm [shape: bf16[9,48,96], index: 4, kind: input, shape index: {}]
  %s5 = inlined_call_operand.vmem [shape: f32[1,96], index: 5, kind: input, shape index: {}]
  %s6 = inlined_call_operand.vmem [shape: bf16[9,16,64], index: 6, kind: input, shape index: {}]
  %s7 = inlined_call_operand.vmem [shape: bf16[9,96,384], index: 7, kind: input, shape index: {}]
  %s8 = inlined_call_operand.vmem [shape: f32[1,384], index: 8, kind: input, shape index: {}]
  %s9 = inlined_call_operand.hbm [shape: bf16[384,128], index: 9, kind: input, shape index: {}]
  %s10 = inlined_call_operand.vmem [shape: f32[1,128], index: 10, kind: input, shape index: {}]
  %s11 = inlined_call_operand.hbm [shape: f32[2,1,128], index: 11, kind: output, shape index: {}]
  %s12 = sld [smem:[#allocation0]]
  $region89: #{style_encoder_forward.1} parent=0
    _
  %s14 = ssub.s32 1, %s12
  %s15 = scalar_select 0, %s14, %s12
  $region1: #{style_encoder_forward.1} parent=0
    #allocation2 [shape = 'u8[294912]{0}', space=vmem, size = 0x48000, scoped, tag = 'input window, operand 3, single buffered']
    #allocation3 [shape = 's32[2]{0}', space=sflag, size = 0x8, scoped, tag = 'scoped memory for style_encoder_forward.1']
    #allocation4 [shape = 's32[2]{0}', space=sflag, size = 0x8, scoped, tag = 'scoped memory for style_encoder_forward.1']
    #allocation5 [shape = 'u8[110592]{0}', space=vmem, size = 0x1b000, scoped, tag = 'input window, operand 4, single buffered']
    #allocation6 [shape = 's32[1]{0}', space=sflag, size = 0x4, scoped, tag = 'scoped memory for style_encoder_forward.1']
    #allocation7 [shape = 'u8[98304]{0}', space=vmem, size = 0x18000, scoped, tag = 'input window, operand 9, single buffered']
    #allocation8 [shape = 'u8[1024]{0}', space=vmem, size = 0x400, scoped, tag = 'output window, operand 0']
    %16 = vsyncpa [#allocation3], 0
    %17 = vsyncpa [#allocation6], 0
    %18 = vsyncpa [#allocation4], 0
    %s19 = scalar_lea.sflag [#allocation4], 1
    %20 = vsyncpa %s19, 0
    loop: start=0, step=1, limit=4
    $region2: #{style_encoder_forward.1} parent=1 // loop_pre_header
      _
    $region3: #{style_encoder_forward.1} parent=1 // loop_header
      %s22 = sphi 0, %s26
      %p23 = scmp.ge.s32.totalorder %s22, 4
      %s32 = sphi 0, %s34
      %s35 = sphi 0, %s32
      %s36 = sphi 0, %s35
      %s52 = sphi 0, %s36
      %s56 = sphi 0, %s56
      %s58 = sphi 0, %s56
      %s59 = sphi 0, %s58
      %s73 = sphi 0, %s59
      %s77 = sphi 0, %s77
      %s79 = sphi 0, %s77
      %s80 = sphi 0, %s79
      %s94 = sphi 0, %s80
      %s98 = sphi 0, %s98
      %s100 = sphi 0, %s98
      %s101 = sphi 0, %s100
      %s115 = sphi 0, %s101
      %s119 = sphi 0, %s119
      %s121 = sphi 0, %s119
      %s122 = sphi 0, %s121
      %s136 = sphi 0, %s122
      %s140 = sphi 0, %s140
      %s142 = sphi 0, %s140
      %s143 = sphi 0, %s142
      %s157 = sphi 0, %s143
      %s161 = sphi 0, %s161
      %s163 = sphi 0, %s161
      %s164 = sphi 0, %s163
      %s178 = sphi 0, %s164
      %s182 = sphi 0, %s182
      %s184 = sphi 0, %s182
      %s185 = sphi 0, %s184
      %s199 = sphi 0, %s185
      %s203 = sphi 0, %s203
      %s205 = sphi 0, %s203
      %s206 = sphi 0, %s205
      %s220 = sphi 0, %s206
      %s224 = sphi 0, %s224
      %s226 = sphi 0, %s224
      %s227 = sphi 0, %s226
      %s241 = sphi 0, %s227
      %s245 = sphi 0, %s245
      %s247 = sphi 0, %s245
      %s248 = sphi 0, %s247
      %s262 = sphi 0, %s248
      %s268 = sphi 0, %s270
      %s271 = sphi 0, %s268
      %s272 = sphi 0, %s271
      %s288 = sphi 0, %s272
    $region4: #{style_encoder_forward.1} parent=1 // loop_header_branch
      %25 = sbr.rel (%p23) target = $region8
    $region5: #{style_encoder_forward.1} parent=1 // loop_body
      %s27 = ssub.s32 %s22, 1
      %s28 = ssub.s32 %s22, 2
      %s29 = sadd.s32 %s22, 1
      %s30 = ssub.s32 %s22, %s29
      %p31 = scmp.eq.s32.totalorder %s30, 0
      %s33 = sadd.s32 %s32, 1
      %s34 = scalar_select %p31, %s32, %s33
      %p37 = pneg %p31
      %p38 = scmp.eq.s32.totalorder %s22, 1
      %p39 = por %p37, %p38
      %p40 = scmp.ne.s32.totalorder %s32, %s35
      %p41 = scmp.eq.s32.totalorder %s22, 0
      %p42 = por %p40, %p41
      %p43 = scmp.ne.s32.totalorder %s32, %s35
      %p44 = scmp.eq.s32.totalorder %s27, 1
      %p45 = por %p43, %p44
      %p46 = scmp.ne.s32.totalorder %s35, %s36
      %p47 = scmp.eq.s32.totalorder %s27, 0
      %p48 = por %p46, %p47
      %p49 = scmp.ne.s32.totalorder %s35, %s36
      %p50 = scmp.eq.s32.totalorder %s28, 1
      %p51 = por %p49, %p50
      %p53 = scmp.ne.s32.totalorder %s36, %s52
      %p54 = scmp.eq.s32.totalorder %s28, 0
      %p55 = por %p53, %p54
      %s57 = sadd.s32 %s56, 1
      %p60 = scmp.eq.s32.totalorder %s22, 1
      %p61 = scmp.ne.s32.totalorder %s56, %s58
      %p62 = scmp.eq.s32.totalorder %s22, 0
      %p63 = por %p61, %p62
      %p64 = scmp.ne.s32.totalorder %s56, %s58
      %p65 = scmp.eq.s32.totalorder %s27, 1
      %p66 = por %p64, %p65
      %p67 = scmp.ne.s32.totalorder %s58, %s59
      %p68 = scmp.eq.s32.totalorder %s27, 0
      %p69 = por %p67, %p68
      %p70 = scmp.ne.s32.totalorder %s58, %s59
      %p71 = scmp.eq.s32.totalorder %s28, 1
      %p72 = por %p70, %p71
      %p74 = scmp.ne.s32.totalorder %s59, %s73
      %p75 = scmp.eq.s32.totalorder %s28, 0
      %p76 = por %p74, %p75
      %s78 = sadd.s32 %s77, 1
      %p81 = scmp.eq.s32.totalorder %s22, 1
      %p82 = scmp.ne.s32.totalorder %s77, %s79
      %p83 = scmp.eq.s32.totalorder %s22, 0
      %p84 = por %p82, %p83
      %p85 = scmp.ne.s32.totalorder %s77, %s79
      %p86 = scmp.eq.s32.totalorder %s27, 1
      %p87 = por %p85, %p86
      %p88 = scmp.ne.s32.totalorder %s79, %s80
      %p89 = scmp.eq.s32.totalorder %s27, 0
      %p90 = por %p88, %p89
      %p91 = scmp.ne.s32.totalorder %s79, %s80
      %p92 = scmp.eq.s32.totalorder %s28, 1
      %p93 = por %p91, %p92
      %p95 = scmp.ne.s32.totalorder %s80, %s94
      %p96 = scmp.eq.s32.totalorder %s28, 0
      %p97 = por %p95, %p96
      %s99 = sadd.s32 %s98, 1
      %p102 = scmp.eq.s32.totalorder %s22, 1
      %p103 = scmp.ne.s32.totalorder %s98, %s100
      %p104 = scmp.eq.s32.totalorder %s22, 0
      %p105 = por %p103, %p104
      %p106 = scmp.ne.s32.totalorder %s98, %s100
      %p107 = scmp.eq.s32.totalorder %s27, 1
      %p108 = por %p106, %p107
      %p109 = scmp.ne.s32.totalorder %s100, %s101
      %p110 = scmp.eq.s32.totalorder %s27, 0
      %p111 = por %p109, %p110
      %p112 = scmp.ne.s32.totalorder %s100, %s101
      %p113 = scmp.eq.s32.totalorder %s28, 1
      %p114 = por %p112, %p113
      %p116 = scmp.ne.s32.totalorder %s101, %s115
      %p117 = scmp.eq.s32.totalorder %s28, 0
      %p118 = por %p116, %p117
      %s120 = sadd.s32 %s119, 1
      %p123 = scmp.eq.s32.totalorder %s22, 1
      %p124 = scmp.ne.s32.totalorder %s119, %s121
      %p125 = scmp.eq.s32.totalorder %s22, 0
      %p126 = por %p124, %p125
      %p127 = scmp.ne.s32.totalorder %s119, %s121
      %p128 = scmp.eq.s32.totalorder %s27, 1
      %p129 = por %p127, %p128
      %p130 = scmp.ne.s32.totalorder %s121, %s122
      %p131 = scmp.eq.s32.totalorder %s27, 0
      %p132 = por %p130, %p131
      %p133 = scmp.ne.s32.totalorder %s121, %s122
      %p134 = scmp.eq.s32.totalorder %s28, 1
      %p135 = por %p133, %p134
      %p137 = scmp.ne.s32.totalorder %s122, %s136
      %p138 = scmp.eq.s32.totalorder %s28, 0
      %p139 = por %p137, %p138
      %s141 = sadd.s32 %s140, 1
      %p144 = scmp.eq.s32.totalorder %s22, 1
      %p145 = scmp.ne.s32.totalorder %s140, %s142
      %p146 = scmp.eq.s32.totalorder %s22, 0
      %p147 = por %p145, %p146
      %p148 = scmp.ne.s32.totalorder %s140, %s142
      %p149 = scmp.eq.s32.totalorder %s27, 1
      %p150 = por %p148, %p149
      %p151 = scmp.ne.s32.totalorder %s142, %s143
      %p152 = scmp.eq.s32.totalorder %s27, 0
      %p153 = por %p151, %p152
      %p154 = scmp.ne.s32.totalorder %s142, %s143
      %p155 = scmp.eq.s32.totalorder %s28, 1
      %p156 = por %p154, %p155
      %p158 = scmp.ne.s32.totalorder %s143, %s157
      %p159 = scmp.eq.s32.totalorder %s28, 0
      %p160 = por %p158, %p159
      %s162 = sadd.s32 %s161, 1
      %p165 = scmp.eq.s32.totalorder %s22, 1
      %p166 = scmp.ne.s32.totalorder %s161, %s163
      %p167 = scmp.eq.s32.totalorder %s22, 0
      %p168 = por %p166, %p167
      %p169 = scmp.ne.s32.totalorder %s161, %s163
      %p170 = scmp.eq.s32.totalorder %s27, 1
      %p171 = por %p169, %p170
      %p172 = scmp.ne.s32.totalorder %s163, %s164
      %p173 = scmp.eq.s32.totalorder %s27, 0
      %p174 = por %p172, %p173
      %p175 = scmp.ne.s32.totalorder %s163, %s164
      %p176 = scmp.eq.s32.totalorder %s28, 1
      %p177 = por %p175, %p176
      %p179 = scmp.ne.s32.totalorder %s164, %s178
      %p180 = scmp.eq.s32.totalorder %s28, 0
      %p181 = por %p179, %p180
      %s183 = sadd.s32 %s182, 1
      %p186 = scmp.eq.s32.totalorder %s22, 1
      %p187 = scmp.ne.s32.totalorder %s182, %s184
      %p188 = scmp.eq.s32.totalorder %s22, 0
      %p189 = por %p187, %p188
      %p190 = scmp.ne.s32.totalorder %s182, %s184
      %p191 = scmp.eq.s32.totalorder %s27, 1
      %p192 = por %p190, %p191
      %p193 = scmp.ne.s32.totalorder %s184, %s185
      %p194 = scmp.eq.s32.totalorder %s27, 0
      %p195 = por %p193, %p194
      %p196 = scmp.ne.s32.totalorder %s184, %s185
      %p197 = scmp.eq.s32.totalorder %s28, 1
      %p198 = por %p196, %p197
      %p200 = scmp.ne.s32.totalorder %s185, %s199
      %p201 = scmp.eq.s32.totalorder %s28, 0
      %p202 = por %p200, %p201
      %s204 = sadd.s32 %s203, 1
      %p207 = scmp.eq.s32.totalorder %s22, 1
      %p208 = scmp.ne.s32.totalorder %s203, %s205
      %p209 = scmp.eq.s32.totalorder %s22, 0
      %p210 = por %p208, %p209
      %p211 = scmp.ne.s32.totalorder %s203, %s205
      %p212 = scmp.eq.s32.totalorder %s27, 1
      %p213 = por %p211, %p212
      %p214 = scmp.ne.s32.totalorder %s205, %s206
      %p215 = scmp.eq.s32.totalorder %s27, 0
      %p216 = por %p214, %p215
      %p217 = scmp.ne.s32.totalorder %s205, %s206
      %p218 = scmp.eq.s32.totalorder %s28, 1
      %p219 = por %p217, %p218
      %p221 = scmp.ne.s32.totalorder %s206, %s220
      %p222 = scmp.eq.s32.totalorder %s28, 0
      %p223 = por %p221, %p222
      %s225 = sadd.s32 %s224, 1
      %p228 = scmp.eq.s32.totalorder %s22, 1
      %p229 = scmp.ne.s32.totalorder %s224, %s226
      %p230 = scmp.eq.s32.totalorder %s22, 0
      %p231 = por %p229, %p230
      %p232 = scmp.ne.s32.totalorder %s224, %s226
      %p233 = scmp.eq.s32.totalorder %s27, 1
      %p234 = por %p232, %p233
      %p235 = scmp.ne.s32.totalorder %s226, %s227
      %p236 = scmp.eq.s32.totalorder %s27, 0
      %p237 = por %p235, %p236
      %p238 = scmp.ne.s32.totalorder %s226, %s227
      %p239 = scmp.eq.s32.totalorder %s28, 1
      %p240 = por %p238, %p239
      %p242 = scmp.ne.s32.totalorder %s227, %s241
      %p243 = scmp.eq.s32.totalorder %s28, 0
      %p244 = por %p242, %p243
      %s246 = sadd.s32 %s245, 1
      %p249 = scmp.eq.s32.totalorder %s22, 1
      %p250 = scmp.ne.s32.totalorder %s245, %s247
      %p251 = scmp.eq.s32.totalorder %s22, 0
      %p252 = por %p250, %p251
      %p253 = scmp.ne.s32.totalorder %s245, %s247
      %p254 = scmp.eq.s32.totalorder %s27, 1
      %p255 = por %p253, %p254
      %p256 = scmp.ne.s32.totalorder %s247, %s248
      %p257 = scmp.eq.s32.totalorder %s27, 0
      %p258 = por %p256, %p257
      %p259 = scmp.ne.s32.totalorder %s247, %s248
      %p260 = scmp.eq.s32.totalorder %s28, 1
      %p261 = por %p259, %p260
      %p263 = scmp.ne.s32.totalorder %s248, %s262
      %p264 = scmp.eq.s32.totalorder %s28, 0
      %p265 = por %p263, %p264
      %s266 = ssub.s32 %s22, %s29
      %p267 = scmp.eq.s32.totalorder %s266, 0
      %s269 = sadd.s32 %s268, 1
      %s270 = scalar_select %p267, %s268, %s269
      %p273 = pneg %p267
      %p274 = scmp.eq.s32.totalorder %s22, 1
      %p275 = por %p273, %p274
      %p276 = scmp.ne.s32.totalorder %s268, %s271
      %p277 = scmp.eq.s32.totalorder %s22, 0
      %p278 = por %p276, %p277
      %p279 = scmp.ne.s32.totalorder %s268, %s271
      %p280 = scmp.eq.s32.totalorder %s27, 1
      %p281 = por %p279, %p280
      %p282 = scmp.ne.s32.totalorder %s271, %s272
      %p283 = scmp.eq.s32.totalorder %s27, 0
      %p284 = por %p282, %p283
      %p285 = scmp.ne.s32.totalorder %s271, %s272
      %p286 = scmp.eq.s32.totalorder %s28, 1
      %p287 = por %p285, %p286
      %p289 = scmp.ne.s32.totalorder %s272, %s288
      %p290 = scmp.eq.s32.totalorder %s28, 0
      %p291 = por %p289, %p290
      %p292 = scmp.le.s32.totalorder 1, %s22
      %p293 = scmp.lt.s32.totalorder %s22, 3
      %p294 = pnand %p292, %p293
      %p295 = pneg %p294
      // Predicated region
      $region9: #{style_encoder_forward.1} parent=5 // pred_check
        _
      $region10: #{style_encoder_forward.1} parent=5 // pred_check_branch
        %297 = sbr.rel (%p294) target = $region12
      $region11: #{style_encoder_forward.1} parent=5 // pred_region
        %s298 = ssub.s32 %s22, 1
        // Predicated region
        $region13: #{style_encoder_forward.1} parent=11 // pred_check
          %p299 = pneg %p69
        $region14: #{style_encoder_forward.1} parent=11 // pred_check_branch
          %301 = sbr.rel (%p299) target = $region16
        $region15: #{style_encoder_forward.1} parent=11 // pred_region
          _
        $region16: #{style_encoder_forward.1} parent=11 // pred_fallthru
          _
        // Predicated region
        $region17: #{style_encoder_forward.1} parent=11 // pred_check
          %p302 = pneg %p90
        $region18: #{style_encoder_forward.1} parent=11 // pred_check_branch
          %304 = sbr.rel (%p302) target = $region20
        $region19: #{style_encoder_forward.1} parent=11 // pred_region
          _
        $region20: #{style_encoder_forward.1} parent=11 // pred_fallthru
          _
        // Predicated region
        $region21: #{style_encoder_forward.1} parent=11 // pred_check
          %p305 = pneg %p111
        $region22: #{style_encoder_forward.1} parent=11 // pred_check_branch
          %307 = sbr.rel (%p305) target = $region24
        $region23: #{style_encoder_forward.1} parent=11 // pred_region
          %s309 = ssub.s32 9216, 9216
          %310 = vsyncadd [#allocation3], %s309
          %s311 = sshll.u32 [#allocation2], 4
          %s312 = int_to_ptr.vmem [resolvable:$true] %s311
          %317 = dma.hbm_to_vmem [thread:$0]  %s3, 9216, %s312, [#allocation3], 128, 128, 8
        $region24: #{style_encoder_forward.1} parent=11 // pred_fallthru
          _
        // Predicated region
        $region25: #{style_encoder_forward.1} parent=11 // pred_check
          %p318 = pneg %p132
        $region26: #{style_encoder_forward.1} parent=11 // pred_check_branch
          %320 = sbr.rel (%p318) target = $region28
        $region27: #{style_encoder_forward.1} parent=11 // pred_region
          %s322 = ssub.s32 3456, 3456
          %323 = vsyncadd [#allocation6], %s322
          %s324 = sshll.u32 [#allocation5], 4
          %s325 = int_to_ptr.vmem [resolvable:$true] %s324
          %330 = dma.hbm_to_vmem [thread:$0]  %s4, 3456, %s325, [#allocation6], 64, 64, 4
        $region28: #{style_encoder_forward.1} parent=11 // pred_fallthru
          _
        // Predicated region
        $region29: #{style_encoder_forward.1} parent=11 // pred_check
          %p331 = pneg %p153
        $region30: #{style_encoder_forward.1} parent=11 // pred_check_branch
          %333 = sbr.rel (%p331) target = $region32
        $region31: #{style_encoder_forward.1} parent=11 // pred_region
          _
        $region32: #{style_encoder_forward.1} parent=11 // pred_fallthru
          _
        // Predicated region
        $region33: #{style_encoder_forward.1} parent=11 // pred_check
          %p334 = pneg %p174
        $region34: #{style_encoder_forward.1} parent=11 // pred_check_branch
          %336 = sbr.rel (%p334) target = $region36
        $region35: #{style_encoder_forward.1} parent=11 // pred_region
          _
        $region36: #{style_encoder_forward.1} parent=11 // pred_fallthru
          _
        // Predicated region
        $region37: #{style_encoder_forward.1} parent=11 // pred_check
          %p337 = pneg %p195
        $region38: #{style_encoder_forward.1} parent=11 // pred_check_branch
          %339 = sbr.rel (%p337) target = $region40
        $region39: #{style_encoder_forward.1} parent=11 // pred_region
          _
        $region40: #{style_encoder_forward.1} parent=11 // pred_fallthru
          _
        // Predicated region
        $region41: #{style_encoder_forward.1} parent=11 // pred_check
          %p340 = pneg %p216
        $region42: #{style_encoder_forward.1} parent=11 // pred_check_branch
          %342 = sbr.rel (%p340) target = $region44
        $region43: #{style_encoder_forward.1} parent=11 // pred_region
          _
        $region44: #{style_encoder_forward.1} parent=11 // pred_fallthru
          _
        // Predicated region
        $region45: #{style_encoder_forward.1} parent=11 // pred_check
          %p343 = pneg %p237
        $region46: #{style_encoder_forward.1} parent=11 // pred_check_branch
          %345 = sbr.rel (%p343) target = $region48
        $region47: #{style_encoder_forward.1} parent=11 // pred_region
          %s347 = ssub.s32 3072, 3072
          %348 = vsyncadd [#allocation6], %s347
          %s349 = sshll.u32 [#allocation7], 4
          %s350 = int_to_ptr.vmem [resolvable:$true] %s349
          %355 = dma.hbm_to_vmem [thread:$0]  %s9, 3072, %s350, [#allocation6], 64, 64, 4
        $region48: #{style_encoder_forward.1} parent=11 // pred_fallthru
          _
        // Predicated region
        $region49: #{style_encoder_forward.1} parent=11 // pred_check
          %p356 = pneg %p258
        $region50: #{style_encoder_forward.1} parent=11 // pred_check_branch
          %358 = sbr.rel (%p356) target = $region52
        $region51: #{style_encoder_forward.1} parent=11 // pred_region
          _
        $region52: #{style_encoder_forward.1} parent=11 // pred_fallthru
          _
      $region12: #{style_encoder_forward.1} parent=5 // pred_fallthru
        _
      %p359 = scmp.lt.s32.totalorder %s22, 2
      // Predicated region
      $region53: #{style_encoder_forward.1} parent=5 // pred_check
        %p360 = pneg %p359
      $region54: #{style_encoder_forward.1} parent=5 // pred_check_branch
        %362 = sbr.rel (%p360) target = $region56
      $region55: #{style_encoder_forward.1} parent=5 // pred_region
        // Predicated region
        $region57: #{style_encoder_forward.1} parent=55 // pred_check
          %p363 = pneg %p42
        $region58: #{style_encoder_forward.1} parent=55 // pred_check_branch
          %365 = sbr.rel (%p363) target = $region60
        $region59: #{style_encoder_forward.1} parent=55 // pred_region
          %p366 = scmp.lt.s32.totalorder %s22, 1
          %s367 = scalar_select %p366, %s22, 1
          %s368 = smul.addr %s367, 32
          %s369 = smul.addr %s368, 4
          %s370 = scalar_lea.vmem %s0, %s369
        $region60: #{style_encoder_forward.1} parent=55 // pred_fallthru
          _
      $region56: #{style_encoder_forward.1} parent=5 // pred_fallthru
        _
      %p371 = scmp.le.s32.totalorder 1, %s22
      %p372 = scmp.lt.s32.totalorder %s22, 3
      %p373 = pnand %p371, %p372
      %p374 = pneg %p373
      // Predicated region
      $region61: #{style_encoder_forward.1} parent=5 // pred_check
        _
      $region62: #{style_encoder_forward.1} parent=5 // pred_check_branch
        %376 = sbr.rel (%p373) target = $region64
      $region63: #{style_encoder_forward.1} parent=5 // pred_region
        %s377 = ssub.s32 %s22, 1
        // Predicated region
        $region65: #{style_encoder_forward.1} parent=63 // pred_check
          %p378 = pneg %p111
        $region66: #{style_encoder_forward.1} parent=63 // pred_check_branch
          %380 = sbr.rel (%p378) target = $region68
        $region67: #{style_encoder_forward.1} parent=63 // pred_region
          %381 = dma.done [#allocation3], 9216
        $region68: #{style_encoder_forward.1} parent=63 // pred_fallthru
          _
        // Predicated region
        $region69: #{style_encoder_forward.1} parent=63 // pred_check
          %p382 = pneg %p132
        $region70: #{style_encoder_forward.1} parent=63 // pred_check_branch
          %384 = sbr.rel (%p382) target = $region72
        $region71: #{style_encoder_forward.1} parent=63 // pred_region
          %385 = dma.done [#allocation6], 3456
        $region72: #{style_encoder_forward.1} parent=63 // pred_fallthru
          _
        // Predicated region
        $region73: #{style_encoder_forward.1} parent=63 // pred_check
          %p386 = pneg %p237
        $region74: #{style_encoder_forward.1} parent=63 // pred_check_branch
          %388 = sbr.rel (%p386) target = $region76
        $region75: #{style_encoder_forward.1} parent=63 // pred_region
          %389 = dma.done [#allocation6], 3072
        $region76: #{style_encoder_forward.1} parent=63 // pred_fallthru
          _
        %p390 = scmp.lt.s32.totalorder %s27, 1
        %s391 = scalar_select %p390, %s27, 1
        %s392 = smul.addr %s391, 32
        %s393 = smul.addr %s392, 4
        %s394 = scalar_lea.vmem %s0, %s393
        %p395 = pneg %p48
        %p396 = pneg %p45
        %p397 = pneg %p69
        %p398 = pneg %p66
        %p399 = pneg %p90
        %p400 = pneg %p87
        %p401 = pneg %p111
        %p402 = pneg %p108
        %p403 = pneg %p132
        %p404 = pneg %p129
        %p405 = pneg %p153
        %p406 = pneg %p150
        %p407 = pneg %p174
        %p408 = pneg %p171
        %p409 = pneg %p195
        %p410 = pneg %p192
        %p411 = pneg %p216
        %p412 = pneg %p213
        %p413 = pneg %p237
        %p414 = pneg %p234
        %p415 = pneg %p258
        %p416 = pneg %p255
        %p417 = pneg %p284
        %p418 = pneg %p281
        %s419 = sand.u32 %s271, 1
        %s420 = scalar_lea.sflag [#allocation4], %s419
        %s421 = sand.u32 %s271, 1
        %s422 = scalar_lea.vmem [#allocation8], %s421
        %p423 = scmp.lt.s32.totalorder %s27, 1
        %s424 = scalar_select %p423, %s27, 1
        %s425 = smul.addr %s424, 32
        %s426 = smul.addr %s425, 4
        %s427 = scalar_lea.vmem %s0, %s426
        %v429 = vld [vmem:[%s427] sm:$0xf]
        %v430 = vld [vmem:[%s427 + $0x4] sm:$0xf]
        %v431 = vld [vmem:[%s427 + $0x8] sm:$0xf]
        %v432 = vld [vmem:[%s427 + $0xc] sm:$0xf]
        %v433 = vld [vmem:[%s427 + $0x10] sm:$0xf]
        %v434 = vld [vmem:[%s427 + $0x14] sm:$0xf]
        %v435 = vld [vmem:[%s427 + $0x18] sm:$0xf]
        %v436 = vld [vmem:[%s427 + $0x1c] sm:$0xf]
        %v437 = vld [vmem:[%s427 + $0x20] sm:$0xf]
        %v438 = vld [vmem:[%s427 + $0x24] sm:$0xf]
        %v439 = vld [vmem:[%s427 + $0x28] sm:$0xf]
        %v440 = vld [vmem:[%s427 + $0x2c] sm:$0xf]
        %v441 = vld [vmem:[%s427 + $0x30] sm:$0xf]
        %v442 = vld [vmem:[%s427 + $0x34] sm:$0xf]
        %v443 = vld [vmem:[%s427 + $0x38] sm:$0xf]
        %v444 = vld [vmem:[%s427 + $0x3c] sm:$0xf]
        %v445 = vld [vmem:[%s427 + $0x40] sm:$0xf]
        %v446 = vld [vmem:[%s427 + $0x44] sm:$0xf]
        %v447 = vld [vmem:[%s427 + $0x48] sm:$0xf]
        %v448 = vld [vmem:[%s427 + $0x4c] sm:$0xf]
        %v449 = vld [vmem:[%s427 + $0x50] sm:$0xf]
        %v450 = vld [vmem:[%s427 + $0x54] sm:$0xf]
        %v451 = vld [vmem:[%s427 + $0x58] sm:$0xf]
        %v452 = vld [vmem:[%s427 + $0x5c] sm:$0xf]
        %v453 = vld [vmem:[%s427 + $0x60] sm:$0xf]
        %v454 = vld [vmem:[%s427 + $0x64] sm:$0xf]
        %v455 = vld [vmem:[%s427 + $0x68] sm:$0xf]
        %v456 = vld [vmem:[%s427 + $0x6c] sm:$0xf]
        %v457 = vld [vmem:[%s427 + $0x70] sm:$0xf]
        %v458 = vld [vmem:[%s427 + $0x74] sm:$0xf]
        %v459 = vld [vmem:[%s427 + $0x78] sm:$0xf]
        %v460 = vld [vmem:[%s427 + $0x7c] sm:$0xf]
        %v461 = vld [vmem:[%s1] sm:$0xf]
        %v462 = vld [vmem:[%s1 + $0x4] sm:$0xf]
        %v463 = vld [vmem:[%s2] sm:$0x1]
        %v465 = vlaneseq
        %v466 = vshrl.u32 %v465, 7
        %v467 = vsub.s32 0, %v466
        %v468 = vrot.slane %v463, %v467
        %v502 = vunpack.c.l.b16 %v429
        %v503 = vunpack.c.l.b16 %v430
        %v504 = vunpack.c.l.b16 %v431
        %v505 = vunpack.c.l.b16 %v432
        %v506 = vunpack.c.l.b16 %v433
        %v507 = vunpack.c.l.b16 %v434
        %v508 = vunpack.c.l.b16 %v435
        %v509 = vunpack.c.l.b16 %v436
        %v510 = vunpack.c.l.b16 %v437
        %v511 = vunpack.c.l.b16 %v438
        %v512 = vunpack.c.l.b16 %v439
        %v513 = vunpack.c.l.b16 %v440
        %v514 = vunpack.c.l.b16 %v441
        %v515 = vunpack.c.l.b16 %v442
        %v516 = vunpack.c.l.b16 %v443
        %v517 = vunpack.c.l.b16 %v444
        %v518 = vunpack.c.l.b16 %v445
        %v519 = vunpack.c.l.b16 %v446
        %v520 = vunpack.c.l.b16 %v447
        %v521 = vunpack.c.l.b16 %v448
        %v522 = vunpack.c.l.b16 %v449
        %v523 = vunpack.c.l.b16 %v450
        %v524 = vunpack.c.l.b16 %v451
        %v525 = vunpack.c.l.b16 %v452
        %v526 = vunpack.c.l.b16 %v453
        %v527 = vunpack.c.l.b16 %v454
        %v528 = vunpack.c.l.b16 %v455
        %v529 = vunpack.c.l.b16 %v456
        %v530 = vunpack.c.l.b16 %v457
        %v531 = vunpack.c.l.b16 %v458
        %v532 = vunpack.c.l.b16 %v459
        %v533 = vunpack.c.l.b16 %v460
        %v534 = vpack.c.b16 %v503, %v502
        %v535 = vpack.c.b16 %v505, %v504
        %v536 = vpack.c.b16 %v507, %v506
        %v537 = vpack.c.b16 %v509, %v508
        %v538 = vpack.c.b16 %v511, %v510
        %v539 = vpack.c.b16 %v513, %v512
        %v540 = vpack.c.b16 %v515, %v514
        %v541 = vpack.c.b16 %v517, %v516
        %v542 = vpack.c.b16 %v519, %v518
        %v543 = vpack.c.b16 %v521, %v520
        %v544 = vpack.c.b16 %v523, %v522
        %v545 = vpack.c.b16 %v525, %v524
        %v546 = vpack.c.b16 %v527, %v526
        %v547 = vpack.c.b16 %v529, %v528
        %v548 = vpack.c.b16 %v531, %v530
        %v549 = vpack.c.b16 %v533, %v532
        %v552 = vunpack.c.l.b16 %v461
        %v553 = vunpack.c.l.b16 %v462
        %v554 = vpack.c.b16 %v553, %v552
        %vm556 = vcmask 130048
        %v558 = vsel %vm556, %v534, 0
        %v561 = vsel %vm556, %v535, 0
        %v564 = vsel %vm556, %v536, 0
        %v567 = vsel %vm556, %v537, 0
        %v570 = vsel %vm556, %v538, 0
        %v573 = vsel %vm556, %v539, 0
        %v576 = vsel %vm556, %v540, 0
        %v579 = vsel %vm556, %v541, 0
        %v582 = vsel %vm556, %v542, 0
        %v585 = vsel %vm556, %v543, 0
        %v588 = vsel %vm556, %v544, 0
        %v591 = vsel %vm556, %v545, 0
        %v594 = vsel %vm556, %v546, 0
        %v597 = vsel %vm556, %v547, 0
        %v600 = vsel %vm556, %v548, 0
        %v603 = vsel %vm556, %v549, 0
        %605 = vmatprep.subr.bf16.mxu0 0
        %606 = vmatpush1.bf16.msra.mxu0 %v554
        %607 = vmatprep.subr.bf16.mxu0 0
        %608 = vmatpush1.bf16.msra.mxu0 0
        %609 = vmatprep.subr.bf16.mxu0 0
        %610 = vmatpush1.bf16.msra.mxu0 0
        %611 = vmatprep.subr.bf16.mxu0 0
        %612 = vmatpush1.bf16.msra.mxu0 0
        %613 = vmatprep.subr.bf16.mxu0 0
        %614 = vmatpush1.bf16.msra.mxu0 0
        %615 = vmatprep.subr.bf16.mxu0 0
        %616 = vmatpush1.bf16.msra.mxu0 0
        %617 = vmatprep.subr.bf16.mxu0 0
        %618 = vmatpush1.bf16.msra.mxu0 0
        %619 = vmatprep.subr.bf16.mxu0 0
        %620 = vmatpush1.bf16.msra.mxu0 0
        %621 = vmatprep.subr.bf16.mxu0 0
        %622 = vmatpush1.bf16.msra.mxu0 0
        %623 = vmatprep.subr.bf16.mxu0 0
        %624 = vmatpush1.bf16.msra.mxu0 0
        %625 = vmatprep.subr.bf16.mxu0 0
        %626 = vmatpush1.bf16.msra.mxu0 0
        %627 = vmatprep.subr.bf16.mxu0 0
        %628 = vmatpush1.bf16.msra.mxu0 0
        %629 = vmatprep.subr.bf16.mxu0 0
        %630 = vmatpush1.bf16.msra.mxu0 0
        %631 = vmatprep.subr.bf16.mxu0 0
        %632 = vmatpush1.bf16.msra.mxu0 0
        %633 = vmatprep.subr.bf16.mxu0 0
        %634 = vmatpush1.bf16.msra.mxu0 0
        %635 = vmatprep.subr.bf16.mxu0 0
        %636 = vmatpush1.bf16.msra.mxu0 0
        %637 = vmatprep.mubr.bf16.mxu0 0
        %638 = vmatmul.mubr.bf16.gmra.mrb[0].mxu0 %v558
        %v639 = vpop.f32.mrb[0].mxu0
        %v640 = vadd.f32 %v468, %v639
        %v641 = vpop.f32.mrb[0].mxu0
        %v642 = vpop.f32.mrb[0].mxu0
        %v643 = vadd.f32 %v468, %v642
        %v644 = vpop.f32.mrb[0].mxu0
        %645 = vmatprep.mubr.bf16.mxu0 0
        %646 = vmatmul.mubr.bf16.gmra.mrb[0].mxu0 %v561
        %v647 = vpop.f32.mrb[0].mxu0
        %v648 = vadd.f32 %v468, %v647
        %v649 = vpop.f32.mrb[0].mxu0
        %v650 = vpop.f32.mrb[0].mxu0
        %v651 = vadd.f32 %v468, %v650
        %v652 = vpop.f32.mrb[0].mxu0
        %653 = vmatprep.mubr.bf16.mxu0 0
        %654 = vmatmul.mubr.bf16.gmra.mrb[0].mxu0 %v564
        %v655 = vpop.f32.mrb[0].mxu0
        %v656 = vadd.f32 %v468, %v655
        %v657 = vpop.f32.mrb[0].mxu0
        %v658 = vpop.f32.mrb[0].mxu0
        %v659 = vadd.f32 %v468, %v658
        %v660 = vpop.f32.mrb[0].mxu0
        %661 = vmatprep.mubr.bf16.mxu0 0
        %662 = vmatmul.mubr.bf16.gmra.mrb[0].mxu0 %v567
        %v663 = vpop.f32.mrb[0].mxu0
        %v664 = vadd.f32 %v468, %v663
        %v665 = vpop.f32.mrb[0].mxu0
        %v666 = vpop.f32.mrb[0].mxu0
        %v667 = vadd.f32 %v468, %v666
        %v668 = vpop.f32.mrb[0].mxu0
        %669 = vmatprep.mubr.bf16.mxu0 0
        %670 = vmatmul.mubr.bf16.gmra.mrb[0].mxu0 %v570
        %v671 = vpop.f32.mrb[0].mxu0
        %v672 = vadd.f32 %v468, %v671
        %v673 = vpop.f32.mrb[0].mxu0
        %v674 = vpop.f32.mrb[0].mxu0
        %v675 = vadd.f32 %v468, %v674
        %v676 = vpop.f32.mrb[0].mxu0
        %677 = vmatprep.mubr.bf16.mxu0 0
        %678 = vmatmul.mubr.bf16.gmra.mrb[0].mxu0 %v573
        %v679 = vpop.f32.mrb[0].mxu0
        %v680 = vadd.f32 %v468, %v679
        %v681 = vpop.f32.mrb[0].mxu0
        %v682 = vpop.f32.mrb[0].mxu0
        %v683 = vadd.f32 %v468, %v682
        %v684 = vpop.f32.mrb[0].mxu0
        %685 = vmatprep.mubr.bf16.mxu0 0
        %686 = vmatmul.mubr.bf16.gmra.mrb[0].mxu0 %v576
        %v687 = vpop.f32.mrb[0].mxu0
        %v688 = vadd.f32 %v468, %v687
        %v689 = vpop.f32.mrb[0].mxu0
        %v690 = vpop.f32.mrb[0].mxu0
        %v691 = vadd.f32 %v468, %v690
        %v692 = vpop.f32.mrb[0].mxu0
        %693 = vmatprep.mubr.bf16.mxu0 0
        %694 = vmatmul.mubr.bf16.gmra.mrb[0].mxu0 %v579
        %v695 = vpop.f32.mrb[0].mxu0
        %v696 = vadd.f32 %v468, %v695
        %v697 = vpop.f32.mrb[0].mxu0
        %v698 = vpop.f32.mrb[0].mxu0
        %v699 = vadd.f32 %v468, %v698
        %v700 = vpop.f32.mrb[0].mxu0
        %701 = vmatprep.mubr.bf16.mxu0 0
        %702 = vmatmul.mubr.bf16.gmra.mrb[0].mxu0 %v582
        %v703 = vpop.f32.mrb[0].mxu0
        %v704 = vadd.f32 %v468, %v703
        %v705 = vpop.f32.mrb[0].mxu0
        %v706 = vpop.f32.mrb[0].mxu0
        %v707 = vadd.f32 %v468, %v706
        %v708 = vpop.f32.mrb[0].mxu0
        %709 = vmatprep.mubr.bf16.mxu0 0
        %710 = vmatmul.mubr.bf16.gmra.mrb[0].mxu0 %v585
        %v711 = vpop.f32.mrb[0].mxu0
        %v712 = vadd.f32 %v468, %v711
        %v713 = vpop.f32.mrb[0].mxu0
        %v714 = vpop.f32.mrb[0].mxu0
        %v715 = vadd.f32 %v468, %v714
        %v716 = vpop.f32.mrb[0].mxu0
        %717 = vmatprep.mubr.bf16.mxu0 0
        %718 = vmatmul.mubr.bf16.gmra.mrb[0].mxu0 %v588
        %v719 = vpop.f32.mrb[0].mxu0
        %v720 = vadd.f32 %v468, %v719
        %v721 = vpop.f32.mrb[0].mxu0
        %v722 = vpop.f32.mrb[0].mxu0
        %v723 = vadd.f32 %v468, %v722
        %v724 = vpop.f32.mrb[0].mxu0
        %725 = vmatprep.mubr.bf16.mxu0 0
        %726 = vmatmul.mubr.bf16.gmra.mrb[0].mxu0 %v591
        %v727 = vpop.f32.mrb[0].mxu0
        %v728 = vadd.f32 %v468, %v727
        %v729 = vpop.f32.mrb[0].mxu0
        %v730 = vpop.f32.mrb[0].mxu0
        %v731 = vadd.f32 %v468, %v730
        %v732 = vpop.f32.mrb[0].mxu0
        %733 = vmatprep.mubr.bf16.mxu0 0
        %734 = vmatmul.mubr.bf16.gmra.mrb[0].mxu0 %v594
        %v735 = vpop.f32.mrb[0].mxu0
        %v736 = vadd.f32 %v468, %v735
        %v737 = vpop.f32.mrb[0].mxu0
        %v738 = vpop.f32.mrb[0].mxu0
        %v739 = vadd.f32 %v468, %v738
        %v740 = vpop.f32.mrb[0].mxu0
        %741 = vmatprep.mubr.bf16.mxu0 0
        %742 = vmatmul.mubr.bf16.gmra.mrb[0].mxu0 %v597
        %v743 = vpop.f32.mrb[0].mxu0
        %v744 = vadd.f32 %v468, %v743
        %v745 = vpop.f32.mrb[0].mxu0
        %v746 = vpop.f32.mrb[0].mxu0
        %v747 = vadd.f32 %v468, %v746
        %v748 = vpop.f32.mrb[0].mxu0
        %749 = vmatprep.mubr.bf16.mxu0 0
        %750 = vmatmul.mubr.bf16.gmra.mrb[0].mxu0 %v600
        %v751 = vpop.f32.mrb[0].mxu0
        %v752 = vadd.f32 %v468, %v751
        %v753 = vpop.f32.mrb[0].mxu0
        %v754 = vpop.f32.mrb[0].mxu0
        %v755 = vadd.f32 %v468, %v754
        %v756 = vpop.f32.mrb[0].mxu0
        %757 = vmatprep.mubr.bf16.mxu0 0
        %758 = vmatmul.mubr.bf16.gmra.mrb[0].mxu0 %v603
        %v759 = vpop.f32.mrb[0].mxu0
        %v760 = vadd.f32 %v468, %v759
        %v761 = vpop.f32.mrb[0].mxu0
        %v762 = vpop.f32.mrb[0].mxu0
        %v763 = vadd.f32 %v468, %v762
        %v764 = vpop.f32.mrb[0].mxu0
        %765 = vdwg.mxu0
        %v766 = vmax.f32 %v640, 0.0
        %v767 = vmax.f32 %v643, 0.0
        %v768 = vmax.f32 %v648, 0.0
        %v769 = vmax.f32 %v651, 0.0
        %v770 = vmax.f32 %v656, 0.0
        %v771 = vmax.f32 %v659, 0.0
        %v772 = vmax.f32 %v664, 0.0
        %v773 = vmax.f32 %v667, 0.0
        %v774 = vmax.f32 %v672, 0.0
        %v775 = vmax.f32 %v675, 0.0
        %v776 = vmax.f32 %v680, 0.0
        %v777 = vmax.f32 %v683, 0.0
        %v778 = vmax.f32 %v688, 0.0
        %v779 = vmax.f32 %v691, 0.0
        %v780 = vmax.f32 %v696, 0.0
        %v781 = vmax.f32 %v699, 0.0
        %v782 = vmax.f32 %v704, 0.0
        %v783 = vmax.f32 %v707, 0.0
        %v784 = vmax.f32 %v712, 0.0
        %v785 = vmax.f32 %v715, 0.0
        %v786 = vmax.f32 %v720, 0.0
        %v787 = vmax.f32 %v723, 0.0
        %v788 = vmax.f32 %v728, 0.0
        %v789 = vmax.f32 %v731, 0.0
        %v790 = vmax.f32 %v736, 0.0
        %v791 = vmax.f32 %v739, 0.0
        %v792 = vmax.f32 %v744, 0.0
        %v793 = vmax.f32 %v747, 0.0
        %v794 = vmax.f32 %v752, 0.0
        %v795 = vmax.f32 %v755, 0.0
        %v796 = vmax.f32 %v760, 0.0
        %v797 = vmax.f32 %v763, 0.0
        %v798 = vpack.c.bf16 %v767, %v766
        %v799 = vpack.c.bf16 %v769, %v768
        %v800 = vpack.c.bf16 %v771, %v770
        %v801 = vpack.c.bf16 %v773, %v772
        %v802 = vpack.c.bf16 %v775, %v774
        %v803 = vpack.c.bf16 %v777, %v776
        %v804 = vpack.c.bf16 %v779, %v778
        %v805 = vpack.c.bf16 %v781, %v780
        %v806 = vpack.c.bf16 %v783, %v782
        %v807 = vpack.c.bf16 %v785, %v784
        %v808 = vpack.c.bf16 %v787, %v786
        %v809 = vpack.c.bf16 %v789, %v788
        %v810 = vpack.c.bf16 %v791, %v790
        %v811 = vpack.c.bf16 %v793, %v792
        %v812 = vpack.c.bf16 %v795, %v794
        %v813 = vpack.c.bf16 %v797, %v796
        %v814 = vld [vmem:[#allocation2] sm:$0xff]
        %v815 = vld [vmem:[#allocation2 + $0x8] sm:$0xff]
        %v816 = vld [vmem:[#allocation2 + $0x10] sm:$0xff]
        %v817 = vld [vmem:[#allocation2 + $0x18] sm:$0xff]
        %v818 = vld [vmem:[#allocation2 + $0x20] sm:$0xff]
        %v819 = vld [vmem:[#allocation2 + $0x28] sm:$0xff]
        %v820 = vld [vmem:[#allocation2 + $0x30] sm:$0xff]
        %v821 = vld [vmem:[#allocation2 + $0x38] sm:$0xff]
        %v830 = vunpack.c.l.b16 %v814
        %v831 = vunpack.c.h.b16 %v814
        %v832 = vunpack.c.l.b16 %v815
        %v833 = vunpack.c.h.b16 %v815
        %v834 = vunpack.c.l.b16 %v816
        %v835 = vunpack.c.h.b16 %v816
        %v836 = vunpack.c.l.b16 %v817
        %v837 = vunpack.c.h.b16 %v817
        %v838 = vunpack.c.l.b16 %v818
        %v839 = vunpack.c.h.b16 %v818
        %v840 = vunpack.c.l.b16 %v819
        %v841 = vunpack.c.h.b16 %v819
        %v842 = vunpack.c.l.b16 %v820
        %v843 = vunpack.c.h.b16 %v820
        %v844 = vunpack.c.l.b16 %v821
        %v845 = vunpack.c.h.b16 %v821
        %v846 = vpack.c.b16 %v832, %v830
        %v847 = vpack.c.b16 %v833, %v831
        %v848 = vpack.c.b16 %v836, %v834
        %v849 = vpack.c.b16 %v837, %v835
        %v850 = vpack.c.b16 %v840, %v838
        %v851 = vpack.c.b16 %v841, %v839
        %v852 = vpack.c.b16 %v844, %v842
        %v853 = vpack.c.b16 %v845, %v843
        %862 = vmatprep.subr.bf16.mxu0 0
        %863 = vmatpush1.bf16.msra.mxu0 %v798
        %864 = vmatprep.subr.bf16.mxu0 0
        %865 = vmatpush1.bf16.msra.mxu0 %v799
        %866 = vmatprep.subr.bf16.mxu0 0
        %867 = vmatpush1.bf16.msra.mxu0 %v800
        %868 = vmatprep.subr.bf16.mxu0 0
        %869 = vmatpush1.bf16.msra.mxu0 %v801
        %870 = vmatprep.subr.bf16.mxu0 0
        %871 = vmatpush1.bf16.msra.mxu0 %v802
        %872 = vmatprep.subr.bf16.mxu0 0
        %873 = vmatpush1.bf16.msra.mxu0 %v803
        %874 = vmatprep.subr.bf16.mxu0 0
        %875 = vmatpush1.bf16.msra.mxu0 %v804
        %876 = vmatprep.subr.bf16.mxu0 0
        %877 = vmatpush1.bf16.msra.mxu0 %v805
        %878 = vmatprep.subr.bf16.mxu0 0
        %879 = vmatpush1.bf16.msra.mxu0 %v806
        %880 = vmatprep.subr.bf16.mxu0 0
        %881 = vmatpush1.bf16.msra.mxu0 %v807
        %882 = vmatprep.subr.bf16.mxu0 0
        %883 = vmatpush1.bf16.msra.mxu0 %v808
        %884 = vmatprep.subr.bf16.mxu0 0
        %885 = vmatpush1.bf16.msra.mxu0 %v809
        %886 = vmatprep.subr.bf16.mxu0 0
        %887 = vmatpush1.bf16.msra.mxu0 %v810
        %888 = vmatprep.subr.bf16.mxu0 0
        %889 = vmatpush1.bf16.msra.mxu0 %v811
        %890 = vmatprep.subr.bf16.mxu0 0
        %891 = vmatpush1.bf16.msra.mxu0 %v812
        %892 = vmatprep.subr.bf16.mxu0 0
        %893 = vmatpush1.bf16.msra.mxu0 %v813
        %894 = vmatprep.mubr.bf16.mxu0 %v847
        %895 = vmatmul.mubr.bf16.gmra.mrb[0].mxu0 %v846
        %v896 = vpop.f32.mrb[0].mxu0
        %v897 = vadd.f32 0.0, %v896
        %v898 = vpop.f32.mrb[0].mxu0
        %v899 = vpop.f32.mrb[0].mxu0
        %v900 = vadd.f32 0.0, %v899
        %v901 = vpop.f32.mrb[0].mxu0
        %902 = vmatprep.mubr.bf16.mxu0 %v849
        %903 = vmatmul.mubr.bf16.gmra.mrb[0].mxu0 %v848
        %v904 = vpop.f32.mrb[0].mxu0
        %v905 = vadd.f32 0.0, %v904
        %v906 = vpop.f32.mrb[0].mxu0
        %v907 = vpop.f32.mrb[0].mxu0
        %v908 = vadd.f32 0.0, %v907
        %v909 = vpop.f32.mrb[0].mxu0
        %910 = vmatprep.mubr.bf16.mxu0 %v851
        %911 = vmatmul.mubr.bf16.gmra.mrb[0].mxu0 %v850
        %v912 = vpop.f32.mrb[0].mxu0
        %v913 = vadd.f32 0.0, %v912
        %v914 = vpop.f32.mrb[0].mxu0
        %v915 = vpop.f32.mrb[0].mxu0
        %v916 = vadd.f32 0.0, %v915
        %v917 = vpop.f32.mrb[0].mxu0
        %918 = vmatprep.mubr.bf16.mxu0 %v853
        %919 = vmatmul.mubr.bf16.gmra.mrb[0].mxu0 %v852
        %v920 = vpop.f32.mrb[0].mxu0
        %v921 = vadd.f32 0.0, %v920
        %v922 = vpop.f32.mrb[0].mxu0
        %v923 = vpop.f32.mrb[0].mxu0
        %v924 = vadd.f32 0.0, %v923
        %v925 = vpop.f32.mrb[0].mxu0
        %926 = vdwg.mxu0
        %v927 = vpack.c.bf16 %v900, %v897
        %v928 = vpack.c.bf16 %v908, %v905
        %v929 = vpack.c.bf16 %v916, %v913
        %v930 = vpack.c.bf16 %v924, %v921
        %v931 = vld [vmem:[#allocation5] sm:$0xf]
        %v932 = vld [vmem:[#allocation5 + $0x4] sm:$0xf]
        %v933 = vld [vmem:[#allocation5 + $0x8] sm:$0xf]
        %v934 = vld [vmem:[#allocation5 + $0xc] sm:$0xf]
        %v935 = vld [vmem:[#allocation5 + $0x10] sm:$0xf]
        %v936 = vld [vmem:[#allocation5 + $0x14] sm:$0xf]
        %s937 = scalar_lea.vmem [#allocation2], 64
        %v938 = vld [vmem:[%s937] sm:$0xff]
        %v939 = vld [vmem:[%s937 + $0x8] sm:$0xff]
        %v940 = vld [vmem:[%s937 + $0x10] sm:$0xff]
        %v941 = vld [vmem:[%s937 + $0x18] sm:$0xff]
        %v942 = vld [vmem:[%s937 + $0x20] sm:$0xff]
        %v943 = vld [vmem:[%s937 + $0x28] sm:$0xff]
        %v944 = vld [vmem:[%s937 + $0x30] sm:$0xff]
        %v945 = vld [vmem:[%s937 + $0x38] sm:$0xff]
        %v954 = vunpack.c.l.b16 %v938
        %v955 = vunpack.c.h.b16 %v938
        %v956 = vunpack.c.l.b16 %v939
        %v957 = vunpack.c.h.b16 %v939
        %v958 = vunpack.c.l.b16 %v940
        %v959 = vunpack.c.h.b16 %v940
        %v960 = vunpack.c.l.b16 %v941
        %v961 = vunpack.c.h.b16 %v941
        %v962 = vunpack.c.l.b16 %v942
        %v963 = vunpack.c.h.b16 %v942
        %v964 = vunpack.c.l.b16 %v943
        %v965 = vunpack.c.h.b16 %v943
        %v966 = vunpack.c.l.b16 %v944
        %v967 = vunpack.c.h.b16 %v944
        %v968 = vunpack.c.l.b16 %v945
        %v969 = vunpack.c.h.b16 %v945
        %v970 = vpack.c.b16 %v956, %v954
        %v971 = vpack.c.b16 %v957, %v955
        %v972 = vpack.c.b16 %v960, %v958
        %v973 = vpack.c.b16 %v961, %v959
        %v974 = vpack.c.b16 %v964, %v962
        %v975 = vpack.c.b16 %v965, %v963
        %v976 = vpack.c.b16 %v968, %v966
        %v977 = vpack.c.b16 %v969, %v967
        %986 = vmatprep.subr.bf16.mxu0 0
        %987 = vmatpush1.bf16.msra.mxu0 %v798
        %988 = vmatprep.subr.bf16.mxu0 0
        %989 = vmatpush1.bf16.msra.mxu0 %v799
        %990 = vmatprep.subr.bf16.mxu0 0
        %991 = vmatpush1.bf16.msra.mxu0 %v800
        %992 = vmatprep.subr.bf16.mxu0 0
        %993 = vmatpush1.bf16.msra.mxu0 %v801
        %994 = vmatprep.subr.bf16.mxu0 0
        %995 = vmatpush1.bf16.msra.mxu0 %v802
        %996 = vmatprep.subr.bf16.mxu0 0
        %997 = vmatpush1.bf16.msra.mxu0 %v803
        %998 = vmatprep.subr.bf16.mxu0 0
        %999 = vmatpush1.bf16.msra.mxu0 %v804
        %1000 = vmatprep.subr.bf16.mxu0 0
        %1001 = vmatpush1.bf16.msra.mxu0 %v805
        %1002 = vmatprep.subr.bf16.mxu0 0
        %1003 = vmatpush1.bf16.msra.mxu0 %v806
        %1004 = vmatprep.subr.bf16.mxu0 0
        %1005 = vmatpush1.bf16.msra.mxu0 %v807
        %1006 = vmatprep.subr.bf16.mxu0 0
        %1007 = vmatpush1.bf16.msra.mxu0 %v808
        %1008 = vmatprep.subr.bf16.mxu0 0
        %1009 = vmatpush1.bf16.msra.mxu0 %v809
        %1010 = vmatprep.subr.bf16.mxu0 0
        %1011 = vmatpush1.bf16.msra.mxu0 %v810
        %1012 = vmatprep.subr.bf16.mxu0 0
        %1013 = vmatpush1.bf16.msra.mxu0 %v811
        %1014 = vmatprep.subr.bf16.mxu0 0
        %1015 = vmatpush1.bf16.msra.mxu0 %v812
        %1016 = vmatprep.subr.bf16.mxu0 0
        %1017 = vmatpush1.bf16.msra.mxu0 %v813
        %1018 = vmatprep.mubr.bf16.mxu0 %v971
        %1019 = vmatmul.mubr.bf16.gmra.mrb[0].mxu0 %v970
        %v1020 = vpop.f32.mrb[0].mxu0
        %v1021 = vadd.f32 0.0, %v1020
        %v1022 = vpop.f32.mrb[0].mxu0
        %v1023 = vpop.f32.mrb[0].mxu0
        %v1024 = vadd.f32 0.0, %v1023
        %v1025 = vpop.f32.mrb[0].mxu0
        %1026 = vmatprep.mubr.bf16.mxu0 %v973
        %1027 = vmatmul.mubr.bf16.gmra.mrb[0].mxu0 %v972
        %v1028 = vpop.f32.mrb[0].mxu0
        %v1029 = vadd.f32 0.0, %v1028
        %v1030 = vpop.f32.mrb[0].mxu0
        %v1031 = vpop.f32.mrb[0].mxu0
        %v1032 = vadd.f32 0.0, %v1031
        %v1033 = vpop.f32.mrb[0].mxu0
        %1034 = vmatprep.mubr.bf16.mxu0 %v975
        %1035 = vmatmul.mubr.bf16.gmra.mrb[0].mxu0 %v974
        %v1036 = vpop.f32.mrb[0].mxu0
        %v1037 = vadd.f32 0.0, %v1036
        %v1038 = vpop.f32.mrb[0].mxu0
        %v1039 = vpop.f32.mrb[0].mxu0
        %v1040 = vadd.f32 0.0, %v1039
        %v1041 = vpop.f32.mrb[0].mxu0
        %1042 = vmatprep.mubr.bf16.mxu0 %v977
        %1043 = vmatmul.mubr.bf16.gmra.mrb[0].mxu0 %v976
        %v1044 = vpop.f32.mrb[0].mxu0
        %v1045 = vadd.f32 0.0, %v1044
        %v1046 = vpop.f32.mrb[0].mxu0
        %v1047 = vpop.f32.mrb[0].mxu0
        %v1048 = vadd.f32 0.0, %v1047
        %v1049 = vpop.f32.mrb[0].mxu0
        %1050 = vdwg.mxu0
        %v1051 = vpack.c.bf16 %v1024, %v1021
        %v1052 = vpack.c.bf16 %v1032, %v1029
        %v1053 = vpack.c.bf16 %v1040, %v1037
        %v1054 = vpack.c.bf16 %v1048, %v1045
        %s1055 = scalar_lea.vmem [#allocation5], 24
        %v1056 = vld [vmem:[%s1055] sm:$0xf]
        %v1057 = vld [vmem:[%s1055 + $0x4] sm:$0xf]
        %v1058 = vld [vmem:[%s1055 + $0x8] sm:$0xf]
        %v1059 = vld [vmem:[%s1055 + $0xc] sm:$0xf]
        %v1060 = vld [vmem:[%s1055 + $0x10] sm:$0xf]
        %v1061 = vld [vmem:[%s1055 + $0x14] sm:$0xf]
        %v1068 = vunpack.c.l.b16 %v1056
        %v1069 = vunpack.c.l.b16 %v1057
        %v1070 = vunpack.c.l.b16 %v1058
        %v1071 = vunpack.c.l.b16 %v1059
        %v1072 = vunpack.c.l.b16 %v1060
        %v1073 = vunpack.c.l.b16 %v1061
        %v1074 = vpack.c.b16 %v1069, %v1068
        %v1075 = vpack.c.b16 %v1071, %v1070
        %v1076 = vpack.c.b16 %v1073, %v1072
        %vm1080 = vcmask 392192
        %v1082 = vsel %vm1080, %v1051, 0
        %v1085 = vsel %vm1080, %v1052, 0
        %v1088 = vsel %vm1080, %v1053, 0
        %v1091 = vsel %vm1080, %v1054, 0
        %1093 = vmatprep.subr.bf16.mxu0 0
        %1094 = vmatpush1.bf16.msra.mxu0 %v1074
        %1095 = vmatprep.subr.bf16.mxu0 0
        %1096 = vmatpush1.bf16.msra.mxu0 %v1075
        %1097 = vmatprep.subr.bf16.mxu0 0
        %1098 = vmatpush1.bf16.msra.mxu0 %v1076
        %1099 = vmatprep.subr.bf16.mxu0 0
        %1100 = vmatpush1.bf16.msra.mxu0 0
        %1101 = vmatprep.subr.bf16.mxu0 0
        %1102 = vmatpush1.bf16.msra.mxu0 0
        %1103 = vmatprep.subr.bf16.mxu0 0
        %1104 = vmatpush1.bf16.msra.mxu0 0
        %1105 = vmatprep.subr.bf16.mxu0 0
        %1106 = vmatpush1.bf16.msra.mxu0 0
        %1107 = vmatprep.subr.bf16.mxu0 0
        %1108 = vmatpush1.bf16.msra.mxu0 0
        %1109 = vmatprep.subr.bf16.mxu0 0
        %1110 = vmatpush1.bf16.msra.mxu0 0
        %1111 = vmatprep.subr.bf16.mxu0 0
        %1112 = vmatpush1.bf16.msra.mxu0 0
        %1113 = vmatprep.subr.bf16.mxu0 0
        %1114 = vmatpush1.bf16.msra.mxu0 0
        %1115 = vmatprep.subr.bf16.mxu0 0
        %1116 = vmatpush1.bf16.msra.mxu0 0
        %1117 = vmatprep.subr.bf16.mxu0 0
        %1118 = vmatpush1.bf16.msra.mxu0 0
        %1119 = vmatprep.subr.bf16.mxu0 0
        %1120 = vmatpush1.bf16.msra.mxu0 0
        %1121 = vmatprep.subr.bf16.mxu0 0
        %1122 = vmatpush1.bf16.msra.mxu0 0
        %1123 = vmatprep.subr.bf16.mxu0 0
        %1124 = vmatpush1.bf16.msra.mxu0 0
        %1125 = vmatprep.mubr.bf16.mxu0 0
        %1126 = vmatmul.mubr.bf16.gmra.mrb[0].mxu0 %v1082
        %v1127 = vpop.f32.mrb[0].mxu0
        %v1128 = vadd.f32 0.0, %v1127
        %v1129 = vpop.f32.mrb[0].mxu0
        %v1130 = vpop.f32.mrb[0].mxu0
        %v1131 = vadd.f32 0.0, %v1130
        %v1132 = vpop.f32.mrb[0].mxu0
        %1133 = vmatprep.mubr.bf16.mxu0 0
        %1134 = vmatmul.mubr.bf16.gmra.mrb[0].mxu0 %v1085
        %v1135 = vpop.f32.mrb[0].mxu0
        %v1136 = vadd.f32 0.0, %v1135
        %v1137 = vpop.f32.mrb[0].mxu0
        %v1138 = vpop.f32.mrb[0].mxu0
        %v1139 = vadd.f32 0.0, %v1138
        %v1140 = vpop.f32.mrb[0].mxu0
        %1141 = vmatprep.mubr.bf16.mxu0 0
        %1142 = vmatmul.mubr.bf16.gmra.mrb[0].mxu0 %v1088
        %v1143 = vpop.f32.mrb[0].mxu0
        %v1144 = vadd.f32 0.0, %v1143
        %v1145 = vpop.f32.mrb[0].mxu0
        %v1146 = vpop.f32.mrb[0].mxu0
        %v1147 = vadd.f32 0.0, %v1146
        %v1148 = vpop.f32.mrb[0].mxu0
        %1149 = vmatprep.mubr.bf16.mxu0 0
        %1150 = vmatmul.mubr.bf16.gmra.mrb[0].mxu0 %v1091
        %v1151 = vpop.f32.mrb[0].mxu0
        %v1152 = vadd.f32 0.0, %v1151
        %v1153 = vpop.f32.mrb[0].mxu0
        %v1154 = vpop.f32.mrb[0].mxu0
        %v1155 = vadd.f32 0.0, %v1154
        %v1156 = vpop.f32.mrb[0].mxu0
        %1157 = vdwg.mxu0
        %v1164 = vunpack.c.l.b16 %v931
        %v1165 = vunpack.c.l.b16 %v932
        %v1166 = vunpack.c.l.b16 %v933
        %v1167 = vunpack.c.l.b16 %v934
        %v1168 = vunpack.c.l.b16 %v935
        %v1169 = vunpack.c.l.b16 %v936
        %v1170 = vpack.c.b16 %v1165, %v1164
        %v1171 = vpack.c.b16 %v1167, %v1166
        %v1172 = vpack.c.b16 %v1169, %v1168
        %v1177 = vsel %vm1080, %v927, 0
        %v1180 = vsel %vm1080, %v928, 0
        %v1183 = vsel %vm1080, %v929, 0
        %v1186 = vsel %vm1080, %v930, 0
        %1188 = vmatprep.subr.bf16.mxu0 0
        %1189 = vmatpush1.bf16.msra.mxu0 %v1170
        %1190 = vmatprep.subr.bf16.mxu0 0
        %1191 = vmatpush1.bf16.msra.mxu0 %v1171
        %1192 = vmatprep.subr.bf16.mxu0 0
        %1193 = vmatpush1.bf16.msra.mxu0 %v1172
        %1194 = vmatprep.subr.bf16.mxu0 0
        %1195 = vmatpush1.bf16.msra.mxu0 0
        %1196 = vmatprep.subr.bf16.mxu0 0
        %1197 = vmatpush1.bf16.msra.mxu0 0
        %1198 = vmatprep.subr.bf16.mxu0 0
        %1199 = vmatpush1.bf16.msra.mxu0 0
        %1200 = vmatprep.subr.bf16.mxu0 0
        %1201 = vmatpush1.bf16.msra.mxu0 0
        %1202 = vmatprep.subr.bf16.mxu0 0
        %1203 = vmatpush1.bf16.msra.mxu0 0
        %1204 = vmatprep.subr.bf16.mxu0 0
        %1205 = vmatpush1.bf16.msra.mxu0 0
        %1206 = vmatprep.subr.bf16.mxu0 0
        %1207 = vmatpush1.bf16.msra.mxu0 0
        %1208 = vmatprep.subr.bf16.mxu0 0
        %1209 = vmatpush1.bf16.msra.mxu0 0
        %1210 = vmatprep.subr.bf16.mxu0 0
        %1211 = vmatpush1.bf16.msra.mxu0 0
        %1212 = vmatprep.subr.bf16.mxu0 0
        %1213 = vmatpush1.bf16.msra.mxu0 0
        %1214 = vmatprep.subr.bf16.mxu0 0
        %1215 = vmatpush1.bf16.msra.mxu0 0
        %1216 = vmatprep.subr.bf16.mxu0 0
        %1217 = vmatpush1.bf16.msra.mxu0 0
        %1218 = vmatprep.subr.bf16.mxu0 0
        %1219 = vmatpush1.bf16.msra.mxu0 0
        %1220 = vmatprep.mubr.bf16.mxu0 0
        %1221 = vmatmul.mubr.bf16.gmra.mrb[0].mxu0 %v1177
        %v1222 = vpop.f32.mrb[0].mxu0
        %v1223 = vadd.f32 %v1128, %v1222
        %v1224 = vpop.f32.mrb[0].mxu0
        %v1225 = vpop.f32.mrb[0].mxu0
        %v1226 = vadd.f32 %v1131, %v1225
        %v1227 = vpop.f32.mrb[0].mxu0
        %1228 = vmatprep.mubr.bf16.mxu0 0
        %1229 = vmatmul.mubr.bf16.gmra.mrb[0].mxu0 %v1180
        %v1230 = vpop.f32.mrb[0].mxu0
        %v1231 = vadd.f32 %v1136, %v1230
        %v1232 = vpop.f32.mrb[0].mxu0
        %v1233 = vpop.f32.mrb[0].mxu0
        %v1234 = vadd.f32 %v1139, %v1233
        %v1235 = vpop.f32.mrb[0].mxu0
        %1236 = vmatprep.mubr.bf16.mxu0 0
        %1237 = vmatmul.mubr.bf16.gmra.mrb[0].mxu0 %v1183
        %v1238 = vpop.f32.mrb[0].mxu0
        %v1239 = vadd.f32 %v1144, %v1238
        %v1240 = vpop.f32.mrb[0].mxu0
        %v1241 = vpop.f32.mrb[0].mxu0
        %v1242 = vadd.f32 %v1147, %v1241
        %v1243 = vpop.f32.mrb[0].mxu0
        %1244 = vmatprep.mubr.bf16.mxu0 0
        %1245 = vmatmul.mubr.bf16.gmra.mrb[0].mxu0 %v1186
        %v1246 = vpop.f32.mrb[0].mxu0
        %v1247 = vadd.f32 %v1152, %v1246
        %v1248 = vpop.f32.mrb[0].mxu0
        %v1249 = vpop.f32.mrb[0].mxu0
        %v1250 = vadd.f32 %v1155, %v1249
        %v1251 = vpop.f32.mrb[0].mxu0
        %1252 = vdwg.mxu0
        %s1253 = scalar_lea.vmem [#allocation2], 128
        %v1254 = vld [vmem:[%s1253] sm:$0xff]
        %v1255 = vld [vmem:[%s1253 + $0x8] sm:$0xff]
        %v1256 = vld [vmem:[%s1253 + $0x10] sm:$0xff]
        %v1257 = vld [vmem:[%s1253 + $0x18] sm:$0xff]
        %v1258 = vld [vmem:[%s1253 + $0x20] sm:$0xff]
        %v1259 = vld [vmem:[%s1253 + $0x28] sm:$0xff]
        %v1260 = vld [vmem:[%s1253 + $0x30] sm:$0xff]
        %v1261 = vld [vmem:[%s1253 + $0x38] sm:$0xff]
        %v1270 = vunpack.c.l.b16 %v1254
        %v1271 = vunpack.c.h.b16 %v1254
        %v1272 = vunpack.c.l.b16 %v1255
        %v1273 = vunpack.c.h.b16 %v1255
        %v1274 = vunpack.c.l.b16 %v1256
        %v1275 = vunpack.c.h.b16 %v1256
        %v1276 = vunpack.c.l.b16 %v1257
        %v1277 = vunpack.c.h.b16 %v1257
        %v1278 = vunpack.c.l.b16 %v1258
        %v1279 = vunpack.c.h.b16 %v1258
        %v1280 = vunpack.c.l.b16 %v1259
        %v1281 = vunpack.c.h.b16 %v1259
        %v1282 = vunpack.c.l.b16 %v1260
        %v1283 = vunpack.c.h.b16 %v1260
        %v1284 = vunpack.c.l.b16 %v1261
        %v1285 = vunpack.c.h.b16 %v1261
        %v1286 = vpack.c.b16 %v1272, %v1270
        %v1287 = vpack.c.b16 %v1273, %v1271
        %v1288 = vpack.c.b16 %v1276, %v1274
        %v1289 = vpack.c.b16 %v1277, %v1275
        %v1290 = vpack.c.b16 %v1280, %v1278
        %v1291 = vpack.c.b16 %v1281, %v1279
        %v1292 = vpack.c.b16 %v1284, %v1282
        %v1293 = vpack.c.b16 %v1285, %v1283
        %1302 = vmatprep.subr.bf16.mxu0 0
        %1303 = vmatpush1.bf16.msra.mxu0 %v798
        %1304 = vmatprep.subr.bf16.mxu0 0
        %1305 = vmatpush1.bf16.msra.mxu0 %v799
        %1306 = vmatprep.subr.bf16.mxu0 0
        %1307 = vmatpush1.bf16.msra.mxu0 %v800
        %1308 = vmatprep.subr.bf16.mxu0 0
        %1309 = vmatpush1.bf16.msra.mxu0 %v801
        %1310 = vmatprep.subr.bf16.mxu0 0
        %1311 = vmatpush1.bf16.msra.mxu0 %v802
        %1312 = vmatprep.subr.bf16.mxu0 0
        %1313 = vmatpush1.bf16.msra.mxu0 %v803
        %1314 = vmatprep.subr.bf16.mxu0 0
        %1315 = vmatpush1.bf16.msra.mxu0 %v804
        %1316 = vmatprep.subr.bf16.mxu0 0
        %1317 = vmatpush1.bf16.msra.mxu0 %v805
        %1318 = vmatprep.subr.bf16.mxu0 0
        %1319 = vmatpush1.bf16.msra.mxu0 %v806
        %1320 = vmatprep.subr.bf16.mxu0 0
        %1321 = vmatpush1.bf16.msra.mxu0 %v807
        %1322 = vmatprep.subr.bf16.mxu0 0
        %1323 = vmatpush1.bf16.msra.mxu0 %v808
        %1324 = vmatprep.subr.bf16.mxu0 0
        %1325 = vmatpush1.bf16.msra.mxu0 %v809
        %1326 = vmatprep.subr.bf16.mxu0 0
        %1327 = vmatpush1.bf16.msra.mxu0 %v810
        %1328 = vmatprep.subr.bf16.mxu0 0
        %1329 = vmatpush1.bf16.msra.mxu0 %v811
        %1330 = vmatprep.subr.bf16.mxu0 0
        %1331 = vmatpush1.bf16.msra.mxu0 %v812
        %1332 = vmatprep.subr.bf16.mxu0 0
        %1333 = vmatpush1.bf16.msra.mxu0 %v813
        %1334 = vmatprep.mubr.bf16.mxu0 %v1287
        %1335 = vmatmul.mubr.bf16.gmra.mrb[0].mxu0 %v1286
        %v1336 = vpop.f32.mrb[0].mxu0
        %v1337 = vadd.f32 0.0, %v1336
        %v1338 = vpop.f32.mrb[0].mxu0
        %v1339 = vpop.f32.mrb[0].mxu0
        %v1340 = vadd.f32 0.0, %v1339
        %v1341 = vpop.f32.mrb[0].mxu0
        %1342 = vmatprep.mubr.bf16.mxu0 %v1289
        %1343 = vmatmul.mubr.bf16.gmra.mrb[0].mxu0 %v1288
        %v1344 = vpop.f32.mrb[0].mxu0
        %v1345 = vadd.f32 0.0, %v1344
        %v1346 = vpop.f32.mrb[0].mxu0
        %v1347 = vpop.f32.mrb[0].mxu0
        %v1348 = vadd.f32 0.0, %v1347
        %v1349 = vpop.f32.mrb[0].mxu0
        %1350 = vmatprep.mubr.bf16.mxu0 %v1291
        %1351 = vmatmul.mubr.bf16.gmra.mrb[0].mxu0 %v1290
        %v1352 = vpop.f32.mrb[0].mxu0
        %v1353 = vadd.f32 0.0, %v1352
        %v1354 = vpop.f32.mrb[0].mxu0
        %v1355 = vpop.f32.mrb[0].mxu0
        %v1356 = vadd.f32 0.0, %v1355
        %v1357 = vpop.f32.mrb[0].mxu0
        %1358 = vmatprep.mubr.bf16.mxu0 %v1293
        %1359 = vmatmul.mubr.bf16.gmra.mrb[0].mxu0 %v1292
        %v1360 = vpop.f32.mrb[0].mxu0
        %v1361 = vadd.f32 0.0, %v1360
        %v1362 = vpop.f32.mrb[0].mxu0
        %v1363 = vpop.f32.mrb[0].mxu0
        %v1364 = vadd.f32 0.0, %v1363
        %v1365 = vpop.f32.mrb[0].mxu0
        %1366 = vdwg.mxu0
        %v1367 = vpack.c.bf16 %v1340, %v1337
        %v1368 = vpack.c.bf16 %v1348, %v1345
        %v1369 = vpack.c.bf16 %v1356, %v1353
        %v1370 = vpack.c.bf16 %v1364, %v1361
        %s1371 = scalar_lea.vmem [#allocation5], 48
        %v1372 = vld [vmem:[%s1371] sm:$0xf]
        %v1373 = vld [vmem:[%s1371 + $0x4] sm:$0xf]
        %v1374 = vld [vmem:[%s1371 + $0x8] sm:$0xf]
        %v1375 = vld [vmem:[%s1371 + $0xc] sm:$0xf]
        %v1376 = vld [vmem:[%s1371 + $0x10] sm:$0xf]
        %v1377 = vld [vmem:[%s1371 + $0x14] sm:$0xf]
        %v1384 = vunpack.c.l.b16 %v1372
        %v1385 = vunpack.c.l.b16 %v1373
        %v1386 = vunpack.c.l.b16 %v1374
        %v1387 = vunpack.c.l.b16 %v1375
        %v1388 = vunpack.c.l.b16 %v1376
        %v1389 = vunpack.c.l.b16 %v1377
        %v1390 = vpack.c.b16 %v1385, %v1384
        %v1391 = vpack.c.b16 %v1387, %v1386
        %v1392 = vpack.c.b16 %v1389, %v1388
        %v1397 = vsel %vm1080, %v1367, 0
        %v1400 = vsel %vm1080, %v1368, 0
        %v1403 = vsel %vm1080, %v1369, 0
        %v1406 = vsel %vm1080, %v1370, 0
        %1408 = vmatprep.subr.bf16.mxu0 0
        %1409 = vmatpush1.bf16.msra.mxu0 %v1390
        %1410 = vmatprep.subr.bf16.mxu0 0
        %1411 = vmatpush1.bf16.msra.mxu0 %v1391
        %1412 = vmatprep.subr.bf16.mxu0 0
        %1413 = vmatpush1.bf16.msra.mxu0 %v1392
        %1414 = vmatprep.subr.bf16.mxu0 0
        %1415 = vmatpush1.bf16.msra.mxu0 0
        %1416 = vmatprep.subr.bf16.mxu0 0
        %1417 = vmatpush1.bf16.msra.mxu0 0
        %1418 = vmatprep.subr.bf16.mxu0 0
        %1419 = vmatpush1.bf16.msra.mxu0 0
        %1420 = vmatprep.subr.bf16.mxu0 0
        %1421 = vmatpush1.bf16.msra.mxu0 0
        %1422 = vmatprep.subr.bf16.mxu0 0
        %1423 = vmatpush1.bf16.msra.mxu0 0
        %1424 = vmatprep.subr.bf16.mxu0 0
        %1425 = vmatpush1.bf16.msra.mxu0 0
        %1426 = vmatprep.subr.bf16.mxu0 0
        %1427 = vmatpush1.bf16.msra.mxu0 0
        %1428 = vmatprep.subr.bf16.mxu0 0
        %1429 = vmatpush1.bf16.msra.mxu0 0
        %1430 = vmatprep.subr.bf16.mxu0 0
        %1431 = vmatpush1.bf16.msra.mxu0 0
        %1432 = vmatprep.subr.bf16.mxu0 0
        %1433 = vmatpush1.bf16.msra.mxu0 0
        %1434 = vmatprep.subr.bf16.mxu0 0
        %1435 = vmatpush1.bf16.msra.mxu0 0
        %1436 = vmatprep.subr.bf16.mxu0 0
        %1437 = vmatpush1.bf16.msra.mxu0 0
        %1438 = vmatprep.subr.bf16.mxu0 0
        %1439 = vmatpush1.bf16.msra.mxu0 0
        %1440 = vmatprep.mubr.bf16.mxu0 0
        %1441 = vmatmul.mubr.bf16.gmra.mrb[0].mxu0 %v1397
        %v1442 = vpop.f32.mrb[0].mxu0
        %v1443 = vadd.f32 0.0, %v1442
        %v1444 = vpop.f32.mrb[0].mxu0
        %v1445 = vpop.f32.mrb[0].mxu0
        %v1446 = vadd.f32 0.0, %v1445
        %v1447 = vpop.f32.mrb[0].mxu0
        %1448 = vmatprep.mubr.bf16.mxu0 0
        %1449 = vmatmul.mubr.bf16.gmra.mrb[0].mxu0 %v1400
        %v1450 = vpop.f32.mrb[0].mxu0
        %v1451 = vadd.f32 0.0, %v1450
        %v1452 = vpop.f32.mrb[0].mxu0
        %v1453 = vpop.f32.mrb[0].mxu0
        %v1454 = vadd.f32 0.0, %v1453
        %v1455 = vpop.f32.mrb[0].mxu0
        %1456 = vmatprep.mubr.bf16.mxu0 0
        %1457 = vmatmul.mubr.bf16.gmra.mrb[0].mxu0 %v1403
        %v1458 = vpop.f32.mrb[0].mxu0
        %v1459 = vadd.f32 0.0, %v1458
        %v1460 = vpop.f32.mrb[0].mxu0
        %v1461 = vpop.f32.mrb[0].mxu0
        %v1462 = vadd.f32 0.0, %v1461
        %v1463 = vpop.f32.mrb[0].mxu0
        %1464 = vmatprep.mubr.bf16.mxu0 0
        %1465 = vmatmul.mubr.bf16.gmra.mrb[0].mxu0 %v1406
        %v1466 = vpop.f32.mrb[0].mxu0
        %v1467 = vadd.f32 0.0, %v1466
        %v1468 = vpop.f32.mrb[0].mxu0
        %v1469 = vpop.f32.mrb[0].mxu0
        %v1470 = vadd.f32 0.0, %v1469
        %v1471 = vpop.f32.mrb[0].mxu0
        %1472 = vdwg.mxu0
        %v1473 = vadd.f32 %v1223, %v1443
        %v1474 = vadd.f32 %v1226, %v1446
        %v1475 = vadd.f32 %v1231, %v1451
        %v1476 = vadd.f32 %v1234, %v1454
        %v1477 = vadd.f32 %v1239, %v1459
        %v1478 = vadd.f32 %v1242, %v1462
        %v1479 = vadd.f32 %v1247, %v1467
        %v1480 = vadd.f32 %v1250, %v1470
        %s1481 = scalar_lea.vmem [#allocation2], 192
        %v1482 = vld [vmem:[%s1481] sm:$0xff]
        %v1483 = vld [vmem:[%s1481 + $0x8] sm:$0xff]
        %v1484 = vld [vmem:[%s1481 + $0x10] sm:$0xff]
        %v1485 = vld [vmem:[%s1481 + $0x18] sm:$0xff]
        %v1486 = vld [vmem:[%s1481 + $0x20] sm:$0xff]
        %v1487 = vld [vmem:[%s1481 + $0x28] sm:$0xff]
        %v1488 = vld [vmem:[%s1481 + $0x30] sm:$0xff]
        %v1489 = vld [vmem:[%s1481 + $0x38] sm:$0xff]
        %v1498 = vunpack.c.l.b16 %v1482
        %v1499 = vunpack.c.h.b16 %v1482
        %v1500 = vunpack.c.l.b16 %v1483
        %v1501 = vunpack.c.h.b16 %v1483
        %v1502 = vunpack.c.l.b16 %v1484
        %v1503 = vunpack.c.h.b16 %v1484
        %v1504 = vunpack.c.l.b16 %v1485
        %v1505 = vunpack.c.h.b16 %v1485
        %v1506 = vunpack.c.l.b16 %v1486
        %v1507 = vunpack.c.h.b16 %v1486
        %v1508 = vunpack.c.l.b16 %v1487
        %v1509 = vunpack.c.h.b16 %v1487
        %v1510 = vunpack.c.l.b16 %v1488
        %v1511 = vunpack.c.h.b16 %v1488
        %v1512 = vunpack.c.l.b16 %v1489
        %v1513 = vunpack.c.h.b16 %v1489
        %v1514 = vpack.c.b16 %v1500, %v1498
        %v1515 = vpack.c.b16 %v1501, %v1499
        %v1516 = vpack.c.b16 %v1504, %v1502
        %v1517 = vpack.c.b16 %v1505, %v1503
        %v1518 = vpack.c.b16 %v1508, %v1506
        %v1519 = vpack.c.b16 %v1509, %v1507
        %v1520 = vpack.c.b16 %v1512, %v1510
        %v1521 = vpack.c.b16 %v1513, %v1511
        %1530 = vmatprep.subr.bf16.mxu0 0
        %1531 = vmatpush1.bf16.msra.mxu0 %v798
        %1532 = vmatprep.subr.bf16.mxu0 0
        %1533 = vmatpush1.bf16.msra.mxu0 %v799
        %1534 = vmatprep.subr.bf16.mxu0 0
        %1535 = vmatpush1.bf16.msra.mxu0 %v800
        %1536 = vmatprep.subr.bf16.mxu0 0
        %1537 = vmatpush1.bf16.msra.mxu0 %v801
        %1538 = vmatprep.subr.bf16.mxu0 0
        %1539 = vmatpush1.bf16.msra.mxu0 %v802
        %1540 = vmatprep.subr.bf16.mxu0 0
        %1541 = vmatpush1.bf16.msra.mxu0 %v803
        %1542 = vmatprep.subr.bf16.mxu0 0
        %1543 = vmatpush1.bf16.msra.mxu0 %v804
        %1544 = vmatprep.subr.bf16.mxu0 0
        %1545 = vmatpush1.bf16.msra.mxu0 %v805
        %1546 = vmatprep.subr.bf16.mxu0 0
        %1547 = vmatpush1.bf16.msra.mxu0 %v806
        %1548 = vmatprep.subr.bf16.mxu0 0
        %1549 = vmatpush1.bf16.msra.mxu0 %v807
        %1550 = vmatprep.subr.bf16.mxu0 0
        %1551 = vmatpush1.bf16.msra.mxu0 %v808
        %1552 = vmatprep.subr.bf16.mxu0 0
        %1553 = vmatpush1.bf16.msra.mxu0 %v809
        %1554 = vmatprep.subr.bf16.mxu0 0
        %1555 = vmatpush1.bf16.msra.mxu0 %v810
        %1556 = vmatprep.subr.bf16.mxu0 0
        %1557 = vmatpush1.bf16.msra.mxu0 %v811
        %1558 = vmatprep.subr.bf16.mxu0 0
        %1559 = vmatpush1.bf16.msra.mxu0 %v812
        %1560 = vmatprep.subr.bf16.mxu0 0
        %1561 = vmatpush1.bf16.msra.mxu0 %v813
        %1562 = vmatprep.mubr.bf16.mxu0 %v1515
        %1563 = vmatmul.mubr.bf16.gmra.mrb[0].mxu0 %v1514
        %v1564 = vpop.f32.mrb[0].mxu0
        %v1565 = vadd.f32 0.0, %v1564
        %v1566 = vpop.f32.mrb[0].mxu0
        %v1567 = vpop.f32.mrb[0].mxu0
        %v1568 = vadd.f32 0.0, %v1567
        %v1569 = vpop.f32.mrb[0].mxu0
        %1570 = vmatprep.mubr.bf16.mxu0 %v1517
        %1571 = vmatmul.mubr.bf16.gmra.mrb[0].mxu0 %v1516
        %v1572 = vpop.f32.mrb[0].mxu0
        %v1573 = vadd.f32 0.0, %v1572
        %v1574 = vpop.f32.mrb[0].mxu0
        %v1575 = vpop.f32.mrb[0].mxu0
        %v1576 = vadd.f32 0.0, %v1575
        %v1577 = vpop.f32.mrb[0].mxu0
        %1578 = vmatprep.mubr.bf16.mxu0 %v1519
        %1579 = vmatmul.mubr.bf16.gmra.mrb[0].mxu0 %v1518
        %v1580 = vpop.f32.mrb[0].mxu0
        %v1581 = vadd.f32 0.0, %v1580
        %v1582 = vpop.f32.mrb[0].mxu0
        %v1583 = vpop.f32.mrb[0].mxu0
        %v1584 = vadd.f32 0.0, %v1583
        %v1585 = vpop.f32.mrb[0].mxu0
        %1586 = vmatprep.mubr.bf16.mxu0 %v1521
        %1587 = vmatmul.mubr.bf16.gmra.mrb[0].mxu0 %v1520
        %v1588 = vpop.f32.mrb[0].mxu0
        %v1589 = vadd.f32 0.0, %v1588
        %v1590 = vpop.f32.mrb[0].mxu0
        %v1591 = vpop.f32.mrb[0].mxu0
        %v1592 = vadd.f32 0.0, %v1591
        %v1593 = vpop.f32.mrb[0].mxu0
        %1594 = vdwg.mxu0
        %v1595 = vpack.c.bf16 %v1568, %v1565
        %v1596 = vpack.c.bf16 %v1576, %v1573
        %v1597 = vpack.c.bf16 %v1584, %v1581
        %v1598 = vpack.c.bf16 %v1592, %v1589
        %s1599 = scalar_lea.vmem [#allocation5], 72
        %v1600 = vld [vmem:[%s1599] sm:$0xf]
        %v1601 = vld [vmem:[%s1599 + $0x4] sm:$0xf]
        %v1602 = vld [vmem:[%s1599 + $0x8] sm:$0xf]
        %v1603 = vld [vmem:[%s1599 + $0xc] sm:$0xf]
        %v1604 = vld [vmem:[%s1599 + $0x10] sm:$0xf]
        %v1605 = vld [vmem:[%s1599 + $0x14] sm:$0xf]
        %v1612 = vunpack.c.l.b16 %v1600
        %v1613 = vunpack.c.l.b16 %v1601
        %v1614 = vunpack.c.l.b16 %v1602
        %v1615 = vunpack.c.l.b16 %v1603
        %v1616 = vunpack.c.l.b16 %v1604
        %v1617 = vunpack.c.l.b16 %v1605
        %v1618 = vpack.c.b16 %v1613, %v1612
        %v1619 = vpack.c.b16 %v1615, %v1614
        %v1620 = vpack.c.b16 %v1617, %v1616
        %v1625 = vsel %vm1080, %v1595, 0
        %v1628 = vsel %vm1080, %v1596, 0
        %v1631 = vsel %vm1080, %v1597, 0
        %v1634 = vsel %vm1080, %v1598, 0
        %1636 = vmatprep.subr.bf16.mxu0 0
        %1637 = vmatpush1.bf16.msra.mxu0 %v1618
        %1638 = vmatprep.subr.bf16.mxu0 0
        %1639 = vmatpush1.bf16.msra.mxu0 %v1619
        %1640 = vmatprep.subr.bf16.mxu0 0
        %1641 = vmatpush1.bf16.msra.mxu0 %v1620
        %1642 = vmatprep.subr.bf16.mxu0 0
        %1643 = vmatpush1.bf16.msra.mxu0 0
        %1644 = vmatprep.subr.bf16.mxu0 0
        %1645 = vmatpush1.bf16.msra.mxu0 0
        %1646 = vmatprep.subr.bf16.mxu0 0
        %1647 = vmatpush1.bf16.msra.mxu0 0
        %1648 = vmatprep.subr.bf16.mxu0 0
        %1649 = vmatpush1.bf16.msra.mxu0 0
        %1650 = vmatprep.subr.bf16.mxu0 0
        %1651 = vmatpush1.bf16.msra.mxu0 0
        %1652 = vmatprep.subr.bf16.mxu0 0
        %1653 = vmatpush1.bf16.msra.mxu0 0
        %1654 = vmatprep.subr.bf16.mxu0 0
        %1655 = vmatpush1.bf16.msra.mxu0 0
        %1656 = vmatprep.subr.bf16.mxu0 0
        %1657 = vmatpush1.bf16.msra.mxu0 0
        %1658 = vmatprep.subr.bf16.mxu0 0
        %1659 = vmatpush1.bf16.msra.mxu0 0
        %1660 = vmatprep.subr.bf16.mxu0 0
        %1661 = vmatpush1.bf16.msra.mxu0 0
        %1662 = vmatprep.subr.bf16.mxu0 0
        %1663 = vmatpush1.bf16.msra.mxu0 0
        %1664 = vmatprep.subr.bf16.mxu0 0
        %1665 = vmatpush1.bf16.msra.mxu0 0
        %1666 = vmatprep.subr.bf16.mxu0 0
        %1667 = vmatpush1.bf16.msra.mxu0 0
        %1668 = vmatprep.mubr.bf16.mxu0 0
        %1669 = vmatmul.mubr.bf16.gmra.mrb[0].mxu0 %v1625
        %v1670 = vpop.f32.mrb[0].mxu0
        %v1671 = vadd.f32 0.0, %v1670
        %v1672 = vpop.f32.mrb[0].mxu0
        %v1673 = vpop.f32.mrb[0].mxu0
        %v1674 = vadd.f32 0.0, %v1673
        %v1675 = vpop.f32.mrb[0].mxu0
        %1676 = vmatprep.mubr.bf16.mxu0 0
        %1677 = vmatmul.mubr.bf16.gmra.mrb[0].mxu0 %v1628
        %v1678 = vpop.f32.mrb[0].mxu0
        %v1679 = vadd.f32 0.0, %v1678
        %v1680 = vpop.f32.mrb[0].mxu0
        %v1681 = vpop.f32.mrb[0].mxu0
        %v1682 = vadd.f32 0.0, %v1681
        %v1683 = vpop.f32.mrb[0].mxu0
        %1684 = vmatprep.mubr.bf16.mxu0 0
        %1685 = vmatmul.mubr.bf16.gmra.mrb[0].mxu0 %v1631
        %v1686 = vpop.f32.mrb[0].mxu0
        %v1687 = vadd.f32 0.0, %v1686
        %v1688 = vpop.f32.mrb[0].mxu0
        %v1689 = vpop.f32.mrb[0].mxu0
        %v1690 = vadd.f32 0.0, %v1689
        %v1691 = vpop.f32.mrb[0].mxu0
        %1692 = vmatprep.mubr.bf16.mxu0 0
        %1693 = vmatmul.mubr.bf16.gmra.mrb[0].mxu0 %v1634
        %v1694 = vpop.f32.mrb[0].mxu0
        %v1695 = vadd.f32 0.0, %v1694
        %v1696 = vpop.f32.mrb[0].mxu0
        %v1697 = vpop.f32.mrb[0].mxu0
        %v1698 = vadd.f32 0.0, %v1697
        %v1699 = vpop.f32.mrb[0].mxu0
        %1700 = vdwg.mxu0
        %v1701 = vadd.f32 %v1473, %v1671
        %v1702 = vadd.f32 %v1474, %v1674
        %v1703 = vadd.f32 %v1475, %v1679
        %v1704 = vadd.f32 %v1476, %v1682
        %v1705 = vadd.f32 %v1477, %v1687
        %v1706 = vadd.f32 %v1478, %v1690
        %v1707 = vadd.f32 %v1479, %v1695
        %v1708 = vadd.f32 %v1480, %v1698
        %s1709 = scalar_lea.vmem [#allocation2], 256
        %v1710 = vld [vmem:[%s1709] sm:$0xff]
        %v1711 = vld [vmem:[%s1709 + $0x8] sm:$0xff]
        %v1712 = vld [vmem:[%s1709 + $0x10] sm:$0xff]
        %v1713 = vld [vmem:[%s1709 + $0x18] sm:$0xff]
        %v1714 = vld [vmem:[%s1709 + $0x20] sm:$0xff]
        %v1715 = vld [vmem:[%s1709 + $0x28] sm:$0xff]
        %v1716 = vld [vmem:[%s1709 + $0x30] sm:$0xff]
        %v1717 = vld [vmem:[%s1709 + $0x38] sm:$0xff]
        %v1726 = vunpack.c.l.b16 %v1710
        %v1727 = vunpack.c.h.b16 %v1710
        %v1728 = vunpack.c.l.b16 %v1711
        %v1729 = vunpack.c.h.b16 %v1711
        %v1730 = vunpack.c.l.b16 %v1712
        %v1731 = vunpack.c.h.b16 %v1712
        %v1732 = vunpack.c.l.b16 %v1713
        %v1733 = vunpack.c.h.b16 %v1713
        %v1734 = vunpack.c.l.b16 %v1714
        %v1735 = vunpack.c.h.b16 %v1714
        %v1736 = vunpack.c.l.b16 %v1715
        %v1737 = vunpack.c.h.b16 %v1715
        %v1738 = vunpack.c.l.b16 %v1716
        %v1739 = vunpack.c.h.b16 %v1716
        %v1740 = vunpack.c.l.b16 %v1717
        %v1741 = vunpack.c.h.b16 %v1717
        %v1742 = vpack.c.b16 %v1728, %v1726
        %v1743 = vpack.c.b16 %v1729, %v1727
        %v1744 = vpack.c.b16 %v1732, %v1730
        %v1745 = vpack.c.b16 %v1733, %v1731
        %v1746 = vpack.c.b16 %v1736, %v1734
        %v1747 = vpack.c.b16 %v1737, %v1735
        %v1748 = vpack.c.b16 %v1740, %v1738
        %v1749 = vpack.c.b16 %v1741, %v1739
        %1758 = vmatprep.subr.bf16.mxu0 0
        %1759 = vmatpush1.bf16.msra.mxu0 %v798
        %1760 = vmatprep.subr.bf16.mxu0 0
        %1761 = vmatpush1.bf16.msra.mxu0 %v799
        %1762 = vmatprep.subr.bf16.mxu0 0
        %1763 = vmatpush1.bf16.msra.mxu0 %v800
        %1764 = vmatprep.subr.bf16.mxu0 0
        %1765 = vmatpush1.bf16.msra.mxu0 %v801
        %1766 = vmatprep.subr.bf16.mxu0 0
        %1767 = vmatpush1.bf16.msra.mxu0 %v802
        %1768 = vmatprep.subr.bf16.mxu0 0
        %1769 = vmatpush1.bf16.msra.mxu0 %v803
        %1770 = vmatprep.subr.bf16.mxu0 0
        %1771 = vmatpush1.bf16.msra.mxu0 %v804
        %1772 = vmatprep.subr.bf16.mxu0 0
        %1773 = vmatpush1.bf16.msra.mxu0 %v805
        %1774 = vmatprep.subr.bf16.mxu0 0
        %1775 = vmatpush1.bf16.msra.mxu0 %v806
        %1776 = vmatprep.subr.bf16.mxu0 0
        %1777 = vmatpush1.bf16.msra.mxu0 %v807
        %1778 = vmatprep.subr.bf16.mxu0 0
        %1779 = vmatpush1.bf16.msra.mxu0 %v808
        %1780 = vmatprep.subr.bf16.mxu0 0
        %1781 = vmatpush1.bf16.msra.mxu0 %v809
        %1782 = vmatprep.subr.bf16.mxu0 0
        %1783 = vmatpush1.bf16.msra.mxu0 %v810
        %1784 = vmatprep.subr.bf16.mxu0 0
        %1785 = vmatpush1.bf16.msra.mxu0 %v811
        %1786 = vmatprep.subr.bf16.mxu0 0
        %1787 = vmatpush1.bf16.msra.mxu0 %v812
        %1788 = vmatprep.subr.bf16.mxu0 0
        %1789 = vmatpush1.bf16.msra.mxu0 %v813
        %1790 = vmatprep.mubr.bf16.mxu0 %v1743
        %1791 = vmatmul.mubr.bf16.gmra.mrb[0].mxu0 %v1742
        %v1792 = vpop.f32.mrb[0].mxu0
        %v1793 = vadd.f32 0.0, %v1792
        %v1794 = vpop.f32.mrb[0].mxu0
        %v1795 = vpop.f32.mrb[0].mxu0
        %v1796 = vadd.f32 0.0, %v1795
        %v1797 = vpop.f32.mrb[0].mxu0
        %1798 = vmatprep.mubr.bf16.mxu0 %v1745
        %1799 = vmatmul.mubr.bf16.gmra.mrb[0].mxu0 %v1744
        %v1800 = vpop.f32.mrb[0].mxu0
        %v1801 = vadd.f32 0.0, %v1800
        %v1802 = vpop.f32.mrb[0].mxu0
        %v1803 = vpop.f32.mrb[0].mxu0
        %v1804 = vadd.f32 0.0, %v1803
        %v1805 = vpop.f32.mrb[0].mxu0
        %1806 = vmatprep.mubr.bf16.mxu0 %v1747
        %1807 = vmatmul.mubr.bf16.gmra.mrb[0].mxu0 %v1746
        %v1808 = vpop.f32.mrb[0].mxu0
        %v1809 = vadd.f32 0.0, %v1808
        %v1810 = vpop.f32.mrb[0].mxu0
        %v1811 = vpop.f32.mrb[0].mxu0
        %v1812 = vadd.f32 0.0, %v1811
        %v1813 = vpop.f32.mrb[0].mxu0
        %1814 = vmatprep.mubr.bf16.mxu0 %v1749
        %1815 = vmatmul.mubr.bf16.gmra.mrb[0].mxu0 %v1748
        %v1816 = vpop.f32.mrb[0].mxu0
        %v1817 = vadd.f32 0.0, %v1816
        %v1818 = vpop.f32.mrb[0].mxu0
        %v1819 = vpop.f32.mrb[0].mxu0
        %v1820 = vadd.f32 0.0, %v1819
        %v1821 = vpop.f32.mrb[0].mxu0
        %1822 = vdwg.mxu0
        %v1823 = vpack.c.bf16 %v1796, %v1793
        %v1824 = vpack.c.bf16 %v1804, %v1801
        %v1825 = vpack.c.bf16 %v1812, %v1809
        %v1826 = vpack.c.bf16 %v1820, %v1817
        %s1827 = scalar_lea.vmem [#allocation5], 96
        %v1828 = vld [vmem:[%s1827] sm:$0xf]
        %v1829 = vld [vmem:[%s1827 + $0x4] sm:$0xf]
        %v1830 = vld [vmem:[%s1827 + $0x8] sm:$0xf]
        %v1831 = vld [vmem:[%s1827 + $0xc] sm:$0xf]
        %v1832 = vld [vmem:[%s1827 + $0x10] sm:$0xf]
        %v1833 = vld [vmem:[%s1827 + $0x14] sm:$0xf]
        %v1840 = vunpack.c.l.b16 %v1828
        %v1841 = vunpack.c.l.b16 %v1829
        %v1842 = vunpack.c.l.b16 %v1830
        %v1843 = vunpack.c.l.b16 %v1831
        %v1844 = vunpack.c.l.b16 %v1832
        %v1845 = vunpack.c.l.b16 %v1833
        %v1846 = vpack.c.b16 %v1841, %v1840
        %v1847 = vpack.c.b16 %v1843, %v1842
        %v1848 = vpack.c.b16 %v1845, %v1844
        %v1853 = vsel %vm1080, %v1823, 0
        %v1856 = vsel %vm1080, %v1824, 0
        %v1859 = vsel %vm1080, %v1825, 0
        %v1862 = vsel %vm1080, %v1826, 0
        %1864 = vmatprep.subr.bf16.mxu0 0
        %1865 = vmatpush1.bf16.msra.mxu0 %v1846
        %1866 = vmatprep.subr.bf16.mxu0 0
        %1867 = vmatpush1.bf16.msra.mxu0 %v1847
        %1868 = vmatprep.subr.bf16.mxu0 0
        %1869 = vmatpush1.bf16.msra.mxu0 %v1848
        %1870 = vmatprep.subr.bf16.mxu0 0
        %1871 = vmatpush1.bf16.msra.mxu0 0
        %1872 = vmatprep.subr.bf16.mxu0 0
        %1873 = vmatpush1.bf16.msra.mxu0 0
        %1874 = vmatprep.subr.bf16.mxu0 0
        %1875 = vmatpush1.bf16.msra.mxu0 0
        %1876 = vmatprep.subr.bf16.mxu0 0
        %1877 = vmatpush1.bf16.msra.mxu0 0
        %1878 = vmatprep.subr.bf16.mxu0 0
        %1879 = vmatpush1.bf16.msra.mxu0 0
        %1880 = vmatprep.subr.bf16.mxu0 0
        %1881 = vmatpush1.bf16.msra.mxu0 0
        %1882 = vmatprep.subr.bf16.mxu0 0
        %1883 = vmatpush1.bf16.msra.mxu0 0
        %1884 = vmatprep.subr.bf16.mxu0 0
        %1885 = vmatpush1.bf16.msra.mxu0 0
        %1886 = vmatprep.subr.bf16.mxu0 0
        %1887 = vmatpush1.bf16.msra.mxu0 0
        %1888 = vmatprep.subr.bf16.mxu0 0
        %1889 = vmatpush1.bf16.msra.mxu0 0
        %1890 = vmatprep.subr.bf16.mxu0 0
        %1891 = vmatpush1.bf16.msra.mxu0 0
        %1892 = vmatprep.subr.bf16.mxu0 0
        %1893 = vmatpush1.bf16.msra.mxu0 0
        %1894 = vmatprep.subr.bf16.mxu0 0
        %1895 = vmatpush1.bf16.msra.mxu0 0
        %1896 = vmatprep.mubr.bf16.mxu0 0
        %1897 = vmatmul.mubr.bf16.gmra.mrb[0].mxu0 %v1853
        %v1898 = vpop.f32.mrb[0].mxu0
        %v1899 = vadd.f32 0.0, %v1898
        %v1900 = vpop.f32.mrb[0].mxu0
        %v1901 = vpop.f32.mrb[0].mxu0
        %v1902 = vadd.f32 0.0, %v1901
        %v1903 = vpop.f32.mrb[0].mxu0
        %1904 = vmatprep.mubr.bf16.mxu0 0
        %1905 = vmatmul.mubr.bf16.gmra.mrb[0].mxu0 %v1856
        %v1906 = vpop.f32.mrb[0].mxu0
        %v1907 = vadd.f32 0.0, %v1906
        %v1908 = vpop.f32.mrb[0].mxu0
        %v1909 = vpop.f32.mrb[0].mxu0
        %v1910 = vadd.f32 0.0, %v1909
        %v1911 = vpop.f32.mrb[0].mxu0
        %1912 = vmatprep.mubr.bf16.mxu0 0
        %1913 = vmatmul.mubr.bf16.gmra.mrb[0].mxu0 %v1859
        %v1914 = vpop.f32.mrb[0].mxu0
        %v1915 = vadd.f32 0.0, %v1914
        %v1916 = vpop.f32.mrb[0].mxu0
        %v1917 = vpop.f32.mrb[0].mxu0
        %v1918 = vadd.f32 0.0, %v1917
        %v1919 = vpop.f32.mrb[0].mxu0
        %1920 = vmatprep.mubr.bf16.mxu0 0
        %1921 = vmatmul.mubr.bf16.gmra.mrb[0].mxu0 %v1862
        %v1922 = vpop.f32.mrb[0].mxu0
        %v1923 = vadd.f32 0.0, %v1922
        %v1924 = vpop.f32.mrb[0].mxu0
        %v1925 = vpop.f32.mrb[0].mxu0
        %v1926 = vadd.f32 0.0, %v1925
        %v1927 = vpop.f32.mrb[0].mxu0
        %1928 = vdwg.mxu0
        %v1929 = vadd.f32 %v1701, %v1899
        %v1930 = vadd.f32 %v1702, %v1902
        %v1931 = vadd.f32 %v1703, %v1907
        %v1932 = vadd.f32 %v1704, %v1910
        %v1933 = vadd.f32 %v1705, %v1915
        %v1934 = vadd.f32 %v1706, %v1918
        %v1935 = vadd.f32 %v1707, %v1923
        %v1936 = vadd.f32 %v1708, %v1926
        %s1937 = scalar_lea.vmem [#allocation2], 320
        %v1938 = vld [vmem:[%s1937] sm:$0xff]
        %v1939 = vld [vmem:[%s1937 + $0x8] sm:$0xff]
        %v1940 = vld [vmem:[%s1937 + $0x10] sm:$0xff]
        %v1941 = vld [vmem:[%s1937 + $0x18] sm:$0xff]
        %v1942 = vld [vmem:[%s1937 + $0x20] sm:$0xff]
        %v1943 = vld [vmem:[%s1937 + $0x28] sm:$0xff]
        %v1944 = vld [vmem:[%s1937 + $0x30] sm:$0xff]
        %v1945 = vld [vmem:[%s1937 + $0x38] sm:$0xff]
        %v1954 = vunpack.c.l.b16 %v1938
        %v1955 = vunpack.c.h.b16 %v1938
        %v1956 = vunpack.c.l.b16 %v1939
        %v1957 = vunpack.c.h.b16 %v1939
        %v1958 = vunpack.c.l.b16 %v1940
        %v1959 = vunpack.c.h.b16 %v1940
        %v1960 = vunpack.c.l.b16 %v1941
        %v1961 = vunpack.c.h.b16 %v1941
        %v1962 = vunpack.c.l.b16 %v1942
        %v1963 = vunpack.c.h.b16 %v1942
        %v1964 = vunpack.c.l.b16 %v1943
        %v1965 = vunpack.c.h.b16 %v1943
        %v1966 = vunpack.c.l.b16 %v1944
        %v1967 = vunpack.c.h.b16 %v1944
        %v1968 = vunpack.c.l.b16 %v1945
        %v1969 = vunpack.c.h.b16 %v1945
        %v1970 = vpack.c.b16 %v1956, %v1954
        %v1971 = vpack.c.b16 %v1957, %v1955
        %v1972 = vpack.c.b16 %v1960, %v1958
        %v1973 = vpack.c.b16 %v1961, %v1959
        %v1974 = vpack.c.b16 %v1964, %v1962
        %v1975 = vpack.c.b16 %v1965, %v1963
        %v1976 = vpack.c.b16 %v1968, %v1966
        %v1977 = vpack.c.b16 %v1969, %v1967
        %1986 = vmatprep.subr.bf16.mxu0 0
        %1987 = vmatpush1.bf16.msra.mxu0 %v798
        %1988 = vmatprep.subr.bf16.mxu0 0
        %1989 = vmatpush1.bf16.msra.mxu0 %v799
        %1990 = vmatprep.subr.bf16.mxu0 0
        %1991 = vmatpush1.bf16.msra.mxu0 %v800
        %1992 = vmatprep.subr.bf16.mxu0 0
        %1993 = vmatpush1.bf16.msra.mxu0 %v801
        %1994 = vmatprep.subr.bf16.mxu0 0
        %1995 = vmatpush1.bf16.msra.mxu0 %v802
        %1996 = vmatprep.subr.bf16.mxu0 0
        %1997 = vmatpush1.bf16.msra.mxu0 %v803
        %1998 = vmatprep.subr.bf16.mxu0 0
        %1999 = vmatpush1.bf16.msra.mxu0 %v804
        %2000 = vmatprep.subr.bf16.mxu0 0
        %2001 = vmatpush1.bf16.msra.mxu0 %v805
        %2002 = vmatprep.subr.bf16.mxu0 0
        %2003 = vmatpush1.bf16.msra.mxu0 %v806
        %2004 = vmatprep.subr.bf16.mxu0 0
        %2005 = vmatpush1.bf16.msra.mxu0 %v807
        %2006 = vmatprep.subr.bf16.mxu0 0
        %2007 = vmatpush1.bf16.msra.mxu0 %v808
        %2008 = vmatprep.subr.bf16.mxu0 0
        %2009 = vmatpush1.bf16.msra.mxu0 %v809
        %2010 = vmatprep.subr.bf16.mxu0 0
        %2011 = vmatpush1.bf16.msra.mxu0 %v810
        %2012 = vmatprep.subr.bf16.mxu0 0
        %2013 = vmatpush1.bf16.msra.mxu0 %v811
        %2014 = vmatprep.subr.bf16.mxu0 0
        %2015 = vmatpush1.bf16.msra.mxu0 %v812
        %2016 = vmatprep.subr.bf16.mxu0 0
        %2017 = vmatpush1.bf16.msra.mxu0 %v813
        %2018 = vmatprep.mubr.bf16.mxu0 %v1971
        %2019 = vmatmul.mubr.bf16.gmra.mrb[0].mxu0 %v1970
        %v2020 = vpop.f32.mrb[0].mxu0
        %v2021 = vadd.f32 0.0, %v2020
        %v2022 = vpop.f32.mrb[0].mxu0
        %v2023 = vpop.f32.mrb[0].mxu0
        %v2024 = vadd.f32 0.0, %v2023
        %v2025 = vpop.f32.mrb[0].mxu0
        %2026 = vmatprep.mubr.bf16.mxu0 %v1973
        %2027 = vmatmul.mubr.bf16.gmra.mrb[0].mxu0 %v1972
        %v2028 = vpop.f32.mrb[0].mxu0
        %v2029 = vadd.f32 0.0, %v2028
        %v2030 = vpop.f32.mrb[0].mxu0
        %v2031 = vpop.f32.mrb[0].mxu0
        %v2032 = vadd.f32 0.0, %v2031
        %v2033 = vpop.f32.mrb[0].mxu0
        %2034 = vmatprep.mubr.bf16.mxu0 %v1975
        %2035 = vmatmul.mubr.bf16.gmra.mrb[0].mxu0 %v1974
        %v2036 = vpop.f32.mrb[0].mxu0
        %v2037 = vadd.f32 0.0, %v2036
        %v2038 = vpop.f32.mrb[0].mxu0
        %v2039 = vpop.f32.mrb[0].mxu0
        %v2040 = vadd.f32 0.0, %v2039
        %v2041 = vpop.f32.mrb[0].mxu0
        %2042 = vmatprep.mubr.bf16.mxu0 %v1977
        %2043 = vmatmul.mubr.bf16.gmra.mrb[0].mxu0 %v1976
        %v2044 = vpop.f32.mrb[0].mxu0
        %v2045 = vadd.f32 0.0, %v2044
        %v2046 = vpop.f32.mrb[0].mxu0
        %v2047 = vpop.f32.mrb[0].mxu0
        %v2048 = vadd.f32 0.0, %v2047
        %v2049 = vpop.f32.mrb[0].mxu0
        %2050 = vdwg.mxu0
        %v2051 = vpack.c.bf16 %v2024, %v2021
        %v2052 = vpack.c.bf16 %v2032, %v2029
        %v2053 = vpack.c.bf16 %v2040, %v2037
        %v2054 = vpack.c.bf16 %v2048, %v2045
        %s2055 = scalar_lea.vmem [#allocation5], 120
        %v2056 = vld [vmem:[%s2055] sm:$0xf]
        %v2057 = vld [vmem:[%s2055 + $0x4] sm:$0xf]
        %v2058 = vld [vmem:[%s2055 + $0x8] sm:$0xf]
        %v2059 = vld [vmem:[%s2055 + $0xc] sm:$0xf]
        %v2060 = vld [vmem:[%s2055 + $0x10] sm:$0xf]
        %v2061 = vld [vmem:[%s2055 + $0x14] sm:$0xf]
        %v2068 = vunpack.c.l.b16 %v2056
        %v2069 = vunpack.c.l.b16 %v2057
        %v2070 = vunpack.c.l.b16 %v2058
        %v2071 = vunpack.c.l.b16 %v2059
        %v2072 = vunpack.c.l.b16 %v2060
        %v2073 = vunpack.c.l.b16 %v2061
        %v2074 = vpack.c.b16 %v2069, %v2068
        %v2075 = vpack.c.b16 %v2071, %v2070
        %v2076 = vpack.c.b16 %v2073, %v2072
        %v2081 = vsel %vm1080, %v2051, 0
        %v2084 = vsel %vm1080, %v2052, 0
        %v2087 = vsel %vm1080, %v2053, 0
        %v2090 = vsel %vm1080, %v2054, 0
        %2092 = vmatprep.subr.bf16.mxu0 0
        %2093 = vmatpush1.bf16.msra.mxu0 %v2074
        %2094 = vmatprep.subr.bf16.mxu0 0
        %2095 = vmatpush1.bf16.msra.mxu0 %v2075
        %2096 = vmatprep.subr.bf16.mxu0 0
        %2097 = vmatpush1.bf16.msra.mxu0 %v2076
        %2098 = vmatprep.subr.bf16.mxu0 0
        %2099 = vmatpush1.bf16.msra.mxu0 0
        %2100 = vmatprep.subr.bf16.mxu0 0
        %2101 = vmatpush1.bf16.msra.mxu0 0
        %2102 = vmatprep.subr.bf16.mxu0 0
        %2103 = vmatpush1.bf16.msra.mxu0 0
        %2104 = vmatprep.subr.bf16.mxu0 0
        %2105 = vmatpush1.bf16.msra.mxu0 0
        %2106 = vmatprep.subr.bf16.mxu0 0
        %2107 = vmatpush1.bf16.msra.mxu0 0
        %2108 = vmatprep.subr.bf16.mxu0 0
        %2109 = vmatpush1.bf16.msra.mxu0 0
        %2110 = vmatprep.subr.bf16.mxu0 0
        %2111 = vmatpush1.bf16.msra.mxu0 0
        %2112 = vmatprep.subr.bf16.mxu0 0
        %2113 = vmatpush1.bf16.msra.mxu0 0
        %2114 = vmatprep.subr.bf16.mxu0 0
        %2115 = vmatpush1.bf16.msra.mxu0 0
        %2116 = vmatprep.subr.bf16.mxu0 0
        %2117 = vmatpush1.bf16.msra.mxu0 0
        %2118 = vmatprep.subr.bf16.mxu0 0
        %2119 = vmatpush1.bf16.msra.mxu0 0
        %2120 = vmatprep.subr.bf16.mxu0 0
        %2121 = vmatpush1.bf16.msra.mxu0 0
        %2122 = vmatprep.subr.bf16.mxu0 0
        %2123 = vmatpush1.bf16.msra.mxu0 0
        %2124 = vmatprep.mubr.bf16.mxu0 0
        %2125 = vmatmul.mubr.bf16.gmra.mrb[0].mxu0 %v2081
        %v2126 = vpop.f32.mrb[0].mxu0
        %v2127 = vadd.f32 0.0, %v2126
        %v2128 = vpop.f32.mrb[0].mxu0
        %v2129 = vpop.f32.mrb[0].mxu0
        %v2130 = vadd.f32 0.0, %v2129
        %v2131 = vpop.f32.mrb[0].mxu0
        %2132 = vmatprep.mubr.bf16.mxu0 0
        %2133 = vmatmul.mubr.bf16.gmra.mrb[0].mxu0 %v2084
        %v2134 = vpop.f32.mrb[0].mxu0
        %v2135 = vadd.f32 0.0, %v2134
        %v2136 = vpop.f32.mrb[0].mxu0
        %v2137 = vpop.f32.mrb[0].mxu0
        %v2138 = vadd.f32 0.0, %v2137
        %v2139 = vpop.f32.mrb[0].mxu0
        %2140 = vmatprep.mubr.bf16.mxu0 0
        %2141 = vmatmul.mubr.bf16.gmra.mrb[0].mxu0 %v2087
        %v2142 = vpop.f32.mrb[0].mxu0
        %v2143 = vadd.f32 0.0, %v2142
        %v2144 = vpop.f32.mrb[0].mxu0
        %v2145 = vpop.f32.mrb[0].mxu0
        %v2146 = vadd.f32 0.0, %v2145
        %v2147 = vpop.f32.mrb[0].mxu0
        %2148 = vmatprep.mubr.bf16.mxu0 0
        %2149 = vmatmul.mubr.bf16.gmra.mrb[0].mxu0 %v2090
        %v2150 = vpop.f32.mrb[0].mxu0
        %v2151 = vadd.f32 0.0, %v2150
        %v2152 = vpop.f32.mrb[0].mxu0
        %v2153 = vpop.f32.mrb[0].mxu0
        %v2154 = vadd.f32 0.0, %v2153
        %v2155 = vpop.f32.mrb[0].mxu0
        %2156 = vdwg.mxu0
        %v2157 = vadd.f32 %v1929, %v2127
        %v2158 = vadd.f32 %v1930, %v2130
        %v2159 = vadd.f32 %v1931, %v2135
        %v2160 = vadd.f32 %v1932, %v2138
        %v2161 = vadd.f32 %v1933, %v2143
        %v2162 = vadd.f32 %v1934, %v2146
        %v2163 = vadd.f32 %v1935, %v2151
        %v2164 = vadd.f32 %v1936, %v2154
        %s2165 = scalar_lea.vmem [#allocation2], 384
        %v2166 = vld [vmem:[%s2165] sm:$0xff]
        %v2167 = vld [vmem:[%s2165 + $0x8] sm:$0xff]
        %v2168 = vld [vmem:[%s2165 + $0x10] sm:$0xff]
        %v2169 = vld [vmem:[%s2165 + $0x18] sm:$0xff]
        %v2170 = vld [vmem:[%s2165 + $0x20] sm:$0xff]
        %v2171 = vld [vmem:[%s2165 + $0x28] sm:$0xff]
        %v2172 = vld [vmem:[%s2165 + $0x30] sm:$0xff]
        %v2173 = vld [vmem:[%s2165 + $0x38] sm:$0xff]
        %v2182 = vunpack.c.l.b16 %v2166
        %v2183 = vunpack.c.h.b16 %v2166
        %v2184 = vunpack.c.l.b16 %v2167
        %v2185 = vunpack.c.h.b16 %v2167
        %v2186 = vunpack.c.l.b16 %v2168
        %v2187 = vunpack.c.h.b16 %v2168
        %v2188 = vunpack.c.l.b16 %v2169
        %v2189 = vunpack.c.h.b16 %v2169
        %v2190 = vunpack.c.l.b16 %v2170
        %v2191 = vunpack.c.h.b16 %v2170
        %v2192 = vunpack.c.l.b16 %v2171
        %v2193 = vunpack.c.h.b16 %v2171
        %v2194 = vunpack.c.l.b16 %v2172
        %v2195 = vunpack.c.h.b16 %v2172
        %v2196 = vunpack.c.l.b16 %v2173
        %v2197 = vunpack.c.h.b16 %v2173
        %v2198 = vpack.c.b16 %v2184, %v2182
        %v2199 = vpack.c.b16 %v2185, %v2183
        %v2200 = vpack.c.b16 %v2188, %v2186
        %v2201 = vpack.c.b16 %v2189, %v2187
        %v2202 = vpack.c.b16 %v2192, %v2190
        %v2203 = vpack.c.b16 %v2193, %v2191
        %v2204 = vpack.c.b16 %v2196, %v2194
        %v2205 = vpack.c.b16 %v2197, %v2195
        %2214 = vmatprep.subr.bf16.mxu0 0
        %2215 = vmatpush1.bf16.msra.mxu0 %v798
        %2216 = vmatprep.subr.bf16.mxu0 0
        %2217 = vmatpush1.bf16.msra.mxu0 %v799
        %2218 = vmatprep.subr.bf16.mxu0 0
        %2219 = vmatpush1.bf16.msra.mxu0 %v800
        %2220 = vmatprep.subr.bf16.mxu0 0
        %2221 = vmatpush1.bf16.msra.mxu0 %v801
        %2222 = vmatprep.subr.bf16.mxu0 0
        %2223 = vmatpush1.bf16.msra.mxu0 %v802
        %2224 = vmatprep.subr.bf16.mxu0 0
        %2225 = vmatpush1.bf16.msra.mxu0 %v803
        %2226 = vmatprep.subr.bf16.mxu0 0
        %2227 = vmatpush1.bf16.msra.mxu0 %v804
        %2228 = vmatprep.subr.bf16.mxu0 0
        %2229 = vmatpush1.bf16.msra.mxu0 %v805
        %2230 = vmatprep.subr.bf16.mxu0 0
        %2231 = vmatpush1.bf16.msra.mxu0 %v806
        %2232 = vmatprep.subr.bf16.mxu0 0
        %2233 = vmatpush1.bf16.msra.mxu0 %v807
        %2234 = vmatprep.subr.bf16.mxu0 0
        %2235 = vmatpush1.bf16.msra.mxu0 %v808
        %2236 = vmatprep.subr.bf16.mxu0 0
        %2237 = vmatpush1.bf16.msra.mxu0 %v809
        %2238 = vmatprep.subr.bf16.mxu0 0
        %2239 = vmatpush1.bf16.msra.mxu0 %v810
        %2240 = vmatprep.subr.bf16.mxu0 0
        %2241 = vmatpush1.bf16.msra.mxu0 %v811
        %2242 = vmatprep.subr.bf16.mxu0 0
        %2243 = vmatpush1.bf16.msra.mxu0 %v812
        %2244 = vmatprep.subr.bf16.mxu0 0
        %2245 = vmatpush1.bf16.msra.mxu0 %v813
        %2246 = vmatprep.mubr.bf16.mxu0 %v2199
        %2247 = vmatmul.mubr.bf16.gmra.mrb[0].mxu0 %v2198
        %v2248 = vpop.f32.mrb[0].mxu0
        %v2249 = vadd.f32 0.0, %v2248
        %v2250 = vpop.f32.mrb[0].mxu0
        %v2251 = vpop.f32.mrb[0].mxu0
        %v2252 = vadd.f32 0.0, %v2251
        %v2253 = vpop.f32.mrb[0].mxu0
        %2254 = vmatprep.mubr.bf16.mxu0 %v2201
        %2255 = vmatmul.mubr.bf16.gmra.mrb[0].mxu0 %v2200
        %v2256 = vpop.f32.mrb[0].mxu0
        %v2257 = vadd.f32 0.0, %v2256
        %v2258 = vpop.f32.mrb[0].mxu0
        %v2259 = vpop.f32.mrb[0].mxu0
        %v2260 = vadd.f32 0.0, %v2259
        %v2261 = vpop.f32.mrb[0].mxu0
        %2262 = vmatprep.mubr.bf16.mxu0 %v2203
        %2263 = vmatmul.mubr.bf16.gmra.mrb[0].mxu0 %v2202
        %v2264 = vpop.f32.mrb[0].mxu0
        %v2265 = vadd.f32 0.0, %v2264
        %v2266 = vpop.f32.mrb[0].mxu0
        %v2267 = vpop.f32.mrb[0].mxu0
        %v2268 = vadd.f32 0.0, %v2267
        %v2269 = vpop.f32.mrb[0].mxu0
        %2270 = vmatprep.mubr.bf16.mxu0 %v2205
        %2271 = vmatmul.mubr.bf16.gmra.mrb[0].mxu0 %v2204
        %v2272 = vpop.f32.mrb[0].mxu0
        %v2273 = vadd.f32 0.0, %v2272
        %v2274 = vpop.f32.mrb[0].mxu0
        %v2275 = vpop.f32.mrb[0].mxu0
        %v2276 = vadd.f32 0.0, %v2275
        %v2277 = vpop.f32.mrb[0].mxu0
        %2278 = vdwg.mxu0
        %v2279 = vpack.c.bf16 %v2252, %v2249
        %v2280 = vpack.c.bf16 %v2260, %v2257
        %v2281 = vpack.c.bf16 %v2268, %v2265
        %v2282 = vpack.c.bf16 %v2276, %v2273
        %s2283 = scalar_lea.vmem [#allocation5], 144
        %v2284 = vld [vmem:[%s2283] sm:$0xf]
        %v2285 = vld [vmem:[%s2283 + $0x4] sm:$0xf]
        %v2286 = vld [vmem:[%s2283 + $0x8] sm:$0xf]
        %v2287 = vld [vmem:[%s2283 + $0xc] sm:$0xf]
        %v2288 = vld [vmem:[%s2283 + $0x10] sm:$0xf]
        %v2289 = vld [vmem:[%s2283 + $0x14] sm:$0xf]
        %v2296 = vunpack.c.l.b16 %v2284
        %v2297 = vunpack.c.l.b16 %v2285
        %v2298 = vunpack.c.l.b16 %v2286
        %v2299 = vunpack.c.l.b16 %v2287
        %v2300 = vunpack.c.l.b16 %v2288
        %v2301 = vunpack.c.l.b16 %v2289
        %v2302 = vpack.c.b16 %v2297, %v2296
        %v2303 = vpack.c.b16 %v2299, %v2298
        %v2304 = vpack.c.b16 %v2301, %v2300
        %v2309 = vsel %vm1080, %v2279, 0
        %v2312 = vsel %vm1080, %v2280, 0
        %v2315 = vsel %vm1080, %v2281, 0
        %v2318 = vsel %vm1080, %v2282, 0
        %2320 = vmatprep.subr.bf16.mxu0 0
        %2321 = vmatpush1.bf16.msra.mxu0 %v2302
        %2322 = vmatprep.subr.bf16.mxu0 0
        %2323 = vmatpush1.bf16.msra.mxu0 %v2303
        %2324 = vmatprep.subr.bf16.mxu0 0
        %2325 = vmatpush1.bf16.msra.mxu0 %v2304
        %2326 = vmatprep.subr.bf16.mxu0 0
        %2327 = vmatpush1.bf16.msra.mxu0 0
        %2328 = vmatprep.subr.bf16.mxu0 0
        %2329 = vmatpush1.bf16.msra.mxu0 0
        %2330 = vmatprep.subr.bf16.mxu0 0
        %2331 = vmatpush1.bf16.msra.mxu0 0
        %2332 = vmatprep.subr.bf16.mxu0 0
        %2333 = vmatpush1.bf16.msra.mxu0 0
        %2334 = vmatprep.subr.bf16.mxu0 0
        %2335 = vmatpush1.bf16.msra.mxu0 0
        %2336 = vmatprep.subr.bf16.mxu0 0
        %2337 = vmatpush1.bf16.msra.mxu0 0
        %2338 = vmatprep.subr.bf16.mxu0 0
        %2339 = vmatpush1.bf16.msra.mxu0 0
        %2340 = vmatprep.subr.bf16.mxu0 0
        %2341 = vmatpush1.bf16.msra.mxu0 0
        %2342 = vmatprep.subr.bf16.mxu0 0
        %2343 = vmatpush1.bf16.msra.mxu0 0
        %2344 = vmatprep.subr.bf16.mxu0 0
        %2345 = vmatpush1.bf16.msra.mxu0 0
        %2346 = vmatprep.subr.bf16.mxu0 0
        %2347 = vmatpush1.bf16.msra.mxu0 0
        %2348 = vmatprep.subr.bf16.mxu0 0
        %2349 = vmatpush1.bf16.msra.mxu0 0
        %2350 = vmatprep.subr.bf16.mxu0 0
        %2351 = vmatpush1.bf16.msra.mxu0 0
        %2352 = vmatprep.mubr.bf16.mxu0 0
        %2353 = vmatmul.mubr.bf16.gmra.mrb[0].mxu0 %v2309
        %v2354 = vpop.f32.mrb[0].mxu0
        %v2355 = vadd.f32 0.0, %v2354
        %v2356 = vpop.f32.mrb[0].mxu0
        %v2357 = vpop.f32.mrb[0].mxu0
        %v2358 = vadd.f32 0.0, %v2357
        %v2359 = vpop.f32.mrb[0].mxu0
        %2360 = vmatprep.mubr.bf16.mxu0 0
        %2361 = vmatmul.mubr.bf16.gmra.mrb[0].mxu0 %v2312
        %v2362 = vpop.f32.mrb[0].mxu0
        %v2363 = vadd.f32 0.0, %v2362
        %v2364 = vpop.f32.mrb[0].mxu0
        %v2365 = vpop.f32.mrb[0].mxu0
        %v2366 = vadd.f32 0.0, %v2365
        %v2367 = vpop.f32.mrb[0].mxu0
        %2368 = vmatprep.mubr.bf16.mxu0 0
        %2369 = vmatmul.mubr.bf16.gmra.mrb[0].mxu0 %v2315
        %v2370 = vpop.f32.mrb[0].mxu0
        %v2371 = vadd.f32 0.0, %v2370
        %v2372 = vpop.f32.mrb[0].mxu0
        %v2373 = vpop.f32.mrb[0].mxu0
        %v2374 = vadd.f32 0.0, %v2373
        %v2375 = vpop.f32.mrb[0].mxu0
        %2376 = vmatprep.mubr.bf16.mxu0 0
        %2377 = vmatmul.mubr.bf16.gmra.mrb[0].mxu0 %v2318
        %v2378 = vpop.f32.mrb[0].mxu0
        %v2379 = vadd.f32 0.0, %v2378
        %v2380 = vpop.f32.mrb[0].mxu0
        %v2381 = vpop.f32.mrb[0].mxu0
        %v2382 = vadd.f32 0.0, %v2381
        %v2383 = vpop.f32.mrb[0].mxu0
        %2384 = vdwg.mxu0
        %v2385 = vadd.f32 %v2157, %v2355
        %v2386 = vadd.f32 %v2158, %v2358
        %v2387 = vadd.f32 %v2159, %v2363
        %v2388 = vadd.f32 %v2160, %v2366
        %v2389 = vadd.f32 %v2161, %v2371
        %v2390 = vadd.f32 %v2162, %v2374
        %v2391 = vadd.f32 %v2163, %v2379
        %v2392 = vadd.f32 %v2164, %v2382
        %s2393 = scalar_lea.vmem [#allocation2], 448
        %v2394 = vld [vmem:[%s2393] sm:$0xff]
        %v2395 = vld [vmem:[%s2393 + $0x8] sm:$0xff]
        %v2396 = vld [vmem:[%s2393 + $0x10] sm:$0xff]
        %v2397 = vld [vmem:[%s2393 + $0x18] sm:$0xff]
        %v2398 = vld [vmem:[%s2393 + $0x20] sm:$0xff]
        %v2399 = vld [vmem:[%s2393 + $0x28] sm:$0xff]
        %v2400 = vld [vmem:[%s2393 + $0x30] sm:$0xff]
        %v2401 = vld [vmem:[%s2393 + $0x38] sm:$0xff]
        %v2410 = vunpack.c.l.b16 %v2394
        %v2411 = vunpack.c.h.b16 %v2394
        %v2412 = vunpack.c.l.b16 %v2395
        %v2413 = vunpack.c.h.b16 %v2395
        %v2414 = vunpack.c.l.b16 %v2396
        %v2415 = vunpack.c.h.b16 %v2396
        %v2416 = vunpack.c.l.b16 %v2397
        %v2417 = vunpack.c.h.b16 %v2397
        %v2418 = vunpack.c.l.b16 %v2398
        %v2419 = vunpack.c.h.b16 %v2398
        %v2420 = vunpack.c.l.b16 %v2399
        %v2421 = vunpack.c.h.b16 %v2399
        %v2422 = vunpack.c.l.b16 %v2400
        %v2423 = vunpack.c.h.b16 %v2400
        %v2424 = vunpack.c.l.b16 %v2401
        %v2425 = vunpack.c.h.b16 %v2401
        %v2426 = vpack.c.b16 %v2412, %v2410
        %v2427 = vpack.c.b16 %v2413, %v2411
        %v2428 = vpack.c.b16 %v2416, %v2414
        %v2429 = vpack.c.b16 %v2417, %v2415
        %v2430 = vpack.c.b16 %v2420, %v2418
        %v2431 = vpack.c.b16 %v2421, %v2419
        %v2432 = vpack.c.b16 %v2424, %v2422
        %v2433 = vpack.c.b16 %v2425, %v2423
        %2442 = vmatprep.subr.bf16.mxu0 0
        %2443 = vmatpush1.bf16.msra.mxu0 %v798
        %2444 = vmatprep.subr.bf16.mxu0 0
        %2445 = vmatpush1.bf16.msra.mxu0 %v799
        %2446 = vmatprep.subr.bf16.mxu0 0
        %2447 = vmatpush1.bf16.msra.mxu0 %v800
        %2448 = vmatprep.subr.bf16.mxu0 0
        %2449 = vmatpush1.bf16.msra.mxu0 %v801
        %2450 = vmatprep.subr.bf16.mxu0 0
        %2451 = vmatpush1.bf16.msra.mxu0 %v802
        %2452 = vmatprep.subr.bf16.mxu0 0
        %2453 = vmatpush1.bf16.msra.mxu0 %v803
        %2454 = vmatprep.subr.bf16.mxu0 0
        %2455 = vmatpush1.bf16.msra.mxu0 %v804
        %2456 = vmatprep.subr.bf16.mxu0 0
        %2457 = vmatpush1.bf16.msra.mxu0 %v805
        %2458 = vmatprep.subr.bf16.mxu0 0
        %2459 = vmatpush1.bf16.msra.mxu0 %v806
        %2460 = vmatprep.subr.bf16.mxu0 0
        %2461 = vmatpush1.bf16.msra.mxu0 %v807
        %2462 = vmatprep.subr.bf16.mxu0 0
        %2463 = vmatpush1.bf16.msra.mxu0 %v808
        %2464 = vmatprep.subr.bf16.mxu0 0
        %2465 = vmatpush1.bf16.msra.mxu0 %v809
        %2466 = vmatprep.subr.bf16.mxu0 0
        %2467 = vmatpush1.bf16.msra.mxu0 %v810
        %2468 = vmatprep.subr.bf16.mxu0 0
        %2469 = vmatpush1.bf16.msra.mxu0 %v811
        %2470 = vmatprep.subr.bf16.mxu0 0
        %2471 = vmatpush1.bf16.msra.mxu0 %v812
        %2472 = vmatprep.subr.bf16.mxu0 0
        %2473 = vmatpush1.bf16.msra.mxu0 %v813
        %2474 = vmatprep.mubr.bf16.mxu0 %v2427
        %2475 = vmatmul.mubr.bf16.gmra.mrb[0].mxu0 %v2426
        %v2476 = vpop.f32.mrb[0].mxu0
        %v2477 = vadd.f32 0.0, %v2476
        %v2478 = vpop.f32.mrb[0].mxu0
        %v2479 = vpop.f32.mrb[0].mxu0
        %v2480 = vadd.f32 0.0, %v2479
        %v2481 = vpop.f32.mrb[0].mxu0
        %2482 = vmatprep.mubr.bf16.mxu0 %v2429
        %2483 = vmatmul.mubr.bf16.gmra.mrb[0].mxu0 %v2428
        %v2484 = vpop.f32.mrb[0].mxu0
        %v2485 = vadd.f32 0.0, %v2484
        %v2486 = vpop.f32.mrb[0].mxu0
        %v2487 = vpop.f32.mrb[0].mxu0
        %v2488 = vadd.f32 0.0, %v2487
        %v2489 = vpop.f32.mrb[0].mxu0
        %2490 = vmatprep.mubr.bf16.mxu0 %v2431
        %2491 = vmatmul.mubr.bf16.gmra.mrb[0].mxu0 %v2430
        %v2492 = vpop.f32.mrb[0].mxu0
        %v2493 = vadd.f32 0.0, %v2492
        %v2494 = vpop.f32.mrb[0].mxu0
        %v2495 = vpop.f32.mrb[0].mxu0
        %v2496 = vadd.f32 0.0, %v2495
        %v2497 = vpop.f32.mrb[0].mxu0
        %2498 = vmatprep.mubr.bf16.mxu0 %v2433
        %2499 = vmatmul.mubr.bf16.gmra.mrb[0].mxu0 %v2432
        %v2500 = vpop.f32.mrb[0].mxu0
        %v2501 = vadd.f32 0.0, %v2500
        %v2502 = vpop.f32.mrb[0].mxu0
        %v2503 = vpop.f32.mrb[0].mxu0
        %v2504 = vadd.f32 0.0, %v2503
        %v2505 = vpop.f32.mrb[0].mxu0
        %2506 = vdwg.mxu0
        %v2507 = vpack.c.bf16 %v2480, %v2477
        %v2508 = vpack.c.bf16 %v2488, %v2485
        %v2509 = vpack.c.bf16 %v2496, %v2493
        %v2510 = vpack.c.bf16 %v2504, %v2501
        %s2511 = scalar_lea.vmem [#allocation5], 168
        %v2512 = vld [vmem:[%s2511] sm:$0xf]
        %v2513 = vld [vmem:[%s2511 + $0x4] sm:$0xf]
        %v2514 = vld [vmem:[%s2511 + $0x8] sm:$0xf]
        %v2515 = vld [vmem:[%s2511 + $0xc] sm:$0xf]
        %v2516 = vld [vmem:[%s2511 + $0x10] sm:$0xf]
        %v2517 = vld [vmem:[%s2511 + $0x14] sm:$0xf]
        %v2524 = vunpack.c.l.b16 %v2512
        %v2525 = vunpack.c.l.b16 %v2513
        %v2526 = vunpack.c.l.b16 %v2514
        %v2527 = vunpack.c.l.b16 %v2515
        %v2528 = vunpack.c.l.b16 %v2516
        %v2529 = vunpack.c.l.b16 %v2517
        %v2530 = vpack.c.b16 %v2525, %v2524
        %v2531 = vpack.c.b16 %v2527, %v2526
        %v2532 = vpack.c.b16 %v2529, %v2528
        %v2537 = vsel %vm1080, %v2507, 0
        %v2540 = vsel %vm1080, %v2508, 0
        %v2543 = vsel %vm1080, %v2509, 0
        %v2546 = vsel %vm1080, %v2510, 0
        %2548 = vmatprep.subr.bf16.mxu0 0
        %2549 = vmatpush1.bf16.msra.mxu0 %v2530
        %2550 = vmatprep.subr.bf16.mxu0 0
        %2551 = vmatpush1.bf16.msra.mxu0 %v2531
        %2552 = vmatprep.subr.bf16.mxu0 0
        %2553 = vmatpush1.bf16.msra.mxu0 %v2532
        %2554 = vmatprep.subr.bf16.mxu0 0
        %2555 = vmatpush1.bf16.msra.mxu0 0
        %2556 = vmatprep.subr.bf16.mxu0 0
        %2557 = vmatpush1.bf16.msra.mxu0 0
        %2558 = vmatprep.subr.bf16.mxu0 0
        %2559 = vmatpush1.bf16.msra.mxu0 0
        %2560 = vmatprep.subr.bf16.mxu0 0
        %2561 = vmatpush1.bf16.msra.mxu0 0
        %2562 = vmatprep.subr.bf16.mxu0 0
        %2563 = vmatpush1.bf16.msra.mxu0 0
        %2564 = vmatprep.subr.bf16.mxu0 0
        %2565 = vmatpush1.bf16.msra.mxu0 0
        %2566 = vmatprep.subr.bf16.mxu0 0
        %2567 = vmatpush1.bf16.msra.mxu0 0
        %2568 = vmatprep.subr.bf16.mxu0 0
        %2569 = vmatpush1.bf16.msra.mxu0 0
        %2570 = vmatprep.subr.bf16.mxu0 0
        %2571 = vmatpush1.bf16.msra.mxu0 0
        %2572 = vmatprep.subr.bf16.mxu0 0
        %2573 = vmatpush1.bf16.msra.mxu0 0
        %2574 = vmatprep.subr.bf16.mxu0 0
        %2575 = vmatpush1.bf16.msra.mxu0 0
        %2576 = vmatprep.subr.bf16.mxu0 0
        %2577 = vmatpush1.bf16.msra.mxu0 0
        %2578 = vmatprep.subr.bf16.mxu0 0
        %2579 = vmatpush1.bf16.msra.mxu0 0
        %2580 = vmatprep.mubr.bf16.mxu0 0
        %2581 = vmatmul.mubr.bf16.gmra.mrb[0].mxu0 %v2537
        %v2582 = vpop.f32.mrb[0].mxu0
        %v2583 = vadd.f32 0.0, %v2582
        %v2584 = vpop.f32.mrb[0].mxu0
        %v2585 = vpop.f32.mrb[0].mxu0
        %v2586 = vadd.f32 0.0, %v2585
        %v2587 = vpop.f32.mrb[0].mxu0
        %2588 = vmatprep.mubr.bf16.mxu0 0
        %2589 = vmatmul.mubr.bf16.gmra.mrb[0].mxu0 %v2540
        %v2590 = vpop.f32.mrb[0].mxu0
        %v2591 = vadd.f32 0.0, %v2590
        %v2592 = vpop.f32.mrb[0].mxu0
        %v2593 = vpop.f32.mrb[0].mxu0
        %v2594 = vadd.f32 0.0, %v2593
        %v2595 = vpop.f32.mrb[0].mxu0
        %2596 = vmatprep.mubr.bf16.mxu0 0
        %2597 = vmatmul.mubr.bf16.gmra.mrb[0].mxu0 %v2543
        %v2598 = vpop.f32.mrb[0].mxu0
        %v2599 = vadd.f32 0.0, %v2598
        %v2600 = vpop.f32.mrb[0].mxu0
        %v2601 = vpop.f32.mrb[0].mxu0
        %v2602 = vadd.f32 0.0, %v2601
        %v2603 = vpop.f32.mrb[0].mxu0
        %2604 = vmatprep.mubr.bf16.mxu0 0
        %2605 = vmatmul.mubr.bf16.gmra.mrb[0].mxu0 %v2546
        %v2606 = vpop.f32.mrb[0].mxu0
        %v2607 = vadd.f32 0.0, %v2606
        %v2608 = vpop.f32.mrb[0].mxu0
        %v2609 = vpop.f32.mrb[0].mxu0
        %v2610 = vadd.f32 0.0, %v2609
        %v2611 = vpop.f32.mrb[0].mxu0
        %2612 = vdwg.mxu0
        %v2613 = vadd.f32 %v2385, %v2583
        %v2614 = vadd.f32 %v2386, %v2586
        %v2615 = vadd.f32 %v2387, %v2591
        %v2616 = vadd.f32 %v2388, %v2594
        %v2617 = vadd.f32 %v2389, %v2599
        %v2618 = vadd.f32 %v2390, %v2602
        %v2619 = vadd.f32 %v2391, %v2607
        %v2620 = vadd.f32 %v2392, %v2610
        %s2621 = scalar_lea.vmem [#allocation2], 512
        %v2622 = vld [vmem:[%s2621] sm:$0xff]
        %v2623 = vld [vmem:[%s2621 + $0x8] sm:$0xff]
        %v2624 = vld [vmem:[%s2621 + $0x10] sm:$0xff]
        %v2625 = vld [vmem:[%s2621 + $0x18] sm:$0xff]
        %v2626 = vld [vmem:[%s2621 + $0x20] sm:$0xff]
        %v2627 = vld [vmem:[%s2621 + $0x28] sm:$0xff]
        %v2628 = vld [vmem:[%s2621 + $0x30] sm:$0xff]
        %v2629 = vld [vmem:[%s2621 + $0x38] sm:$0xff]
        %v2638 = vunpack.c.l.b16 %v2622
        %v2639 = vunpack.c.h.b16 %v2622
        %v2640 = vunpack.c.l.b16 %v2623
        %v2641 = vunpack.c.h.b16 %v2623
        %v2642 = vunpack.c.l.b16 %v2624
        %v2643 = vunpack.c.h.b16 %v2624
        %v2644 = vunpack.c.l.b16 %v2625
        %v2645 = vunpack.c.h.b16 %v2625
        %v2646 = vunpack.c.l.b16 %v2626
        %v2647 = vunpack.c.h.b16 %v2626
        %v2648 = vunpack.c.l.b16 %v2627
        %v2649 = vunpack.c.h.b16 %v2627
        %v2650 = vunpack.c.l.b16 %v2628
        %v2651 = vunpack.c.h.b16 %v2628
        %v2652 = vunpack.c.l.b16 %v2629
        %v2653 = vunpack.c.h.b16 %v2629
        %v2654 = vpack.c.b16 %v2640, %v2638
        %v2655 = vpack.c.b16 %v2641, %v2639
        %v2656 = vpack.c.b16 %v2644, %v2642
        %v2657 = vpack.c.b16 %v2645, %v2643
        %v2658 = vpack.c.b16 %v2648, %v2646
        %v2659 = vpack.c.b16 %v2649, %v2647
        %v2660 = vpack.c.b16 %v2652, %v2650
        %v2661 = vpack.c.b16 %v2653, %v2651
        %2670 = vmatprep.subr.bf16.mxu0 0
        %2671 = vmatpush1.bf16.msra.mxu0 %v798
        %2672 = vmatprep.subr.bf16.mxu0 0
        %2673 = vmatpush1.bf16.msra.mxu0 %v799
        %2674 = vmatprep.subr.bf16.mxu0 0
        %2675 = vmatpush1.bf16.msra.mxu0 %v800
        %2676 = vmatprep.subr.bf16.mxu0 0
        %2677 = vmatpush1.bf16.msra.mxu0 %v801
        %2678 = vmatprep.subr.bf16.mxu0 0
        %2679 = vmatpush1.bf16.msra.mxu0 %v802
        %2680 = vmatprep.subr.bf16.mxu0 0
        %2681 = vmatpush1.bf16.msra.mxu0 %v803
        %2682 = vmatprep.subr.bf16.mxu0 0
        %2683 = vmatpush1.bf16.msra.mxu0 %v804
        %2684 = vmatprep.subr.bf16.mxu0 0
        %2685 = vmatpush1.bf16.msra.mxu0 %v805
        %2686 = vmatprep.subr.bf16.mxu0 0
        %2687 = vmatpush1.bf16.msra.mxu0 %v806
        %2688 = vmatprep.subr.bf16.mxu0 0
        %2689 = vmatpush1.bf16.msra.mxu0 %v807
        %2690 = vmatprep.subr.bf16.mxu0 0
        %2691 = vmatpush1.bf16.msra.mxu0 %v808
        %2692 = vmatprep.subr.bf16.mxu0 0
        %2693 = vmatpush1.bf16.msra.mxu0 %v809
        %2694 = vmatprep.subr.bf16.mxu0 0
        %2695 = vmatpush1.bf16.msra.mxu0 %v810
        %2696 = vmatprep.subr.bf16.mxu0 0
        %2697 = vmatpush1.bf16.msra.mxu0 %v811
        %2698 = vmatprep.subr.bf16.mxu0 0
        %2699 = vmatpush1.bf16.msra.mxu0 %v812
        %2700 = vmatprep.subr.bf16.mxu0 0
        %2701 = vmatpush1.bf16.msra.mxu0 %v813
        %2702 = vmatprep.mubr.bf16.mxu0 %v2655
        %2703 = vmatmul.mubr.bf16.gmra.mrb[0].mxu0 %v2654
        %v2704 = vpop.f32.mrb[0].mxu0
        %v2705 = vadd.f32 0.0, %v2704
        %v2706 = vpop.f32.mrb[0].mxu0
        %v2707 = vpop.f32.mrb[0].mxu0
        %v2708 = vadd.f32 0.0, %v2707
        %v2709 = vpop.f32.mrb[0].mxu0
        %2710 = vmatprep.mubr.bf16.mxu0 %v2657
        %2711 = vmatmul.mubr.bf16.gmra.mrb[0].mxu0 %v2656
        %v2712 = vpop.f32.mrb[0].mxu0
        %v2713 = vadd.f32 0.0, %v2712
        %v2714 = vpop.f32.mrb[0].mxu0
        %v2715 = vpop.f32.mrb[0].mxu0
        %v2716 = vadd.f32 0.0, %v2715
        %v2717 = vpop.f32.mrb[0].mxu0
        %2718 = vmatprep.mubr.bf16.mxu0 %v2659
        %2719 = vmatmul.mubr.bf16.gmra.mrb[0].mxu0 %v2658
        %v2720 = vpop.f32.mrb[0].mxu0
        %v2721 = vadd.f32 0.0, %v2720
        %v2722 = vpop.f32.mrb[0].mxu0
        %v2723 = vpop.f32.mrb[0].mxu0
        %v2724 = vadd.f32 0.0, %v2723
        %v2725 = vpop.f32.mrb[0].mxu0
        %2726 = vmatprep.mubr.bf16.mxu0 %v2661
        %2727 = vmatmul.mubr.bf16.gmra.mrb[0].mxu0 %v2660
        %v2728 = vpop.f32.mrb[0].mxu0
        %v2729 = vadd.f32 0.0, %v2728
        %v2730 = vpop.f32.mrb[0].mxu0
        %v2731 = vpop.f32.mrb[0].mxu0
        %v2732 = vadd.f32 0.0, %v2731
        %v2733 = vpop.f32.mrb[0].mxu0
        %2734 = vdwg.mxu0
        %v2735 = vpack.c.bf16 %v2708, %v2705
        %v2736 = vpack.c.bf16 %v2716, %v2713
        %v2737 = vpack.c.bf16 %v2724, %v2721
        %v2738 = vpack.c.bf16 %v2732, %v2729
        %s2739 = scalar_lea.vmem [#allocation5], 192
        %v2740 = vld [vmem:[%s2739] sm:$0xf]
        %v2741 = vld [vmem:[%s2739 + $0x4] sm:$0xf]
        %v2742 = vld [vmem:[%s2739 + $0x8] sm:$0xf]
        %v2743 = vld [vmem:[%s2739 + $0xc] sm:$0xf]
        %v2744 = vld [vmem:[%s2739 + $0x10] sm:$0xf]
        %v2745 = vld [vmem:[%s2739 + $0x14] sm:$0xf]
        %v2752 = vunpack.c.l.b16 %v2740
        %v2753 = vunpack.c.l.b16 %v2741
        %v2754 = vunpack.c.l.b16 %v2742
        %v2755 = vunpack.c.l.b16 %v2743
        %v2756 = vunpack.c.l.b16 %v2744
        %v2757 = vunpack.c.l.b16 %v2745
        %v2758 = vpack.c.b16 %v2753, %v2752
        %v2759 = vpack.c.b16 %v2755, %v2754
        %v2760 = vpack.c.b16 %v2757, %v2756
        %v2765 = vsel %vm1080, %v2735, 0
        %v2768 = vsel %vm1080, %v2736, 0
        %v2771 = vsel %vm1080, %v2737, 0
        %v2774 = vsel %vm1080, %v2738, 0
        %2776 = vmatprep.subr.bf16.mxu0 0
        %2777 = vmatpush1.bf16.msra.mxu0 %v2758
        %2778 = vmatprep.subr.bf16.mxu0 0
        %2779 = vmatpush1.bf16.msra.mxu0 %v2759
        %2780 = vmatprep.subr.bf16.mxu0 0
        %2781 = vmatpush1.bf16.msra.mxu0 %v2760
        %2782 = vmatprep.subr.bf16.mxu0 0
        %2783 = vmatpush1.bf16.msra.mxu0 0
        %2784 = vmatprep.subr.bf16.mxu0 0
        %2785 = vmatpush1.bf16.msra.mxu0 0
        %2786 = vmatprep.subr.bf16.mxu0 0
        %2787 = vmatpush1.bf16.msra.mxu0 0
        %2788 = vmatprep.subr.bf16.mxu0 0
        %2789 = vmatpush1.bf16.msra.mxu0 0
        %2790 = vmatprep.subr.bf16.mxu0 0
        %2791 = vmatpush1.bf16.msra.mxu0 0
        %2792 = vmatprep.subr.bf16.mxu0 0
        %2793 = vmatpush1.bf16.msra.mxu0 0
        %2794 = vmatprep.subr.bf16.mxu0 0
        %2795 = vmatpush1.bf16.msra.mxu0 0
        %2796 = vmatprep.subr.bf16.mxu0 0
        %2797 = vmatpush1.bf16.msra.mxu0 0
        %2798 = vmatprep.subr.bf16.mxu0 0
        %2799 = vmatpush1.bf16.msra.mxu0 0
        %2800 = vmatprep.subr.bf16.mxu0 0
        %2801 = vmatpush1.bf16.msra.mxu0 0
        %2802 = vmatprep.subr.bf16.mxu0 0
        %2803 = vmatpush1.bf16.msra.mxu0 0
        %2804 = vmatprep.subr.bf16.mxu0 0
        %2805 = vmatpush1.bf16.msra.mxu0 0
        %2806 = vmatprep.subr.bf16.mxu0 0
        %2807 = vmatpush1.bf16.msra.mxu0 0
        %2808 = vmatprep.mubr.bf16.mxu0 0
        %2809 = vmatmul.mubr.bf16.gmra.mrb[0].mxu0 %v2765
        %v2810 = vpop.f32.mrb[0].mxu0
        %v2811 = vadd.f32 0.0, %v2810
        %v2812 = vpop.f32.mrb[0].mxu0
        %v2813 = vpop.f32.mrb[0].mxu0
        %v2814 = vadd.f32 0.0, %v2813
        %v2815 = vpop.f32.mrb[0].mxu0
        %2816 = vmatprep.mubr.bf16.mxu0 0
        %2817 = vmatmul.mubr.bf16.gmra.mrb[0].mxu0 %v2768
        %v2818 = vpop.f32.mrb[0].mxu0
        %v2819 = vadd.f32 0.0, %v2818
        %v2820 = vpop.f32.mrb[0].mxu0
        %v2821 = vpop.f32.mrb[0].mxu0
        %v2822 = vadd.f32 0.0, %v2821
        %v2823 = vpop.f32.mrb[0].mxu0
        %2824 = vmatprep.mubr.bf16.mxu0 0
        %2825 = vmatmul.mubr.bf16.gmra.mrb[0].mxu0 %v2771
        %v2826 = vpop.f32.mrb[0].mxu0
        %v2827 = vadd.f32 0.0, %v2826
        %v2828 = vpop.f32.mrb[0].mxu0
        %v2829 = vpop.f32.mrb[0].mxu0
        %v2830 = vadd.f32 0.0, %v2829
        %v2831 = vpop.f32.mrb[0].mxu0
        %2832 = vmatprep.mubr.bf16.mxu0 0
        %2833 = vmatmul.mubr.bf16.gmra.mrb[0].mxu0 %v2774
        %v2834 = vpop.f32.mrb[0].mxu0
        %v2835 = vadd.f32 0.0, %v2834
        %v2836 = vpop.f32.mrb[0].mxu0
        %v2837 = vpop.f32.mrb[0].mxu0
        %v2838 = vadd.f32 0.0, %v2837
        %v2839 = vpop.f32.mrb[0].mxu0
        %2840 = vdwg.mxu0
        %v2841 = vadd.f32 %v2613, %v2811
        %v2842 = vadd.f32 %v2614, %v2814
        %v2843 = vadd.f32 %v2615, %v2819
        %v2844 = vadd.f32 %v2616, %v2822
        %v2845 = vadd.f32 %v2617, %v2827
        %v2846 = vadd.f32 %v2618, %v2830
        %v2847 = vadd.f32 %v2619, %v2835
        %v2848 = vadd.f32 %v2620, %v2838
        %v2849 = vld [vmem:[%s5] sm:$0x1]
        %v2851 = vlaneseq
        %v2852 = vshrl.u32 %v2851, 7
        %v2853 = vsub.s32 0, %v2852
        %v2854 = vrot.slane %v2849, %v2853
        %v2856 = vadd.f32 %v2841, %v2854
        %v2857 = vadd.f32 %v2842, %v2854
        %v2858 = vadd.f32 %v2843, %v2854
        %v2859 = vadd.f32 %v2844, %v2854
        %v2860 = vadd.f32 %v2845, %v2854
        %v2861 = vadd.f32 %v2846, %v2854
        %v2862 = vadd.f32 %v2847, %v2854
        %v2863 = vadd.f32 %v2848, %v2854
        %v2864 = vmax.f32 %v2856, 0.0
        %v2865 = vmax.f32 %v2857, 0.0
        %v2866 = vmax.f32 %v2858, 0.0
        %v2867 = vmax.f32 %v2859, 0.0
        %v2868 = vmax.f32 %v2860, 0.0
        %v2869 = vmax.f32 %v2861, 0.0
        %v2870 = vmax.f32 %v2862, 0.0
        %v2871 = vmax.f32 %v2863, 0.0
        %v2872 = vpack.c.bf16 %v2865, %v2864
        %v2873 = vpack.c.bf16 %v2867, %v2866
        %v2874 = vpack.c.bf16 %v2869, %v2868
        %v2875 = vpack.c.bf16 %v2871, %v2870
        %v2876 = vld [vmem:[%s6] sm:$0xf]
        %v2877 = vld [vmem:[%s6 + $0x4] sm:$0xf]
        %v2880 = vunpack.c.l.b16 %v2876
        %v2881 = vunpack.c.l.b16 %v2877
        %v2882 = vpack.c.b16 %v2881, %v2880
        %vm2883 = vcmask 523264
        %v2885 = vsel %vm2883, %v2882, 0
        %2887 = vmatprep.subr.bf16.mxu0 0
        %2888 = vmatpush1.bf16.msra.mxu0 %v2872
        %2889 = vmatprep.subr.bf16.mxu0 0
        %2890 = vmatpush1.bf16.msra.mxu0 %v2873
        %2891 = vmatprep.subr.bf16.mxu0 0
        %2892 = vmatpush1.bf16.msra.mxu0 %v2874
        %2893 = vmatprep.subr.bf16.mxu0 0
        %2894 = vmatpush1.bf16.msra.mxu0 %v2875
        %2895 = vmatprep.subr.bf16.mxu0 0
        %2896 = vmatpush1.bf16.msra.mxu0 0
        %2897 = vmatprep.subr.bf16.mxu0 0
        %2898 = vmatpush1.bf16.msra.mxu0 0
        %2899 = vmatprep.subr.bf16.mxu0 0
        %2900 = vmatpush1.bf16.msra.mxu0 0
        %2901 = vmatprep.subr.bf16.mxu0 0
        %2902 = vmatpush1.bf16.msra.mxu0 0
        %2903 = vmatprep.subr.bf16.mxu0 0
        %2904 = vmatpush1.bf16.msra.mxu0 0
        %2905 = vmatprep.subr.bf16.mxu0 0
        %2906 = vmatpush1.bf16.msra.mxu0 0
        %2907 = vmatprep.subr.bf16.mxu0 0
        %2908 = vmatpush1.bf16.msra.mxu0 0
        %2909 = vmatprep.subr.bf16.mxu0 0
        %2910 = vmatpush1.bf16.msra.mxu0 0
        %2911 = vmatprep.subr.bf16.mxu0 0
        %2912 = vmatpush1.bf16.msra.mxu0 0
        %2913 = vmatprep.subr.bf16.mxu0 0
        %2914 = vmatpush1.bf16.msra.mxu0 0
        %2915 = vmatprep.subr.bf16.mxu0 0
        %2916 = vmatpush1.bf16.msra.mxu0 0
        %2917 = vmatprep.subr.bf16.mxu0 0
        %2918 = vmatpush1.bf16.msra.mxu0 0
        %2919 = vmatprep.mubr.bf16.mxu0 0
        %2920 = vmatmul.mubr.bf16.gmra.mrb[0].mxu0 %v2885
        %v2921 = vpop.f32.mrb[0].mxu0
        %v2922 = vadd.f32 0.0, %v2921
        %v2923 = vpop.f32.mrb[0].mxu0
        %v2924 = vpop.f32.mrb[0].mxu0
        %v2925 = vadd.f32 0.0, %v2924
        %v2926 = vpop.f32.mrb[0].mxu0
        %2927 = vdwg.mxu0
        %v2928 = vpack.c.bf16 %v2925, %v2922
        %v2929 = vld [vmem:[%s7] sm:$0xff]
        %v2930 = vld [vmem:[%s7 + $0x8] sm:$0xf]
        %v2931 = vld [vmem:[%s7 + $0xc] sm:$0xff]
        %v2932 = vld [vmem:[%s7 + $0x14] sm:$0xf]
        %v2933 = vld [vmem:[%s7 + $0x18] sm:$0xff]
        %v2934 = vld [vmem:[%s7 + $0x20] sm:$0xf]
        %v2935 = vld [vmem:[%s7 + $0x24] sm:$0xff]
        %v2936 = vld [vmem:[%s7 + $0x2c] sm:$0xf]
        %v2937 = vld [vmem:[%s7 + $0x30] sm:$0xff]
        %v2938 = vld [vmem:[%s7 + $0x38] sm:$0xf]
        %v2939 = vld [vmem:[%s7 + $0x3c] sm:$0xff]
        %v2940 = vld [vmem:[%s7 + $0x44] sm:$0xf]
        %v2941 = vld [vmem:[%s7 + $0x48] sm:$0xff]
        %v2942 = vld [vmem:[%s7 + $0x50] sm:$0xf]
        %v2943 = vld [vmem:[%s7 + $0x54] sm:$0xff]
        %v2944 = vld [vmem:[%s7 + $0x5c] sm:$0xf]
        %v2945 = vld [vmem:[%s7 + $0x60] sm:$0xff]
        %v2946 = vld [vmem:[%s7 + $0x68] sm:$0xf]
        %v2947 = vld [vmem:[%s7 + $0x6c] sm:$0xff]
        %v2948 = vld [vmem:[%s7 + $0x74] sm:$0xf]
        %v2949 = vld [vmem:[%s7 + $0x78] sm:$0xff]
        %v2950 = vld [vmem:[%s7 + $0x80] sm:$0xf]
        %v2951 = vld [vmem:[%s7 + $0x84] sm:$0xff]
        %v2952 = vld [vmem:[%s7 + $0x8c] sm:$0xf]
        %s2953 = scalar_lea.vmem %s6, 8
        %v2954 = vld [vmem:[%s2953] sm:$0xf]
        %v2955 = vld [vmem:[%s2953 + $0x4] sm:$0xf]
        %v2958 = vunpack.c.l.b16 %v2954
        %v2959 = vunpack.c.l.b16 %v2955
        %v2960 = vpack.c.b16 %v2959, %v2958
        %v2962 = vsel %vm2883, %v2960, 0
        %2964 = vmatprep.subr.bf16.mxu0 0
        %2965 = vmatpush1.bf16.msra.mxu0 %v2872
        %2966 = vmatprep.subr.bf16.mxu0 0
        %2967 = vmatpush1.bf16.msra.mxu0 %v2873
        %2968 = vmatprep.subr.bf16.mxu0 0
        %2969 = vmatpush1.bf16.msra.mxu0 %v2874
        %2970 = vmatprep.subr.bf16.mxu0 0
        %2971 = vmatpush1.bf16.msra.mxu0 %v2875
        %2972 = vmatprep.subr.bf16.mxu0 0
        %2973 = vmatpush1.bf16.msra.mxu0 0
        %2974 = vmatprep.subr.bf16.mxu0 0
        %2975 = vmatpush1.bf16.msra.mxu0 0
        %2976 = vmatprep.subr.bf16.mxu0 0
        %2977 = vmatpush1.bf16.msra.mxu0 0
        %2978 = vmatprep.subr.bf16.mxu0 0
        %2979 = vmatpush1.bf16.msra.mxu0 0
        %2980 = vmatprep.subr.bf16.mxu0 0
        %2981 = vmatpush1.bf16.msra.mxu0 0
        %2982 = vmatprep.subr.bf16.mxu0 0
        %2983 = vmatpush1.bf16.msra.mxu0 0
        %2984 = vmatprep.subr.bf16.mxu0 0
        %2985 = vmatpush1.bf16.msra.mxu0 0
        %2986 = vmatprep.subr.bf16.mxu0 0
        %2987 = vmatpush1.bf16.msra.mxu0 0
        %2988 = vmatprep.subr.bf16.mxu0 0
        %2989 = vmatpush1.bf16.msra.mxu0 0
        %2990 = vmatprep.subr.bf16.mxu0 0
        %2991 = vmatpush1.bf16.msra.mxu0 0
        %2992 = vmatprep.subr.bf16.mxu0 0
        %2993 = vmatpush1.bf16.msra.mxu0 0
        %2994 = vmatprep.subr.bf16.mxu0 0
        %2995 = vmatpush1.bf16.msra.mxu0 0
        %2996 = vmatprep.mubr.bf16.mxu0 0
        %2997 = vmatmul.mubr.bf16.gmra.mrb[0].mxu0 %v2962
        %v2998 = vpop.f32.mrb[0].mxu0
        %v2999 = vadd.f32 0.0, %v2998
        %v3000 = vpop.f32.mrb[0].mxu0
        %v3001 = vpop.f32.mrb[0].mxu0
        %v3002 = vadd.f32 0.0, %v3001
        %v3003 = vpop.f32.mrb[0].mxu0
        %3004 = vdwg.mxu0
        %v3005 = vpack.c.bf16 %v3002, %v2999
        %s3006 = scalar_lea.vmem %s7, 144
        %v3007 = vld [vmem:[%s3006] sm:$0xff]
        %v3008 = vld [vmem:[%s3006 + $0x8] sm:$0xf]
        %v3009 = vld [vmem:[%s3006 + $0xc] sm:$0xff]
        %v3010 = vld [vmem:[%s3006 + $0x14] sm:$0xf]
        %v3011 = vld [vmem:[%s3006 + $0x18] sm:$0xff]
        %v3012 = vld [vmem:[%s3006 + $0x20] sm:$0xf]
        %v3013 = vld [vmem:[%s3006 + $0x24] sm:$0xff]
        %v3014 = vld [vmem:[%s3006 + $0x2c] sm:$0xf]
        %v3015 = vld [vmem:[%s3006 + $0x30] sm:$0xff]
        %v3016 = vld [vmem:[%s3006 + $0x38] sm:$0xf]
        %v3017 = vld [vmem:[%s3006 + $0x3c] sm:$0xff]
        %v3018 = vld [vmem:[%s3006 + $0x44] sm:$0xf]
        %v3019 = vld [vmem:[%s3006 + $0x48] sm:$0xff]
        %v3020 = vld [vmem:[%s3006 + $0x50] sm:$0xf]
        %v3021 = vld [vmem:[%s3006 + $0x54] sm:$0xff]
        %v3022 = vld [vmem:[%s3006 + $0x5c] sm:$0xf]
        %v3023 = vld [vmem:[%s3006 + $0x60] sm:$0xff]
        %v3024 = vld [vmem:[%s3006 + $0x68] sm:$0xf]
        %v3025 = vld [vmem:[%s3006 + $0x6c] sm:$0xff]
        %v3026 = vld [vmem:[%s3006 + $0x74] sm:$0xf]
        %v3027 = vld [vmem:[%s3006 + $0x78] sm:$0xff]
        %v3028 = vld [vmem:[%s3006 + $0x80] sm:$0xf]
        %v3029 = vld [vmem:[%s3006 + $0x84] sm:$0xff]
        %v3030 = vld [vmem:[%s3006 + $0x8c] sm:$0xf]
        %v3055 = vunpack.c.l.b16 %v3007
        %v3056 = vunpack.c.h.b16 %v3007
        %v3057 = vunpack.c.l.b16 %v3008
        %v3058 = vunpack.c.l.b16 %v3009
        %v3059 = vunpack.c.h.b16 %v3009
        %v3060 = vunpack.c.l.b16 %v3010
        %v3061 = vunpack.c.l.b16 %v3011
        %v3062 = vunpack.c.h.b16 %v3011
        %v3063 = vunpack.c.l.b16 %v3012
        %v3064 = vunpack.c.l.b16 %v3013
        %v3065 = vunpack.c.h.b16 %v3013
        %v3066 = vunpack.c.l.b16 %v3014
        %v3067 = vunpack.c.l.b16 %v3015
        %v3068 = vunpack.c.h.b16 %v3015
        %v3069 = vunpack.c.l.b16 %v3016
        %v3070 = vunpack.c.l.b16 %v3017
        %v3071 = vunpack.c.h.b16 %v3017
        %v3072 = vunpack.c.l.b16 %v3018
        %v3073 = vunpack.c.l.b16 %v3019
        %v3074 = vunpack.c.h.b16 %v3019
        %v3075 = vunpack.c.l.b16 %v3020
        %v3076 = vunpack.c.l.b16 %v3021
        %v3077 = vunpack.c.h.b16 %v3021
        %v3078 = vunpack.c.l.b16 %v3022
        %v3079 = vunpack.c.l.b16 %v3023
        %v3080 = vunpack.c.h.b16 %v3023
        %v3081 = vunpack.c.l.b16 %v3024
        %v3082 = vunpack.c.l.b16 %v3025
        %v3083 = vunpack.c.h.b16 %v3025
        %v3084 = vunpack.c.l.b16 %v3026
        %v3085 = vunpack.c.l.b16 %v3027
        %v3086 = vunpack.c.h.b16 %v3027
        %v3087 = vunpack.c.l.b16 %v3028
        %v3088 = vunpack.c.l.b16 %v3029
        %v3089 = vunpack.c.h.b16 %v3029
        %v3090 = vunpack.c.l.b16 %v3030
        %v3091 = vpack.c.b16 %v3058, %v3055
        %v3092 = vpack.c.b16 %v3059, %v3056
        %v3093 = vpack.c.b16 %v3060, %v3057
        %v3094 = vpack.c.b16 %v3064, %v3061
        %v3095 = vpack.c.b16 %v3065, %v3062
        %v3096 = vpack.c.b16 %v3066, %v3063
        %v3097 = vpack.c.b16 %v3070, %v3067
        %v3098 = vpack.c.b16 %v3071, %v3068
        %v3099 = vpack.c.b16 %v3072, %v3069
        %v3100 = vpack.c.b16 %v3076, %v3073
        %v3101 = vpack.c.b16 %v3077, %v3074
        %v3102 = vpack.c.b16 %v3078, %v3075
        %v3103 = vpack.c.b16 %v3082, %v3079
        %v3104 = vpack.c.b16 %v3083, %v3080
        %v3105 = vpack.c.b16 %v3084, %v3081
        %v3106 = vpack.c.b16 %v3088, %v3085
        %v3107 = vpack.c.b16 %v3089, %v3086
        %v3108 = vpack.c.b16 %v3090, %v3087
        %vm3127 = vcmask 785408
        %v3129 = vsel %vm3127, %v3005, 0
        %3131 = vmatprep.subr.bf16.mxu0 %v3092
        %3132 = vmatpush1.bf16.msra.mxu0 %v3091
        %3133 = vmatprep.subr.bf16.mxu0 %v3095
        %3134 = vmatpush1.bf16.msra.mxu0 %v3094
        %3135 = vmatprep.subr.bf16.mxu0 %v3098
        %3136 = vmatpush1.bf16.msra.mxu0 %v3097
        %3137 = vmatprep.subr.bf16.mxu0 %v3101
        %3138 = vmatpush1.bf16.msra.mxu0 %v3100
        %3139 = vmatprep.subr.bf16.mxu0 %v3104
        %3140 = vmatpush1.bf16.msra.mxu0 %v3103
        %3141 = vmatprep.subr.bf16.mxu0 %v3107
        %3142 = vmatpush1.bf16.msra.mxu0 %v3106
        %3143 = vmatprep.subr.bf16.mxu0 0
        %3144 = vmatpush1.bf16.msra.mxu0 0
        %3145 = vmatprep.subr.bf16.mxu0 0
        %3146 = vmatpush1.bf16.msra.mxu0 0
        %3147 = vmatprep.subr.bf16.mxu0 0
        %3148 = vmatpush1.bf16.msra.mxu0 0
        %3149 = vmatprep.subr.bf16.mxu0 0
        %3150 = vmatpush1.bf16.msra.mxu0 0
        %3151 = vmatprep.subr.bf16.mxu0 0
        %3152 = vmatpush1.bf16.msra.mxu0 0
        %3153 = vmatprep.subr.bf16.mxu0 0
        %3154 = vmatpush1.bf16.msra.mxu0 0
        %3155 = vmatprep.subr.bf16.mxu0 0
        %3156 = vmatpush1.bf16.msra.mxu0 0
        %3157 = vmatprep.subr.bf16.mxu0 0
        %3158 = vmatpush1.bf16.msra.mxu0 0
        %3159 = vmatprep.subr.bf16.mxu0 0
        %3160 = vmatpush1.bf16.msra.mxu0 0
        %3161 = vmatprep.subr.bf16.mxu0 0
        %3162 = vmatpush1.bf16.msra.mxu0 0
        %3163 = vmatprep.mubr.bf16.mxu0 0
        %3164 = vmatmul.mubr.bf16.gmra.mrb[0].mxu0 %v3129
        %v3165 = vpop.f32.mrb[0].mxu0
        %v3166 = vadd.f32 0.0, %v3165
        %v3167 = vpop.f32.mrb[0].mxu0
        %v3168 = vadd.f32 0.0, %v3167
        %v3169 = vpop.f32.mrb[0].mxu0
        %v3170 = vadd.f32 0.0, %v3169
        %v3171 = vpop.f32.mrb[0].mxu0
        %v3172 = vadd.f32 0.0, %v3171
        %3173 = vdwg.mxu0
        %3174 = vmatprep.subr.bf16.mxu0 0
        %3175 = vmatpush1.bf16.msra.mxu0 %v3093
        %3176 = vmatprep.subr.bf16.mxu0 0
        %3177 = vmatpush1.bf16.msra.mxu0 %v3096
        %3178 = vmatprep.subr.bf16.mxu0 0
        %3179 = vmatpush1.bf16.msra.mxu0 %v3099
        %3180 = vmatprep.subr.bf16.mxu0 0
        %3181 = vmatpush1.bf16.msra.mxu0 %v3102
        %3182 = vmatprep.subr.bf16.mxu0 0
        %3183 = vmatpush1.bf16.msra.mxu0 %v3105
        %3184 = vmatprep.subr.bf16.mxu0 0
        %3185 = vmatpush1.bf16.msra.mxu0 %v3108
        %3186 = vmatprep.subr.bf16.mxu0 0
        %3187 = vmatpush1.bf16.msra.mxu0 0
        %3188 = vmatprep.subr.bf16.mxu0 0
        %3189 = vmatpush1.bf16.msra.mxu0 0
        %3190 = vmatprep.subr.bf16.mxu0 0
        %3191 = vmatpush1.bf16.msra.mxu0 0
        %3192 = vmatprep.subr.bf16.mxu0 0
        %3193 = vmatpush1.bf16.msra.mxu0 0
        %3194 = vmatprep.subr.bf16.mxu0 0
        %3195 = vmatpush1.bf16.msra.mxu0 0
        %3196 = vmatprep.subr.bf16.mxu0 0
        %3197 = vmatpush1.bf16.msra.mxu0 0
        %3198 = vmatprep.subr.bf16.mxu0 0
        %3199 = vmatpush1.bf16.msra.mxu0 0
        %3200 = vmatprep.subr.bf16.mxu0 0
        %3201 = vmatpush1.bf16.msra.mxu0 0
        %3202 = vmatprep.subr.bf16.mxu0 0
        %3203 = vmatpush1.bf16.msra.mxu0 0
        %3204 = vmatprep.subr.bf16.mxu0 0
        %3205 = vmatpush1.bf16.msra.mxu0 0
        %3206 = vmatprep.mubr.bf16.mxu0 0
        %3207 = vmatmul.mubr.bf16.gmra.mrb[0].mxu0 %v3129
        %v3208 = vpop.f32.mrb[0].mxu0
        %v3209 = vadd.f32 0.0, %v3208
        %v3210 = vpop.f32.mrb[0].mxu0
        %v3211 = vpop.f32.mrb[0].mxu0
        %v3212 = vadd.f32 0.0, %v3211
        %v3213 = vpop.f32.mrb[0].mxu0
        %3214 = vdwg.mxu0
        %v3239 = vunpack.c.l.b16 %v2929
        %v3240 = vunpack.c.h.b16 %v2929
        %v3241 = vunpack.c.l.b16 %v2930
        %v3242 = vunpack.c.l.b16 %v2931
        %v3243 = vunpack.c.h.b16 %v2931
        %v3244 = vunpack.c.l.b16 %v2932
        %v3245 = vunpack.c.l.b16 %v2933
        %v3246 = vunpack.c.h.b16 %v2933
        %v3247 = vunpack.c.l.b16 %v2934
        %v3248 = vunpack.c.l.b16 %v2935
        %v3249 = vunpack.c.h.b16 %v2935
        %v3250 = vunpack.c.l.b16 %v2936
        %v3251 = vunpack.c.l.b16 %v2937
        %v3252 = vunpack.c.h.b16 %v2937
        %v3253 = vunpack.c.l.b16 %v2938
        %v3254 = vunpack.c.l.b16 %v2939
        %v3255 = vunpack.c.h.b16 %v2939
        %v3256 = vunpack.c.l.b16 %v2940
        %v3257 = vunpack.c.l.b16 %v2941
        %v3258 = vunpack.c.h.b16 %v2941
        %v3259 = vunpack.c.l.b16 %v2942
        %v3260 = vunpack.c.l.b16 %v2943
        %v3261 = vunpack.c.h.b16 %v2943
        %v3262 = vunpack.c.l.b16 %v2944
        %v3263 = vunpack.c.l.b16 %v2945
        %v3264 = vunpack.c.h.b16 %v2945
        %v3265 = vunpack.c.l.b16 %v2946
        %v3266 = vunpack.c.l.b16 %v2947
        %v3267 = vunpack.c.h.b16 %v2947
        %v3268 = vunpack.c.l.b16 %v2948
        %v3269 = vunpack.c.l.b16 %v2949
        %v3270 = vunpack.c.h.b16 %v2949
        %v3271 = vunpack.c.l.b16 %v2950
        %v3272 = vunpack.c.l.b16 %v2951
        %v3273 = vunpack.c.h.b16 %v2951
        %v3274 = vunpack.c.l.b16 %v2952
        %v3275 = vpack.c.b16 %v3242, %v3239
        %v3276 = vpack.c.b16 %v3243, %v3240
        %v3277 = vpack.c.b16 %v3244, %v3241
        %v3278 = vpack.c.b16 %v3248, %v3245
        %v3279 = vpack.c.b16 %v3249, %v3246
        %v3280 = vpack.c.b16 %v3250, %v3247
        %v3281 = vpack.c.b16 %v3254, %v3251
        %v3282 = vpack.c.b16 %v3255, %v3252
        %v3283 = vpack.c.b16 %v3256, %v3253
        %v3284 = vpack.c.b16 %v3260, %v3257
        %v3285 = vpack.c.b16 %v3261, %v3258
        %v3286 = vpack.c.b16 %v3262, %v3259
        %v3287 = vpack.c.b16 %v3266, %v3263
        %v3288 = vpack.c.b16 %v3267, %v3264
        %v3289 = vpack.c.b16 %v3268, %v3265
        %v3290 = vpack.c.b16 %v3272, %v3269
        %v3291 = vpack.c.b16 %v3273, %v3270
        %v3292 = vpack.c.b16 %v3274, %v3271
        %v3312 = vsel %vm3127, %v2928, 0
        %3314 = vmatprep.subr.bf16.mxu0 %v3276
        %3315 = vmatpush1.bf16.msra.mxu0 %v3275
        %3316 = vmatprep.subr.bf16.mxu0 %v3279
        %3317 = vmatpush1.bf16.msra.mxu0 %v3278
        %3318 = vmatprep.subr.bf16.mxu0 %v3282
        %3319 = vmatpush1.bf16.msra.mxu0 %v3281
        %3320 = vmatprep.subr.bf16.mxu0 %v3285
        %3321 = vmatpush1.bf16.msra.mxu0 %v3284
        %3322 = vmatprep.subr.bf16.mxu0 %v3288
        %3323 = vmatpush1.bf16.msra.mxu0 %v3287
        %3324 = vmatprep.subr.bf16.mxu0 %v3291
        %3325 = vmatpush1.bf16.msra.mxu0 %v3290
        %3326 = vmatprep.subr.bf16.mxu0 0
        %3327 = vmatpush1.bf16.msra.mxu0 0
        %3328 = vmatprep.subr.bf16.mxu0 0
        %3329 = vmatpush1.bf16.msra.mxu0 0
        %3330 = vmatprep.subr.bf16.mxu0 0
        %3331 = vmatpush1.bf16.msra.mxu0 0
        %3332 = vmatprep.subr.bf16.mxu0 0
        %3333 = vmatpush1.bf16.msra.mxu0 0
        %3334 = vmatprep.subr.bf16.mxu0 0
        %3335 = vmatpush1.bf16.msra.mxu0 0
        %3336 = vmatprep.subr.bf16.mxu0 0
        %3337 = vmatpush1.bf16.msra.mxu0 0
        %3338 = vmatprep.subr.bf16.mxu0 0
        %3339 = vmatpush1.bf16.msra.mxu0 0
        %3340 = vmatprep.subr.bf16.mxu0 0
        %3341 = vmatpush1.bf16.msra.mxu0 0
        %3342 = vmatprep.subr.bf16.mxu0 0
        %3343 = vmatpush1.bf16.msra.mxu0 0
        %3344 = vmatprep.subr.bf16.mxu0 0
        %3345 = vmatpush1.bf16.msra.mxu0 0
        %3346 = vmatprep.mubr.bf16.mxu0 0
        %3347 = vmatmul.mubr.bf16.gmra.mrb[0].mxu0 %v3312
        %v3348 = vpop.f32.mrb[0].mxu0
        %v3349 = vadd.f32 %v3166, %v3348
        %v3350 = vpop.f32.mrb[0].mxu0
        %v3351 = vadd.f32 %v3168, %v3350
        %v3352 = vpop.f32.mrb[0].mxu0
        %v3353 = vadd.f32 %v3170, %v3352
        %v3354 = vpop.f32.mrb[0].mxu0
        %v3355 = vadd.f32 %v3172, %v3354
        %3356 = vdwg.mxu0
        %3357 = vmatprep.subr.bf16.mxu0 0
        %3358 = vmatpush1.bf16.msra.mxu0 %v3277
        %3359 = vmatprep.subr.bf16.mxu0 0
        %3360 = vmatpush1.bf16.msra.mxu0 %v3280
        %3361 = vmatprep.subr.bf16.mxu0 0
        %3362 = vmatpush1.bf16.msra.mxu0 %v3283
        %3363 = vmatprep.subr.bf16.mxu0 0
        %3364 = vmatpush1.bf16.msra.mxu0 %v3286
        %3365 = vmatprep.subr.bf16.mxu0 0
        %3366 = vmatpush1.bf16.msra.mxu0 %v3289
        %3367 = vmatprep.subr.bf16.mxu0 0
        %3368 = vmatpush1.bf16.msra.mxu0 %v3292
        %3369 = vmatprep.subr.bf16.mxu0 0
        %3370 = vmatpush1.bf16.msra.mxu0 0
        %3371 = vmatprep.subr.bf16.mxu0 0
        %3372 = vmatpush1.bf16.msra.mxu0 0
        %3373 = vmatprep.subr.bf16.mxu0 0
        %3374 = vmatpush1.bf16.msra.mxu0 0
        %3375 = vmatprep.subr.bf16.mxu0 0
        %3376 = vmatpush1.bf16.msra.mxu0 0
        %3377 = vmatprep.subr.bf16.mxu0 0
        %3378 = vmatpush1.bf16.msra.mxu0 0
        %3379 = vmatprep.subr.bf16.mxu0 0
        %3380 = vmatpush1.bf16.msra.mxu0 0
        %3381 = vmatprep.subr.bf16.mxu0 0
        %3382 = vmatpush1.bf16.msra.mxu0 0
        %3383 = vmatprep.subr.bf16.mxu0 0
        %3384 = vmatpush1.bf16.msra.mxu0 0
        %3385 = vmatprep.subr.bf16.mxu0 0
        %3386 = vmatpush1.bf16.msra.mxu0 0
        %3387 = vmatprep.subr.bf16.mxu0 0
        %3388 = vmatpush1.bf16.msra.mxu0 0
        %3389 = vmatprep.mubr.bf16.mxu0 0
        %3390 = vmatmul.mubr.bf16.gmra.mrb[0].mxu0 %v3312
        %v3391 = vpop.f32.mrb[0].mxu0
        %v3392 = vadd.f32 %v3209, %v3391
        %v3393 = vpop.f32.mrb[0].mxu0
        %v3394 = vpop.f32.mrb[0].mxu0
        %v3395 = vadd.f32 %v3212, %v3394
        %v3396 = vpop.f32.mrb[0].mxu0
        %3397 = vdwg.mxu0
        %s3398 = scalar_lea.vmem %s6, 16
        %v3399 = vld [vmem:[%s3398] sm:$0xf]
        %v3400 = vld [vmem:[%s3398 + $0x4] sm:$0xf]
        %v3403 = vunpack.c.l.b16 %v3399
        %v3404 = vunpack.c.l.b16 %v3400
        %v3405 = vpack.c.b16 %v3404, %v3403
        %v3407 = vsel %vm2883, %v3405, 0
        %3409 = vmatprep.subr.bf16.mxu0 0
        %3410 = vmatpush1.bf16.msra.mxu0 %v2872
        %3411 = vmatprep.subr.bf16.mxu0 0
        %3412 = vmatpush1.bf16.msra.mxu0 %v2873
        %3413 = vmatprep.subr.bf16.mxu0 0
        %3414 = vmatpush1.bf16.msra.mxu0 %v2874
        %3415 = vmatprep.subr.bf16.mxu0 0
        %3416 = vmatpush1.bf16.msra.mxu0 %v2875
        %3417 = vmatprep.subr.bf16.mxu0 0
        %3418 = vmatpush1.bf16.msra.mxu0 0
        %3419 = vmatprep.subr.bf16.mxu0 0
        %3420 = vmatpush1.bf16.msra.mxu0 0
        %3421 = vmatprep.subr.bf16.mxu0 0
        %3422 = vmatpush1.bf16.msra.mxu0 0
        %3423 = vmatprep.subr.bf16.mxu0 0
        %3424 = vmatpush1.bf16.msra.mxu0 0
        %3425 = vmatprep.subr.bf16.mxu0 0
        %3426 = vmatpush1.bf16.msra.mxu0 0
        %3427 = vmatprep.subr.bf16.mxu0 0
        %3428 = vmatpush1.bf16.msra.mxu0 0
        %3429 = vmatprep.subr.bf16.mxu0 0
        %3430 = vmatpush1.bf16.msra.mxu0 0
        %3431 = vmatprep.subr.bf16.mxu0 0
        %3432 = vmatpush1.bf16.msra.mxu0 0
        %3433 = vmatprep.subr.bf16.mxu0 0
        %3434 = vmatpush1.bf16.msra.mxu0 0
        %3435 = vmatprep.subr.bf16.mxu0 0
        %3436 = vmatpush1.bf16.msra.mxu0 0
        %3437 = vmatprep.subr.bf16.mxu0 0
        %3438 = vmatpush1.bf16.msra.mxu0 0
        %3439 = vmatprep.subr.bf16.mxu0 0
        %3440 = vmatpush1.bf16.msra.mxu0 0
        %3441 = vmatprep.mubr.bf16.mxu0 0
        %3442 = vmatmul.mubr.bf16.gmra.mrb[0].mxu0 %v3407
        %v3443 = vpop.f32.mrb[0].mxu0
        %v3444 = vadd.f32 0.0, %v3443
        %v3445 = vpop.f32.mrb[0].mxu0
        %v3446 = vpop.f32.mrb[0].mxu0
        %v3447 = vadd.f32 0.0, %v3446
        %v3448 = vpop.f32.mrb[0].mxu0
        %3449 = vdwg.mxu0
        %v3450 = vpack.c.bf16 %v3447, %v3444
        %s3451 = scalar_lea.vmem %s7, 288
        %v3452 = vld [vmem:[%s3451] sm:$0xff]
        %v3453 = vld [vmem:[%s3451 + $0x8] sm:$0xf]
        %v3454 = vld [vmem:[%s3451 + $0xc] sm:$0xff]
        %v3455 = vld [vmem:[%s3451 + $0x14] sm:$0xf]
        %v3456 = vld [vmem:[%s3451 + $0x18] sm:$0xff]
        %v3457 = vld [vmem:[%s3451 + $0x20] sm:$0xf]
        %v3458 = vld [vmem:[%s3451 + $0x24] sm:$0xff]
        %v3459 = vld [vmem:[%s3451 + $0x2c] sm:$0xf]
        %v3460 = vld [vmem:[%s3451 + $0x30] sm:$0xff]
        %v3461 = vld [vmem:[%s3451 + $0x38] sm:$0xf]
        %v3462 = vld [vmem:[%s3451 + $0x3c] sm:$0xff]
        %v3463 = vld [vmem:[%s3451 + $0x44] sm:$0xf]
        %v3464 = vld [vmem:[%s3451 + $0x48] sm:$0xff]
        %v3465 = vld [vmem:[%s3451 + $0x50] sm:$0xf]
        %v3466 = vld [vmem:[%s3451 + $0x54] sm:$0xff]
        %v3467 = vld [vmem:[%s3451 + $0x5c] sm:$0xf]
        %v3468 = vld [vmem:[%s3451 + $0x60] sm:$0xff]
        %v3469 = vld [vmem:[%s3451 + $0x68] sm:$0xf]
        %v3470 = vld [vmem:[%s3451 + $0x6c] sm:$0xff]
        %v3471 = vld [vmem:[%s3451 + $0x74] sm:$0xf]
        %v3472 = vld [vmem:[%s3451 + $0x78] sm:$0xff]
        %v3473 = vld [vmem:[%s3451 + $0x80] sm:$0xf]
        %v3474 = vld [vmem:[%s3451 + $0x84] sm:$0xff]
        %v3475 = vld [vmem:[%s3451 + $0x8c] sm:$0xf]
        %v3500 = vunpack.c.l.b16 %v3452
        %v3501 = vunpack.c.h.b16 %v3452
        %v3502 = vunpack.c.l.b16 %v3453
        %v3503 = vunpack.c.l.b16 %v3454
        %v3504 = vunpack.c.h.b16 %v3454
        %v3505 = vunpack.c.l.b16 %v3455
        %v3506 = vunpack.c.l.b16 %v3456
        %v3507 = vunpack.c.h.b16 %v3456
        %v3508 = vunpack.c.l.b16 %v3457
        %v3509 = vunpack.c.l.b16 %v3458
        %v3510 = vunpack.c.h.b16 %v3458
        %v3511 = vunpack.c.l.b16 %v3459
        %v3512 = vunpack.c.l.b16 %v3460
        %v3513 = vunpack.c.h.b16 %v3460
        %v3514 = vunpack.c.l.b16 %v3461
        %v3515 = vunpack.c.l.b16 %v3462
        %v3516 = vunpack.c.h.b16 %v3462
        %v3517 = vunpack.c.l.b16 %v3463
        %v3518 = vunpack.c.l.b16 %v3464
        %v3519 = vunpack.c.h.b16 %v3464
        %v3520 = vunpack.c.l.b16 %v3465
        %v3521 = vunpack.c.l.b16 %v3466
        %v3522 = vunpack.c.h.b16 %v3466
        %v3523 = vunpack.c.l.b16 %v3467
        %v3524 = vunpack.c.l.b16 %v3468
        %v3525 = vunpack.c.h.b16 %v3468
        %v3526 = vunpack.c.l.b16 %v3469
        %v3527 = vunpack.c.l.b16 %v3470
        %v3528 = vunpack.c.h.b16 %v3470
        %v3529 = vunpack.c.l.b16 %v3471
        %v3530 = vunpack.c.l.b16 %v3472
        %v3531 = vunpack.c.h.b16 %v3472
        %v3532 = vunpack.c.l.b16 %v3473
        %v3533 = vunpack.c.l.b16 %v3474
        %v3534 = vunpack.c.h.b16 %v3474
        %v3535 = vunpack.c.l.b16 %v3475
        %v3536 = vpack.c.b16 %v3503, %v3500
        %v3537 = vpack.c.b16 %v3504, %v3501
        %v3538 = vpack.c.b16 %v3505, %v3502
        %v3539 = vpack.c.b16 %v3509, %v3506
        %v3540 = vpack.c.b16 %v3510, %v3507
        %v3541 = vpack.c.b16 %v3511, %v3508
        %v3542 = vpack.c.b16 %v3515, %v3512
        %v3543 = vpack.c.b16 %v3516, %v3513
        %v3544 = vpack.c.b16 %v3517, %v3514
        %v3545 = vpack.c.b16 %v3521, %v3518
        %v3546 = vpack.c.b16 %v3522, %v3519
        %v3547 = vpack.c.b16 %v3523, %v3520
        %v3548 = vpack.c.b16 %v3527, %v3524
        %v3549 = vpack.c.b16 %v3528, %v3525
        %v3550 = vpack.c.b16 %v3529, %v3526
        %v3551 = vpack.c.b16 %v3533, %v3530
        %v3552 = vpack.c.b16 %v3534, %v3531
        %v3553 = vpack.c.b16 %v3535, %v3532
        %v3573 = vsel %vm3127, %v3450, 0
        %3575 = vmatprep.subr.bf16.mxu0 %v3537
        %3576 = vmatpush1.bf16.msra.mxu0 %v3536
        %3577 = vmatprep.subr.bf16.mxu0 %v3540
        %3578 = vmatpush1.bf16.msra.mxu0 %v3539
        %3579 = vmatprep.subr.bf16.mxu0 %v3543
        %3580 = vmatpush1.bf16.msra.mxu0 %v3542
        %3581 = vmatprep.subr.bf16.mxu0 %v3546
        %3582 = vmatpush1.bf16.msra.mxu0 %v3545
        %3583 = vmatprep.subr.bf16.mxu0 %v3549
        %3584 = vmatpush1.bf16.msra.mxu0 %v3548
        %3585 = vmatprep.subr.bf16.mxu0 %v3552
        %3586 = vmatpush1.bf16.msra.mxu0 %v3551
        %3587 = vmatprep.subr.bf16.mxu0 0
        %3588 = vmatpush1.bf16.msra.mxu0 0
        %3589 = vmatprep.subr.bf16.mxu0 0
        %3590 = vmatpush1.bf16.msra.mxu0 0
        %3591 = vmatprep.subr.bf16.mxu0 0
        %3592 = vmatpush1.bf16.msra.mxu0 0
        %3593 = vmatprep.subr.bf16.mxu0 0
        %3594 = vmatpush1.bf16.msra.mxu0 0
        %3595 = vmatprep.subr.bf16.mxu0 0
        %3596 = vmatpush1.bf16.msra.mxu0 0
        %3597 = vmatprep.subr.bf16.mxu0 0
        %3598 = vmatpush1.bf16.msra.mxu0 0
        %3599 = vmatprep.subr.bf16.mxu0 0
        %3600 = vmatpush1.bf16.msra.mxu0 0
        %3601 = vmatprep.subr.bf16.mxu0 0
        %3602 = vmatpush1.bf16.msra.mxu0 0
        %3603 = vmatprep.subr.bf16.mxu0 0
        %3604 = vmatpush1.bf16.msra.mxu0 0
        %3605 = vmatprep.subr.bf16.mxu0 0
        %3606 = vmatpush1.bf16.msra.mxu0 0
        %3607 = vmatprep.mubr.bf16.mxu0 0
        %3608 = vmatmul.mubr.bf16.gmra.mrb[0].mxu0 %v3573
        %v3609 = vpop.f32.mrb[0].mxu0
        %v3610 = vadd.f32 0.0, %v3609
        %v3611 = vpop.f32.mrb[0].mxu0
        %v3612 = vadd.f32 0.0, %v3611
        %v3613 = vpop.f32.mrb[0].mxu0
        %v3614 = vadd.f32 0.0, %v3613
        %v3615 = vpop.f32.mrb[0].mxu0
        %v3616 = vadd.f32 0.0, %v3615
        %3617 = vdwg.mxu0
        %3618 = vmatprep.subr.bf16.mxu0 0
        %3619 = vmatpush1.bf16.msra.mxu0 %v3538
        %3620 = vmatprep.subr.bf16.mxu0 0
        %3621 = vmatpush1.bf16.msra.mxu0 %v3541
        %3622 = vmatprep.subr.bf16.mxu0 0
        %3623 = vmatpush1.bf16.msra.mxu0 %v3544
        %3624 = vmatprep.subr.bf16.mxu0 0
        %3625 = vmatpush1.bf16.msra.mxu0 %v3547
        %3626 = vmatprep.subr.bf16.mxu0 0
        %3627 = vmatpush1.bf16.msra.mxu0 %v3550
        %3628 = vmatprep.subr.bf16.mxu0 0
        %3629 = vmatpush1.bf16.msra.mxu0 %v3553
        %3630 = vmatprep.subr.bf16.mxu0 0
        %3631 = vmatpush1.bf16.msra.mxu0 0
        %3632 = vmatprep.subr.bf16.mxu0 0
        %3633 = vmatpush1.bf16.msra.mxu0 0
        %3634 = vmatprep.subr.bf16.mxu0 0
        %3635 = vmatpush1.bf16.msra.mxu0 0
        %3636 = vmatprep.subr.bf16.mxu0 0
        %3637 = vmatpush1.bf16.msra.mxu0 0
        %3638 = vmatprep.subr.bf16.mxu0 0
        %3639 = vmatpush1.bf16.msra.mxu0 0
        %3640 = vmatprep.subr.bf16.mxu0 0
        %3641 = vmatpush1.bf16.msra.mxu0 0
        %3642 = vmatprep.subr.bf16.mxu0 0
        %3643 = vmatpush1.bf16.msra.mxu0 0
        %3644 = vmatprep.subr.bf16.mxu0 0
        %3645 = vmatpush1.bf16.msra.mxu0 0
        %3646 = vmatprep.subr.bf16.mxu0 0
        %3647 = vmatpush1.bf16.msra.mxu0 0
        %3648 = vmatprep.subr.bf16.mxu0 0
        %3649 = vmatpush1.bf16.msra.mxu0 0
        %3650 = vmatprep.mubr.bf16.mxu0 0
        %3651 = vmatmul.mubr.bf16.gmra.mrb[0].mxu0 %v3573
        %v3652 = vpop.f32.mrb[0].mxu0
        %v3653 = vadd.f32 0.0, %v3652
        %v3654 = vpop.f32.mrb[0].mxu0
        %v3655 = vpop.f32.mrb[0].mxu0
        %v3656 = vadd.f32 0.0, %v3655
        %v3657 = vpop.f32.mrb[0].mxu0
        %3658 = vdwg.mxu0
        %v3659 = vadd.f32 %v3349, %v3610
        %v3660 = vadd.f32 %v3351, %v3612
        %v3661 = vadd.f32 %v3392, %v3653
        %v3662 = vadd.f32 %v3353, %v3614
        %v3663 = vadd.f32 %v3355, %v3616
        %v3664 = vadd.f32 %v3395, %v3656
        %s3665 = scalar_lea.vmem %s6, 24
        %v3666 = vld [vmem:[%s3665] sm:$0xf]
        %v3667 = vld [vmem:[%s3665 + $0x4] sm:$0xf]
        %v3670 = vunpack.c.l.b16 %v3666
        %v3671 = vunpack.c.l.b16 %v3667
        %v3672 = vpack.c.b16 %v3671, %v3670
        %v3674 = vsel %vm2883, %v3672, 0
        %3676 = vmatprep.subr.bf16.mxu0 0
        %3677 = vmatpush1.bf16.msra.mxu0 %v2872
        %3678 = vmatprep.subr.bf16.mxu0 0
        %3679 = vmatpush1.bf16.msra.mxu0 %v2873
        %3680 = vmatprep.subr.bf16.mxu0 0
        %3681 = vmatpush1.bf16.msra.mxu0 %v2874
        %3682 = vmatprep.subr.bf16.mxu0 0
        %3683 = vmatpush1.bf16.msra.mxu0 %v2875
        %3684 = vmatprep.subr.bf16.mxu0 0
        %3685 = vmatpush1.bf16.msra.mxu0 0
        %3686 = vmatprep.subr.bf16.mxu0 0
        %3687 = vmatpush1.bf16.msra.mxu0 0
        %3688 = vmatprep.subr.bf16.mxu0 0
        %3689 = vmatpush1.bf16.msra.mxu0 0
        %3690 = vmatprep.subr.bf16.mxu0 0
        %3691 = vmatpush1.bf16.msra.mxu0 0
        %3692 = vmatprep.subr.bf16.mxu0 0
        %3693 = vmatpush1.bf16.msra.mxu0 0
        %3694 = vmatprep.subr.bf16.mxu0 0
        %3695 = vmatpush1.bf16.msra.mxu0 0
        %3696 = vmatprep.subr.bf16.mxu0 0
        %3697 = vmatpush1.bf16.msra.mxu0 0
        %3698 = vmatprep.subr.bf16.mxu0 0
        %3699 = vmatpush1.bf16.msra.mxu0 0
        %3700 = vmatprep.subr.bf16.mxu0 0
        %3701 = vmatpush1.bf16.msra.mxu0 0
        %3702 = vmatprep.subr.bf16.mxu0 0
        %3703 = vmatpush1.bf16.msra.mxu0 0
        %3704 = vmatprep.subr.bf16.mxu0 0
        %3705 = vmatpush1.bf16.msra.mxu0 0
        %3706 = vmatprep.subr.bf16.mxu0 0
        %3707 = vmatpush1.bf16.msra.mxu0 0
        %3708 = vmatprep.mubr.bf16.mxu0 0
        %3709 = vmatmul.mubr.bf16.gmra.mrb[0].mxu0 %v3674
        %v3710 = vpop.f32.mrb[0].mxu0
        %v3711 = vadd.f32 0.0, %v3710
        %v3712 = vpop.f32.mrb[0].mxu0
        %v3713 = vpop.f32.mrb[0].mxu0
        %v3714 = vadd.f32 0.0, %v3713
        %v3715 = vpop.f32.mrb[0].mxu0
        %3716 = vdwg.mxu0
        %v3717 = vpack.c.bf16 %v3714, %v3711
        %s3718 = scalar_lea.vmem %s7, 432
        %v3719 = vld [vmem:[%s3718] sm:$0xff]
        %v3720 = vld [vmem:[%s3718 + $0x8] sm:$0xf]
        %v3721 = vld [vmem:[%s3718 + $0xc] sm:$0xff]
        %v3722 = vld [vmem:[%s3718 + $0x14] sm:$0xf]
        %v3723 = vld [vmem:[%s3718 + $0x18] sm:$0xff]
        %v3724 = vld [vmem:[%s3718 + $0x20] sm:$0xf]
        %v3725 = vld [vmem:[%s3718 + $0x24] sm:$0xff]
        %v3726 = vld [vmem:[%s3718 + $0x2c] sm:$0xf]
        %v3727 = vld [vmem:[%s3718 + $0x30] sm:$0xff]
        %v3728 = vld [vmem:[%s3718 + $0x38] sm:$0xf]
        %v3729 = vld [vmem:[%s3718 + $0x3c] sm:$0xff]
        %v3730 = vld [vmem:[%s3718 + $0x44] sm:$0xf]
        %v3731 = vld [vmem:[%s3718 + $0x48] sm:$0xff]
        %v3732 = vld [vmem:[%s3718 + $0x50] sm:$0xf]
        %v3733 = vld [vmem:[%s3718 + $0x54] sm:$0xff]
        %v3734 = vld [vmem:[%s3718 + $0x5c] sm:$0xf]
        %v3735 = vld [vmem:[%s3718 + $0x60] sm:$0xff]
        %v3736 = vld [vmem:[%s3718 + $0x68] sm:$0xf]
        %v3737 = vld [vmem:[%s3718 + $0x6c] sm:$0xff]
        %v3738 = vld [vmem:[%s3718 + $0x74] sm:$0xf]
        %v3739 = vld [vmem:[%s3718 + $0x78] sm:$0xff]
        %v3740 = vld [vmem:[%s3718 + $0x80] sm:$0xf]
        %v3741 = vld [vmem:[%s3718 + $0x84] sm:$0xff]
        %v3742 = vld [vmem:[%s3718 + $0x8c] sm:$0xf]
        %v3767 = vunpack.c.l.b16 %v3719
        %v3768 = vunpack.c.h.b16 %v3719
        %v3769 = vunpack.c.l.b16 %v3720
        %v3770 = vunpack.c.l.b16 %v3721
        %v3771 = vunpack.c.h.b16 %v3721
        %v3772 = vunpack.c.l.b16 %v3722
        %v3773 = vunpack.c.l.b16 %v3723
        %v3774 = vunpack.c.h.b16 %v3723
        %v3775 = vunpack.c.l.b16 %v3724
        %v3776 = vunpack.c.l.b16 %v3725
        %v3777 = vunpack.c.h.b16 %v3725
        %v3778 = vunpack.c.l.b16 %v3726
        %v3779 = vunpack.c.l.b16 %v3727
        %v3780 = vunpack.c.h.b16 %v3727
        %v3781 = vunpack.c.l.b16 %v3728
        %v3782 = vunpack.c.l.b16 %v3729
        %v3783 = vunpack.c.h.b16 %v3729
        %v3784 = vunpack.c.l.b16 %v3730
        %v3785 = vunpack.c.l.b16 %v3731
        %v3786 = vunpack.c.h.b16 %v3731
        %v3787 = vunpack.c.l.b16 %v3732
        %v3788 = vunpack.c.l.b16 %v3733
        %v3789 = vunpack.c.h.b16 %v3733
        %v3790 = vunpack.c.l.b16 %v3734
        %v3791 = vunpack.c.l.b16 %v3735
        %v3792 = vunpack.c.h.b16 %v3735
        %v3793 = vunpack.c.l.b16 %v3736
        %v3794 = vunpack.c.l.b16 %v3737
        %v3795 = vunpack.c.h.b16 %v3737
        %v3796 = vunpack.c.l.b16 %v3738
        %v3797 = vunpack.c.l.b16 %v3739
        %v3798 = vunpack.c.h.b16 %v3739
        %v3799 = vunpack.c.l.b16 %v3740
        %v3800 = vunpack.c.l.b16 %v3741
        %v3801 = vunpack.c.h.b16 %v3741
        %v3802 = vunpack.c.l.b16 %v3742
        %v3803 = vpack.c.b16 %v3770, %v3767
        %v3804 = vpack.c.b16 %v3771, %v3768
        %v3805 = vpack.c.b16 %v3772, %v3769
        %v3806 = vpack.c.b16 %v3776, %v3773
        %v3807 = vpack.c.b16 %v3777, %v3774
        %v3808 = vpack.c.b16 %v3778, %v3775
        %v3809 = vpack.c.b16 %v3782, %v3779
        %v3810 = vpack.c.b16 %v3783, %v3780
        %v3811 = vpack.c.b16 %v3784, %v3781
        %v3812 = vpack.c.b16 %v3788, %v3785
        %v3813 = vpack.c.b16 %v3789, %v3786
        %v3814 = vpack.c.b16 %v3790, %v3787
        %v3815 = vpack.c.b16 %v3794, %v3791
        %v3816 = vpack.c.b16 %v3795, %v3792
        %v3817 = vpack.c.b16 %v3796, %v3793
        %v3818 = vpack.c.b16 %v3800, %v3797
        %v3819 = vpack.c.b16 %v3801, %v3798
        %v3820 = vpack.c.b16 %v3802, %v3799
        %v3840 = vsel %vm3127, %v3717, 0
        %3842 = vmatprep.subr.bf16.mxu0 %v3804
        %3843 = vmatpush1.bf16.msra.mxu0 %v3803
        %3844 = vmatprep.subr.bf16.mxu0 %v3807
        %3845 = vmatpush1.bf16.msra.mxu0 %v3806
        %3846 = vmatprep.subr.bf16.mxu0 %v3810
        %3847 = vmatpush1.bf16.msra.mxu0 %v3809
        %3848 = vmatprep.subr.bf16.mxu0 %v3813
        %3849 = vmatpush1.bf16.msra.mxu0 %v3812
        %3850 = vmatprep.subr.bf16.mxu0 %v3816
        %3851 = vmatpush1.bf16.msra.mxu0 %v3815
        %3852 = vmatprep.subr.bf16.mxu0 %v3819
        %3853 = vmatpush1.bf16.msra.mxu0 %v3818
        %3854 = vmatprep.subr.bf16.mxu0 0
        %3855 = vmatpush1.bf16.msra.mxu0 0
        %3856 = vmatprep.subr.bf16.mxu0 0
        %3857 = vmatpush1.bf16.msra.mxu0 0
        %3858 = vmatprep.subr.bf16.mxu0 0
        %3859 = vmatpush1.bf16.msra.mxu0 0
        %3860 = vmatprep.subr.bf16.mxu0 0
        %3861 = vmatpush1.bf16.msra.mxu0 0
        %3862 = vmatprep.subr.bf16.mxu0 0
        %3863 = vmatpush1.bf16.msra.mxu0 0
        %3864 = vmatprep.subr.bf16.mxu0 0
        %3865 = vmatpush1.bf16.msra.mxu0 0
        %3866 = vmatprep.subr.bf16.mxu0 0
        %3867 = vmatpush1.bf16.msra.mxu0 0
        %3868 = vmatprep.subr.bf16.mxu0 0
        %3869 = vmatpush1.bf16.msra.mxu0 0
        %3870 = vmatprep.subr.bf16.mxu0 0
        %3871 = vmatpush1.bf16.msra.mxu0 0
        %3872 = vmatprep.subr.bf16.mxu0 0
        %3873 = vmatpush1.bf16.msra.mxu0 0
        %3874 = vmatprep.mubr.bf16.mxu0 0
        %3875 = vmatmul.mubr.bf16.gmra.mrb[0].mxu0 %v3840
        %v3876 = vpop.f32.mrb[0].mxu0
        %v3877 = vadd.f32 0.0, %v3876
        %v3878 = vpop.f32.mrb[0].mxu0
        %v3879 = vadd.f32 0.0, %v3878
        %v3880 = vpop.f32.mrb[0].mxu0
        %v3881 = vadd.f32 0.0, %v3880
        %v3882 = vpop.f32.mrb[0].mxu0
        %v3883 = vadd.f32 0.0, %v3882
        %3884 = vdwg.mxu0
        %3885 = vmatprep.subr.bf16.mxu0 0
        %3886 = vmatpush1.bf16.msra.mxu0 %v3805
        %3887 = vmatprep.subr.bf16.mxu0 0
        %3888 = vmatpush1.bf16.msra.mxu0 %v3808
        %3889 = vmatprep.subr.bf16.mxu0 0
        %3890 = vmatpush1.bf16.msra.mxu0 %v3811
        %3891 = vmatprep.subr.bf16.mxu0 0
        %3892 = vmatpush1.bf16.msra.mxu0 %v3814
        %3893 = vmatprep.subr.bf16.mxu0 0
        %3894 = vmatpush1.bf16.msra.mxu0 %v3817
        %3895 = vmatprep.subr.bf16.mxu0 0
        %3896 = vmatpush1.bf16.msra.mxu0 %v3820
        %3897 = vmatprep.subr.bf16.mxu0 0
        %3898 = vmatpush1.bf16.msra.mxu0 0
        %3899 = vmatprep.subr.bf16.mxu0 0
        %3900 = vmatpush1.bf16.msra.mxu0 0
        %3901 = vmatprep.subr.bf16.mxu0 0
        %3902 = vmatpush1.bf16.msra.mxu0 0
        %3903 = vmatprep.subr.bf16.mxu0 0
        %3904 = vmatpush1.bf16.msra.mxu0 0
        %3905 = vmatprep.subr.bf16.mxu0 0
        %3906 = vmatpush1.bf16.msra.mxu0 0
        %3907 = vmatprep.subr.bf16.mxu0 0
        %3908 = vmatpush1.bf16.msra.mxu0 0
        %3909 = vmatprep.subr.bf16.mxu0 0
        %3910 = vmatpush1.bf16.msra.mxu0 0
        %3911 = vmatprep.subr.bf16.mxu0 0
        %3912 = vmatpush1.bf16.msra.mxu0 0
        %3913 = vmatprep.subr.bf16.mxu0 0
        %3914 = vmatpush1.bf16.msra.mxu0 0
        %3915 = vmatprep.subr.bf16.mxu0 0
        %3916 = vmatpush1.bf16.msra.mxu0 0
        %3917 = vmatprep.mubr.bf16.mxu0 0
        %3918 = vmatmul.mubr.bf16.gmra.mrb[0].mxu0 %v3840
        %v3919 = vpop.f32.mrb[0].mxu0
        %v3920 = vadd.f32 0.0, %v3919
        %v3921 = vpop.f32.mrb[0].mxu0
        %v3922 = vpop.f32.mrb[0].mxu0
        %v3923 = vadd.f32 0.0, %v3922
        %v3924 = vpop.f32.mrb[0].mxu0
        %3925 = vdwg.mxu0
        %v3926 = vadd.f32 %v3659, %v3877
        %v3927 = vadd.f32 %v3660, %v3879
        %v3928 = vadd.f32 %v3661, %v3920
        %v3929 = vadd.f32 %v3662, %v3881
        %v3930 = vadd.f32 %v3663, %v3883
        %v3931 = vadd.f32 %v3664, %v3923
        %s3932 = scalar_lea.vmem %s6, 32
        %v3933 = vld [vmem:[%s3932] sm:$0xf]
        %v3934 = vld [vmem:[%s3932 + $0x4] sm:$0xf]
        %v3937 = vunpack.c.l.b16 %v3933
        %v3938 = vunpack.c.l.b16 %v3934
        %v3939 = vpack.c.b16 %v3938, %v3937
        %v3941 = vsel %vm2883, %v3939, 0
        %3943 = vmatprep.subr.bf16.mxu0 0
        %3944 = vmatpush1.bf16.msra.mxu0 %v2872
        %3945 = vmatprep.subr.bf16.mxu0 0
        %3946 = vmatpush1.bf16.msra.mxu0 %v2873
        %3947 = vmatprep.subr.bf16.mxu0 0
        %3948 = vmatpush1.bf16.msra.mxu0 %v2874
        %3949 = vmatprep.subr.bf16.mxu0 0
        %3950 = vmatpush1.bf16.msra.mxu0 %v2875
        %3951 = vmatprep.subr.bf16.mxu0 0
        %3952 = vmatpush1.bf16.msra.mxu0 0
        %3953 = vmatprep.subr.bf16.mxu0 0
        %3954 = vmatpush1.bf16.msra.mxu0 0
        %3955 = vmatprep.subr.bf16.mxu0 0
        %3956 = vmatpush1.bf16.msra.mxu0 0
        %3957 = vmatprep.subr.bf16.mxu0 0
        %3958 = vmatpush1.bf16.msra.mxu0 0
        %3959 = vmatprep.subr.bf16.mxu0 0
        %3960 = vmatpush1.bf16.msra.mxu0 0
        %3961 = vmatprep.subr.bf16.mxu0 0
        %3962 = vmatpush1.bf16.msra.mxu0 0
        %3963 = vmatprep.subr.bf16.mxu0 0
        %3964 = vmatpush1.bf16.msra.mxu0 0
        %3965 = vmatprep.subr.bf16.mxu0 0
        %3966 = vmatpush1.bf16.msra.mxu0 0
        %3967 = vmatprep.subr.bf16.mxu0 0
        %3968 = vmatpush1.bf16.msra.mxu0 0
        %3969 = vmatprep.subr.bf16.mxu0 0
        %3970 = vmatpush1.bf16.msra.mxu0 0
        %3971 = vmatprep.subr.bf16.mxu0 0
        %3972 = vmatpush1.bf16.msra.mxu0 0
        %3973 = vmatprep.subr.bf16.mxu0 0
        %3974 = vmatpush1.bf16.msra.mxu0 0
        %3975 = vmatprep.mubr.bf16.mxu0 0
        %3976 = vmatmul.mubr.bf16.gmra.mrb[0].mxu0 %v3941
        %v3977 = vpop.f32.mrb[0].mxu0
        %v3978 = vadd.f32 0.0, %v3977
        %v3979 = vpop.f32.mrb[0].mxu0
        %v3980 = vpop.f32.mrb[0].mxu0
        %v3981 = vadd.f32 0.0, %v3980
        %v3982 = vpop.f32.mrb[0].mxu0
        %3983 = vdwg.mxu0
        %v3984 = vpack.c.bf16 %v3981, %v3978
        %s3985 = scalar_lea.vmem %s7, 576
        %v3986 = vld [vmem:[%s3985] sm:$0xff]
        %v3987 = vld [vmem:[%s3985 + $0x8] sm:$0xf]
        %v3988 = vld [vmem:[%s3985 + $0xc] sm:$0xff]
        %v3989 = vld [vmem:[%s3985 + $0x14] sm:$0xf]
        %v3990 = vld [vmem:[%s3985 + $0x18] sm:$0xff]
        %v3991 = vld [vmem:[%s3985 + $0x20] sm:$0xf]
        %v3992 = vld [vmem:[%s3985 + $0x24] sm:$0xff]
        %v3993 = vld [vmem:[%s3985 + $0x2c] sm:$0xf]
        %v3994 = vld [vmem:[%s3985 + $0x30] sm:$0xff]
        %v3995 = vld [vmem:[%s3985 + $0x38] sm:$0xf]
        %v3996 = vld [vmem:[%s3985 + $0x3c] sm:$0xff]
        %v3997 = vld [vmem:[%s3985 + $0x44] sm:$0xf]
        %v3998 = vld [vmem:[%s3985 + $0x48] sm:$0xff]
        %v3999 = vld [vmem:[%s3985 + $0x50] sm:$0xf]
        %v4000 = vld [vmem:[%s3985 + $0x54] sm:$0xff]
        %v4001 = vld [vmem:[%s3985 + $0x5c] sm:$0xf]
        %v4002 = vld [vmem:[%s3985 + $0x60] sm:$0xff]
        %v4003 = vld [vmem:[%s3985 + $0x68] sm:$0xf]
        %v4004 = vld [vmem:[%s3985 + $0x6c] sm:$0xff]
        %v4005 = vld [vmem:[%s3985 + $0x74] sm:$0xf]
        %v4006 = vld [vmem:[%s3985 + $0x78] sm:$0xff]
        %v4007 = vld [vmem:[%s3985 + $0x80] sm:$0xf]
        %v4008 = vld [vmem:[%s3985 + $0x84] sm:$0xff]
        %v4009 = vld [vmem:[%s3985 + $0x8c] sm:$0xf]
        %v4034 = vunpack.c.l.b16 %v3986
        %v4035 = vunpack.c.h.b16 %v3986
        %v4036 = vunpack.c.l.b16 %v3987
        %v4037 = vunpack.c.l.b16 %v3988
        %v4038 = vunpack.c.h.b16 %v3988
        %v4039 = vunpack.c.l.b16 %v3989
        %v4040 = vunpack.c.l.b16 %v3990
        %v4041 = vunpack.c.h.b16 %v3990
        %v4042 = vunpack.c.l.b16 %v3991
        %v4043 = vunpack.c.l.b16 %v3992
        %v4044 = vunpack.c.h.b16 %v3992
        %v4045 = vunpack.c.l.b16 %v3993
        %v4046 = vunpack.c.l.b16 %v3994
        %v4047 = vunpack.c.h.b16 %v3994
        %v4048 = vunpack.c.l.b16 %v3995
        %v4049 = vunpack.c.l.b16 %v3996
        %v4050 = vunpack.c.h.b16 %v3996
        %v4051 = vunpack.c.l.b16 %v3997
        %v4052 = vunpack.c.l.b16 %v3998
        %v4053 = vunpack.c.h.b16 %v3998
        %v4054 = vunpack.c.l.b16 %v3999
        %v4055 = vunpack.c.l.b16 %v4000
        %v4056 = vunpack.c.h.b16 %v4000
        %v4057 = vunpack.c.l.b16 %v4001
        %v4058 = vunpack.c.l.b16 %v4002
        %v4059 = vunpack.c.h.b16 %v4002
        %v4060 = vunpack.c.l.b16 %v4003
        %v4061 = vunpack.c.l.b16 %v4004
        %v4062 = vunpack.c.h.b16 %v4004
        %v4063 = vunpack.c.l.b16 %v4005
        %v4064 = vunpack.c.l.b16 %v4006
        %v4065 = vunpack.c.h.b16 %v4006
        %v4066 = vunpack.c.l.b16 %v4007
        %v4067 = vunpack.c.l.b16 %v4008
        %v4068 = vunpack.c.h.b16 %v4008
        %v4069 = vunpack.c.l.b16 %v4009
        %v4070 = vpack.c.b16 %v4037, %v4034
        %v4071 = vpack.c.b16 %v4038, %v4035
        %v4072 = vpack.c.b16 %v4039, %v4036
        %v4073 = vpack.c.b16 %v4043, %v4040
        %v4074 = vpack.c.b16 %v4044, %v4041
        %v4075 = vpack.c.b16 %v4045, %v4042
        %v4076 = vpack.c.b16 %v4049, %v4046
        %v4077 = vpack.c.b16 %v4050, %v4047
        %v4078 = vpack.c.b16 %v4051, %v4048
        %v4079 = vpack.c.b16 %v4055, %v4052
        %v4080 = vpack.c.b16 %v4056, %v4053
        %v4081 = vpack.c.b16 %v4057, %v4054
        %v4082 = vpack.c.b16 %v4061, %v4058
        %v4083 = vpack.c.b16 %v4062, %v4059
        %v4084 = vpack.c.b16 %v4063, %v4060
        %v4085 = vpack.c.b16 %v4067, %v4064
        %v4086 = vpack.c.b16 %v4068, %v4065
        %v4087 = vpack.c.b16 %v4069, %v4066
        %v4107 = vsel %vm3127, %v3984, 0
        %4109 = vmatprep.subr.bf16.mxu0 %v4071
        %4110 = vmatpush1.bf16.msra.mxu0 %v4070
        %4111 = vmatprep.subr.bf16.mxu0 %v4074
        %4112 = vmatpush1.bf16.msra.mxu0 %v4073
        %4113 = vmatprep.subr.bf16.mxu0 %v4077
        %4114 = vmatpush1.bf16.msra.mxu0 %v4076
        %4115 = vmatprep.subr.bf16.mxu0 %v4080
        %4116 = vmatpush1.bf16.msra.mxu0 %v4079
        %4117 = vmatprep.subr.bf16.mxu0 %v4083
        %4118 = vmatpush1.bf16.msra.mxu0 %v4082
        %4119 = vmatprep.subr.bf16.mxu0 %v4086
        %4120 = vmatpush1.bf16.msra.mxu0 %v4085
        %4121 = vmatprep.subr.bf16.mxu0 0
        %4122 = vmatpush1.bf16.msra.mxu0 0
        %4123 = vmatprep.subr.bf16.mxu0 0
        %4124 = vmatpush1.bf16.msra.mxu0 0
        %4125 = vmatprep.subr.bf16.mxu0 0
        %4126 = vmatpush1.bf16.msra.mxu0 0
        %4127 = vmatprep.subr.bf16.mxu0 0
        %4128 = vmatpush1.bf16.msra.mxu0 0
        %4129 = vmatprep.subr.bf16.mxu0 0
        %4130 = vmatpush1.bf16.msra.mxu0 0
        %4131 = vmatprep.subr.bf16.mxu0 0
        %4132 = vmatpush1.bf16.msra.mxu0 0
        %4133 = vmatprep.subr.bf16.mxu0 0
        %4134 = vmatpush1.bf16.msra.mxu0 0
        %4135 = vmatprep.subr.bf16.mxu0 0
        %4136 = vmatpush1.bf16.msra.mxu0 0
        %4137 = vmatprep.subr.bf16.mxu0 0
        %4138 = vmatpush1.bf16.msra.mxu0 0
        %4139 = vmatprep.subr.bf16.mxu0 0
        %4140 = vmatpush1.bf16.msra.mxu0 0
        %4141 = vmatprep.mubr.bf16.mxu0 0
        %4142 = vmatmul.mubr.bf16.gmra.mrb[0].mxu0 %v4107
        %v4143 = vpop.f32.mrb[0].mxu0
        %v4144 = vadd.f32 0.0, %v4143
        %v4145 = vpop.f32.mrb[0].mxu0
        %v4146 = vadd.f32 0.0, %v4145
        %v4147 = vpop.f32.mrb[0].mxu0
        %v4148 = vadd.f32 0.0, %v4147
        %v4149 = vpop.f32.mrb[0].mxu0
        %v4150 = vadd.f32 0.0, %v4149
        %4151 = vdwg.mxu0
        %4152 = vmatprep.subr.bf16.mxu0 0
        %4153 = vmatpush1.bf16.msra.mxu0 %v4072
        %4154 = vmatprep.subr.bf16.mxu0 0
        %4155 = vmatpush1.bf16.msra.mxu0 %v4075
        %4156 = vmatprep.subr.bf16.mxu0 0
        %4157 = vmatpush1.bf16.msra.mxu0 %v4078
        %4158 = vmatprep.subr.bf16.mxu0 0
        %4159 = vmatpush1.bf16.msra.mxu0 %v4081
        %4160 = vmatprep.subr.bf16.mxu0 0
        %4161 = vmatpush1.bf16.msra.mxu0 %v4084
        %4162 = vmatprep.subr.bf16.mxu0 0
        %4163 = vmatpush1.bf16.msra.mxu0 %v4087
        %4164 = vmatprep.subr.bf16.mxu0 0
        %4165 = vmatpush1.bf16.msra.mxu0 0
        %4166 = vmatprep.subr.bf16.mxu0 0
        %4167 = vmatpush1.bf16.msra.mxu0 0
        %4168 = vmatprep.subr.bf16.mxu0 0
        %4169 = vmatpush1.bf16.msra.mxu0 0
        %4170 = vmatprep.subr.bf16.mxu0 0
        %4171 = vmatpush1.bf16.msra.mxu0 0
        %4172 = vmatprep.subr.bf16.mxu0 0
        %4173 = vmatpush1.bf16.msra.mxu0 0
        %4174 = vmatprep.subr.bf16.mxu0 0
        %4175 = vmatpush1.bf16.msra.mxu0 0
        %4176 = vmatprep.subr.bf16.mxu0 0
        %4177 = vmatpush1.bf16.msra.mxu0 0
        %4178 = vmatprep.subr.bf16.mxu0 0
        %4179 = vmatpush1.bf16.msra.mxu0 0
        %4180 = vmatprep.subr.bf16.mxu0 0
        %4181 = vmatpush1.bf16.msra.mxu0 0
        %4182 = vmatprep.subr.bf16.mxu0 0
        %4183 = vmatpush1.bf16.msra.mxu0 0
        %4184 = vmatprep.mubr.bf16.mxu0 0
        %4185 = vmatmul.mubr.bf16.gmra.mrb[0].mxu0 %v4107
        %v4186 = vpop.f32.mrb[0].mxu0
        %v4187 = vadd.f32 0.0, %v4186
        %v4188 = vpop.f32.mrb[0].mxu0
        %v4189 = vpop.f32.mrb[0].mxu0
        %v4190 = vadd.f32 0.0, %v4189
        %v4191 = vpop.f32.mrb[0].mxu0
        %4192 = vdwg.mxu0
        %v4193 = vadd.f32 %v3926, %v4144
        %v4194 = vadd.f32 %v3927, %v4146
        %v4195 = vadd.f32 %v3928, %v4187
        %v4196 = vadd.f32 %v3929, %v4148
        %v4197 = vadd.f32 %v3930, %v4150
        %v4198 = vadd.f32 %v3931, %v4190
        %s4199 = scalar_lea.vmem %s6, 40
        %v4200 = vld [vmem:[%s4199] sm:$0xf]
        %v4201 = vld [vmem:[%s4199 + $0x4] sm:$0xf]
        %v4204 = vunpack.c.l.b16 %v4200
        %v4205 = vunpack.c.l.b16 %v4201
        %v4206 = vpack.c.b16 %v4205, %v4204
        %v4208 = vsel %vm2883, %v4206, 0
        %4210 = vmatprep.subr.bf16.mxu0 0
        %4211 = vmatpush1.bf16.msra.mxu0 %v2872
        %4212 = vmatprep.subr.bf16.mxu0 0
        %4213 = vmatpush1.bf16.msra.mxu0 %v2873
        %4214 = vmatprep.subr.bf16.mxu0 0
        %4215 = vmatpush1.bf16.msra.mxu0 %v2874
        %4216 = vmatprep.subr.bf16.mxu0 0
        %4217 = vmatpush1.bf16.msra.mxu0 %v2875
        %4218 = vmatprep.subr.bf16.mxu0 0
        %4219 = vmatpush1.bf16.msra.mxu0 0
        %4220 = vmatprep.subr.bf16.mxu0 0
        %4221 = vmatpush1.bf16.msra.mxu0 0
        %4222 = vmatprep.subr.bf16.mxu0 0
        %4223 = vmatpush1.bf16.msra.mxu0 0
        %4224 = vmatprep.subr.bf16.mxu0 0
        %4225 = vmatpush1.bf16.msra.mxu0 0
        %4226 = vmatprep.subr.bf16.mxu0 0
        %4227 = vmatpush1.bf16.msra.mxu0 0
        %4228 = vmatprep.subr.bf16.mxu0 0
        %4229 = vmatpush1.bf16.msra.mxu0 0
        %4230 = vmatprep.subr.bf16.mxu0 0
        %4231 = vmatpush1.bf16.msra.mxu0 0
        %4232 = vmatprep.subr.bf16.mxu0 0
        %4233 = vmatpush1.bf16.msra.mxu0 0
        %4234 = vmatprep.subr.bf16.mxu0 0
        %4235 = vmatpush1.bf16.msra.mxu0 0
        %4236 = vmatprep.subr.bf16.mxu0 0
        %4237 = vmatpush1.bf16.msra.mxu0 0
        %4238 = vmatprep.subr.bf16.mxu0 0
        %4239 = vmatpush1.bf16.msra.mxu0 0
        %4240 = vmatprep.subr.bf16.mxu0 0
        %4241 = vmatpush1.bf16.msra.mxu0 0
        %4242 = vmatprep.mubr.bf16.mxu0 0
        %4243 = vmatmul.mubr.bf16.gmra.mrb[0].mxu0 %v4208
        %v4244 = vpop.f32.mrb[0].mxu0
        %v4245 = vadd.f32 0.0, %v4244
        %v4246 = vpop.f32.mrb[0].mxu0
        %v4247 = vpop.f32.mrb[0].mxu0
        %v4248 = vadd.f32 0.0, %v4247
        %v4249 = vpop.f32.mrb[0].mxu0
        %4250 = vdwg.mxu0
        %v4251 = vpack.c.bf16 %v4248, %v4245
        %s4252 = scalar_lea.vmem %s7, 720
        %v4253 = vld [vmem:[%s4252] sm:$0xff]
        %v4254 = vld [vmem:[%s4252 + $0x8] sm:$0xf]
        %v4255 = vld [vmem:[%s4252 + $0xc] sm:$0xff]
        %v4256 = vld [vmem:[%s4252 + $0x14] sm:$0xf]
        %v4257 = vld [vmem:[%s4252 + $0x18] sm:$0xff]
        %v4258 = vld [vmem:[%s4252 + $0x20] sm:$0xf]
        %v4259 = vld [vmem:[%s4252 + $0x24] sm:$0xff]
        %v4260 = vld [vmem:[%s4252 + $0x2c] sm:$0xf]
        %v4261 = vld [vmem:[%s4252 + $0x30] sm:$0xff]
        %v4262 = vld [vmem:[%s4252 + $0x38] sm:$0xf]
        %v4263 = vld [vmem:[%s4252 + $0x3c] sm:$0xff]
        %v4264 = vld [vmem:[%s4252 + $0x44] sm:$0xf]
        %v4265 = vld [vmem:[%s4252 + $0x48] sm:$0xff]
        %v4266 = vld [vmem:[%s4252 + $0x50] sm:$0xf]
        %v4267 = vld [vmem:[%s4252 + $0x54] sm:$0xff]
        %v4268 = vld [vmem:[%s4252 + $0x5c] sm:$0xf]
        %v4269 = vld [vmem:[%s4252 + $0x60] sm:$0xff]
        %v4270 = vld [vmem:[%s4252 + $0x68] sm:$0xf]
        %v4271 = vld [vmem:[%s4252 + $0x6c] sm:$0xff]
        %v4272 = vld [vmem:[%s4252 + $0x74] sm:$0xf]
        %v4273 = vld [vmem:[%s4252 + $0x78] sm:$0xff]
        %v4274 = vld [vmem:[%s4252 + $0x80] sm:$0xf]
        %v4275 = vld [vmem:[%s4252 + $0x84] sm:$0xff]
        %v4276 = vld [vmem:[%s4252 + $0x8c] sm:$0xf]
        %v4301 = vunpack.c.l.b16 %v4253
        %v4302 = vunpack.c.h.b16 %v4253
        %v4303 = vunpack.c.l.b16 %v4254
        %v4304 = vunpack.c.l.b16 %v4255
        %v4305 = vunpack.c.h.b16 %v4255
        %v4306 = vunpack.c.l.b16 %v4256
        %v4307 = vunpack.c.l.b16 %v4257
        %v4308 = vunpack.c.h.b16 %v4257
        %v4309 = vunpack.c.l.b16 %v4258
        %v4310 = vunpack.c.l.b16 %v4259
        %v4311 = vunpack.c.h.b16 %v4259
        %v4312 = vunpack.c.l.b16 %v4260
        %v4313 = vunpack.c.l.b16 %v4261
        %v4314 = vunpack.c.h.b16 %v4261
        %v4315 = vunpack.c.l.b16 %v4262
        %v4316 = vunpack.c.l.b16 %v4263
        %v4317 = vunpack.c.h.b16 %v4263
        %v4318 = vunpack.c.l.b16 %v4264
        %v4319 = vunpack.c.l.b16 %v4265
        %v4320 = vunpack.c.h.b16 %v4265
        %v4321 = vunpack.c.l.b16 %v4266
        %v4322 = vunpack.c.l.b16 %v4267
        %v4323 = vunpack.c.h.b16 %v4267
        %v4324 = vunpack.c.l.b16 %v4268
        %v4325 = vunpack.c.l.b16 %v4269
        %v4326 = vunpack.c.h.b16 %v4269
        %v4327 = vunpack.c.l.b16 %v4270
        %v4328 = vunpack.c.l.b16 %v4271
        %v4329 = vunpack.c.h.b16 %v4271
        %v4330 = vunpack.c.l.b16 %v4272
        %v4331 = vunpack.c.l.b16 %v4273
        %v4332 = vunpack.c.h.b16 %v4273
        %v4333 = vunpack.c.l.b16 %v4274
        %v4334 = vunpack.c.l.b16 %v4275
        %v4335 = vunpack.c.h.b16 %v4275
        %v4336 = vunpack.c.l.b16 %v4276
        %v4337 = vpack.c.b16 %v4304, %v4301
        %v4338 = vpack.c.b16 %v4305, %v4302
        %v4339 = vpack.c.b16 %v4306, %v4303
        %v4340 = vpack.c.b16 %v4310, %v4307
        %v4341 = vpack.c.b16 %v4311, %v4308
        %v4342 = vpack.c.b16 %v4312, %v4309
        %v4343 = vpack.c.b16 %v4316, %v4313
        %v4344 = vpack.c.b16 %v4317, %v4314
        %v4345 = vpack.c.b16 %v4318, %v4315
        %v4346 = vpack.c.b16 %v4322, %v4319
        %v4347 = vpack.c.b16 %v4323, %v4320
        %v4348 = vpack.c.b16 %v4324, %v4321
        %v4349 = vpack.c.b16 %v4328, %v4325
        %v4350 = vpack.c.b16 %v4329, %v4326
        %v4351 = vpack.c.b16 %v4330, %v4327
        %v4352 = vpack.c.b16 %v4334, %v4331
        %v4353 = vpack.c.b16 %v4335, %v4332
        %v4354 = vpack.c.b16 %v4336, %v4333
        %v4374 = vsel %vm3127, %v4251, 0
        %4376 = vmatprep.subr.bf16.mxu0 %v4338
        %4377 = vmatpush1.bf16.msra.mxu0 %v4337
        %4378 = vmatprep.subr.bf16.mxu0 %v4341
        %4379 = vmatpush1.bf16.msra.mxu0 %v4340
        %4380 = vmatprep.subr.bf16.mxu0 %v4344
        %4381 = vmatpush1.bf16.msra.mxu0 %v4343
        %4382 = vmatprep.subr.bf16.mxu0 %v4347
        %4383 = vmatpush1.bf16.msra.mxu0 %v4346
        %4384 = vmatprep.subr.bf16.mxu0 %v4350
        %4385 = vmatpush1.bf16.msra.mxu0 %v4349
        %4386 = vmatprep.subr.bf16.mxu0 %v4353
        %4387 = vmatpush1.bf16.msra.mxu0 %v4352
        %4388 = vmatprep.subr.bf16.mxu0 0
        %4389 = vmatpush1.bf16.msra.mxu0 0
        %4390 = vmatprep.subr.bf16.mxu0 0
        %4391 = vmatpush1.bf16.msra.mxu0 0
        %4392 = vmatprep.subr.bf16.mxu0 0
        %4393 = vmatpush1.bf16.msra.mxu0 0
        %4394 = vmatprep.subr.bf16.mxu0 0
        %4395 = vmatpush1.bf16.msra.mxu0 0
        %4396 = vmatprep.subr.bf16.mxu0 0
        %4397 = vmatpush1.bf16.msra.mxu0 0
        %4398 = vmatprep.subr.bf16.mxu0 0
        %4399 = vmatpush1.bf16.msra.mxu0 0
        %4400 = vmatprep.subr.bf16.mxu0 0
        %4401 = vmatpush1.bf16.msra.mxu0 0
        %4402 = vmatprep.subr.bf16.mxu0 0
        %4403 = vmatpush1.bf16.msra.mxu0 0
        %4404 = vmatprep.subr.bf16.mxu0 0
        %4405 = vmatpush1.bf16.msra.mxu0 0
        %4406 = vmatprep.subr.bf16.mxu0 0
        %4407 = vmatpush1.bf16.msra.mxu0 0
        %4408 = vmatprep.mubr.bf16.mxu0 0
        %4409 = vmatmul.mubr.bf16.gmra.mrb[0].mxu0 %v4374
        %v4410 = vpop.f32.mrb[0].mxu0
        %v4411 = vadd.f32 0.0, %v4410
        %v4412 = vpop.f32.mrb[0].mxu0
        %v4413 = vadd.f32 0.0, %v4412
        %v4414 = vpop.f32.mrb[0].mxu0
        %v4415 = vadd.f32 0.0, %v4414
        %v4416 = vpop.f32.mrb[0].mxu0
        %v4417 = vadd.f32 0.0, %v4416
        %4418 = vdwg.mxu0
        %4419 = vmatprep.subr.bf16.mxu0 0
        %4420 = vmatpush1.bf16.msra.mxu0 %v4339
        %4421 = vmatprep.subr.bf16.mxu0 0
        %4422 = vmatpush1.bf16.msra.mxu0 %v4342
        %4423 = vmatprep.subr.bf16.mxu0 0
        %4424 = vmatpush1.bf16.msra.mxu0 %v4345
        %4425 = vmatprep.subr.bf16.mxu0 0
        %4426 = vmatpush1.bf16.msra.mxu0 %v4348
        %4427 = vmatprep.subr.bf16.mxu0 0
        %4428 = vmatpush1.bf16.msra.mxu0 %v4351
        %4429 = vmatprep.subr.bf16.mxu0 0
        %4430 = vmatpush1.bf16.msra.mxu0 %v4354
        %4431 = vmatprep.subr.bf16.mxu0 0
        %4432 = vmatpush1.bf16.msra.mxu0 0
        %4433 = vmatprep.subr.bf16.mxu0 0
        %4434 = vmatpush1.bf16.msra.mxu0 0
        %4435 = vmatprep.subr.bf16.mxu0 0
        %4436 = vmatpush1.bf16.msra.mxu0 0
        %4437 = vmatprep.subr.bf16.mxu0 0
        %4438 = vmatpush1.bf16.msra.mxu0 0
        %4439 = vmatprep.subr.bf16.mxu0 0
        %4440 = vmatpush1.bf16.msra.mxu0 0
        %4441 = vmatprep.subr.bf16.mxu0 0
        %4442 = vmatpush1.bf16.msra.mxu0 0
        %4443 = vmatprep.subr.bf16.mxu0 0
        %4444 = vmatpush1.bf16.msra.mxu0 0
        %4445 = vmatprep.subr.bf16.mxu0 0
        %4446 = vmatpush1.bf16.msra.mxu0 0
        %4447 = vmatprep.subr.bf16.mxu0 0
        %4448 = vmatpush1.bf16.msra.mxu0 0
        %4449 = vmatprep.subr.bf16.mxu0 0
        %4450 = vmatpush1.bf16.msra.mxu0 0
        %4451 = vmatprep.mubr.bf16.mxu0 0
        %4452 = vmatmul.mubr.bf16.gmra.mrb[0].mxu0 %v4374
        %v4453 = vpop.f32.mrb[0].mxu0
        %v4454 = vadd.f32 0.0, %v4453
        %v4455 = vpop.f32.mrb[0].mxu0
        %v4456 = vpop.f32.mrb[0].mxu0
        %v4457 = vadd.f32 0.0, %v4456
        %v4458 = vpop.f32.mrb[0].mxu0
        %4459 = vdwg.mxu0
        %v4460 = vadd.f32 %v4193, %v4411
        %v4461 = vadd.f32 %v4194, %v4413
        %v4462 = vadd.f32 %v4195, %v4454
        %v4463 = vadd.f32 %v4196, %v4415
        %v4464 = vadd.f32 %v4197, %v4417
        %v4465 = vadd.f32 %v4198, %v4457
        %s4466 = scalar_lea.vmem %s6, 48
        %v4467 = vld [vmem:[%s4466] sm:$0xf]
        %v4468 = vld [vmem:[%s4466 + $0x4] sm:$0xf]
        %v4471 = vunpack.c.l.b16 %v4467
        %v4472 = vunpack.c.l.b16 %v4468
        %v4473 = vpack.c.b16 %v4472, %v4471
        %v4475 = vsel %vm2883, %v4473, 0
        %4477 = vmatprep.subr.bf16.mxu0 0
        %4478 = vmatpush1.bf16.msra.mxu0 %v2872
        %4479 = vmatprep.subr.bf16.mxu0 0
        %4480 = vmatpush1.bf16.msra.mxu0 %v2873
        %4481 = vmatprep.subr.bf16.mxu0 0
        %4482 = vmatpush1.bf16.msra.mxu0 %v2874
        %4483 = vmatprep.subr.bf16.mxu0 0
        %4484 = vmatpush1.bf16.msra.mxu0 %v2875
        %4485 = vmatprep.subr.bf16.mxu0 0
        %4486 = vmatpush1.bf16.msra.mxu0 0
        %4487 = vmatprep.subr.bf16.mxu0 0
        %4488 = vmatpush1.bf16.msra.mxu0 0
        %4489 = vmatprep.subr.bf16.mxu0 0
        %4490 = vmatpush1.bf16.msra.mxu0 0
        %4491 = vmatprep.subr.bf16.mxu0 0
        %4492 = vmatpush1.bf16.msra.mxu0 0
        %4493 = vmatprep.subr.bf16.mxu0 0
        %4494 = vmatpush1.bf16.msra.mxu0 0
        %4495 = vmatprep.subr.bf16.mxu0 0
        %4496 = vmatpush1.bf16.msra.mxu0 0
        %4497 = vmatprep.subr.bf16.mxu0 0
        %4498 = vmatpush1.bf16.msra.mxu0 0
        %4499 = vmatprep.subr.bf16.mxu0 0
        %4500 = vmatpush1.bf16.msra.mxu0 0
        %4501 = vmatprep.subr.bf16.mxu0 0
        %4502 = vmatpush1.bf16.msra.mxu0 0
        %4503 = vmatprep.subr.bf16.mxu0 0
        %4504 = vmatpush1.bf16.msra.mxu0 0
        %4505 = vmatprep.subr.bf16.mxu0 0
        %4506 = vmatpush1.bf16.msra.mxu0 0
        %4507 = vmatprep.subr.bf16.mxu0 0
        %4508 = vmatpush1.bf16.msra.mxu0 0
        %4509 = vmatprep.mubr.bf16.mxu0 0
        %4510 = vmatmul.mubr.bf16.gmra.mrb[0].mxu0 %v4475
        %v4511 = vpop.f32.mrb[0].mxu0
        %v4512 = vadd.f32 0.0, %v4511
        %v4513 = vpop.f32.mrb[0].mxu0
        %v4514 = vpop.f32.mrb[0].mxu0
        %v4515 = vadd.f32 0.0, %v4514
        %v4516 = vpop.f32.mrb[0].mxu0
        %4517 = vdwg.mxu0
        %v4518 = vpack.c.bf16 %v4515, %v4512
        %s4519 = scalar_lea.vmem %s7, 864
        %v4520 = vld [vmem:[%s4519] sm:$0xff]
        %v4521 = vld [vmem:[%s4519 + $0x8] sm:$0xf]
        %v4522 = vld [vmem:[%s4519 + $0xc] sm:$0xff]
        %v4523 = vld [vmem:[%s4519 + $0x14] sm:$0xf]
        %v4524 = vld [vmem:[%s4519 + $0x18] sm:$0xff]
        %v4525 = vld [vmem:[%s4519 + $0x20] sm:$0xf]
        %v4526 = vld [vmem:[%s4519 + $0x24] sm:$0xff]
        %v4527 = vld [vmem:[%s4519 + $0x2c] sm:$0xf]
        %v4528 = vld [vmem:[%s4519 + $0x30] sm:$0xff]
        %v4529 = vld [vmem:[%s4519 + $0x38] sm:$0xf]
        %v4530 = vld [vmem:[%s4519 + $0x3c] sm:$0xff]
        %v4531 = vld [vmem:[%s4519 + $0x44] sm:$0xf]
        %v4532 = vld [vmem:[%s4519 + $0x48] sm:$0xff]
        %v4533 = vld [vmem:[%s4519 + $0x50] sm:$0xf]
        %v4534 = vld [vmem:[%s4519 + $0x54] sm:$0xff]
        %v4535 = vld [vmem:[%s4519 + $0x5c] sm:$0xf]
        %v4536 = vld [vmem:[%s4519 + $0x60] sm:$0xff]
        %v4537 = vld [vmem:[%s4519 + $0x68] sm:$0xf]
        %v4538 = vld [vmem:[%s4519 + $0x6c] sm:$0xff]
        %v4539 = vld [vmem:[%s4519 + $0x74] sm:$0xf]
        %v4540 = vld [vmem:[%s4519 + $0x78] sm:$0xff]
        %v4541 = vld [vmem:[%s4519 + $0x80] sm:$0xf]
        %v4542 = vld [vmem:[%s4519 + $0x84] sm:$0xff]
        %v4543 = vld [vmem:[%s4519 + $0x8c] sm:$0xf]
        %v4568 = vunpack.c.l.b16 %v4520
        %v4569 = vunpack.c.h.b16 %v4520
        %v4570 = vunpack.c.l.b16 %v4521
        %v4571 = vunpack.c.l.b16 %v4522
        %v4572 = vunpack.c.h.b16 %v4522
        %v4573 = vunpack.c.l.b16 %v4523
        %v4574 = vunpack.c.l.b16 %v4524
        %v4575 = vunpack.c.h.b16 %v4524
        %v4576 = vunpack.c.l.b16 %v4525
        %v4577 = vunpack.c.l.b16 %v4526
        %v4578 = vunpack.c.h.b16 %v4526
        %v4579 = vunpack.c.l.b16 %v4527
        %v4580 = vunpack.c.l.b16 %v4528
        %v4581 = vunpack.c.h.b16 %v4528
        %v4582 = vunpack.c.l.b16 %v4529
        %v4583 = vunpack.c.l.b16 %v4530
        %v4584 = vunpack.c.h.b16 %v4530
        %v4585 = vunpack.c.l.b16 %v4531
        %v4586 = vunpack.c.l.b16 %v4532
        %v4587 = vunpack.c.h.b16 %v4532
        %v4588 = vunpack.c.l.b16 %v4533
        %v4589 = vunpack.c.l.b16 %v4534
        %v4590 = vunpack.c.h.b16 %v4534
        %v4591 = vunpack.c.l.b16 %v4535
        %v4592 = vunpack.c.l.b16 %v4536
        %v4593 = vunpack.c.h.b16 %v4536
        %v4594 = vunpack.c.l.b16 %v4537
        %v4595 = vunpack.c.l.b16 %v4538
        %v4596 = vunpack.c.h.b16 %v4538
        %v4597 = vunpack.c.l.b16 %v4539
        %v4598 = vunpack.c.l.b16 %v4540
        %v4599 = vunpack.c.h.b16 %v4540
        %v4600 = vunpack.c.l.b16 %v4541
        %v4601 = vunpack.c.l.b16 %v4542
        %v4602 = vunpack.c.h.b16 %v4542
        %v4603 = vunpack.c.l.b16 %v4543
        %v4604 = vpack.c.b16 %v4571, %v4568
        %v4605 = vpack.c.b16 %v4572, %v4569
        %v4606 = vpack.c.b16 %v4573, %v4570
        %v4607 = vpack.c.b16 %v4577, %v4574
        %v4608 = vpack.c.b16 %v4578, %v4575
        %v4609 = vpack.c.b16 %v4579, %v4576
        %v4610 = vpack.c.b16 %v4583, %v4580
        %v4611 = vpack.c.b16 %v4584, %v4581
        %v4612 = vpack.c.b16 %v4585, %v4582
        %v4613 = vpack.c.b16 %v4589, %v4586
        %v4614 = vpack.c.b16 %v4590, %v4587
        %v4615 = vpack.c.b16 %v4591, %v4588
        %v4616 = vpack.c.b16 %v4595, %v4592
        %v4617 = vpack.c.b16 %v4596, %v4593
        %v4618 = vpack.c.b16 %v4597, %v4594
        %v4619 = vpack.c.b16 %v4601, %v4598
        %v4620 = vpack.c.b16 %v4602, %v4599
        %v4621 = vpack.c.b16 %v4603, %v4600
        %v4641 = vsel %vm3127, %v4518, 0
        %4643 = vmatprep.subr.bf16.mxu0 %v4605
        %4644 = vmatpush1.bf16.msra.mxu0 %v4604
        %4645 = vmatprep.subr.bf16.mxu0 %v4608
        %4646 = vmatpush1.bf16.msra.mxu0 %v4607
        %4647 = vmatprep.subr.bf16.mxu0 %v4611
        %4648 = vmatpush1.bf16.msra.mxu0 %v4610
        %4649 = vmatprep.subr.bf16.mxu0 %v4614
        %4650 = vmatpush1.bf16.msra.mxu0 %v4613
        %4651 = vmatprep.subr.bf16.mxu0 %v4617
        %4652 = vmatpush1.bf16.msra.mxu0 %v4616
        %4653 = vmatprep.subr.bf16.mxu0 %v4620
        %4654 = vmatpush1.bf16.msra.mxu0 %v4619
        %4655 = vmatprep.subr.bf16.mxu0 0
        %4656 = vmatpush1.bf16.msra.mxu0 0
        %4657 = vmatprep.subr.bf16.mxu0 0
        %4658 = vmatpush1.bf16.msra.mxu0 0
        %4659 = vmatprep.subr.bf16.mxu0 0
        %4660 = vmatpush1.bf16.msra.mxu0 0
        %4661 = vmatprep.subr.bf16.mxu0 0
        %4662 = vmatpush1.bf16.msra.mxu0 0
        %4663 = vmatprep.subr.bf16.mxu0 0
        %4664 = vmatpush1.bf16.msra.mxu0 0
        %4665 = vmatprep.subr.bf16.mxu0 0
        %4666 = vmatpush1.bf16.msra.mxu0 0
        %4667 = vmatprep.subr.bf16.mxu0 0
        %4668 = vmatpush1.bf16.msra.mxu0 0
        %4669 = vmatprep.subr.bf16.mxu0 0
        %4670 = vmatpush1.bf16.msra.mxu0 0
        %4671 = vmatprep.subr.bf16.mxu0 0
        %4672 = vmatpush1.bf16.msra.mxu0 0
        %4673 = vmatprep.subr.bf16.mxu0 0
        %4674 = vmatpush1.bf16.msra.mxu0 0
        %4675 = vmatprep.mubr.bf16.mxu0 0
        %4676 = vmatmul.mubr.bf16.gmra.mrb[0].mxu0 %v4641
        %v4677 = vpop.f32.mrb[0].mxu0
        %v4678 = vadd.f32 0.0, %v4677
        %v4679 = vpop.f32.mrb[0].mxu0
        %v4680 = vadd.f32 0.0, %v4679
        %v4681 = vpop.f32.mrb[0].mxu0
        %v4682 = vadd.f32 0.0, %v4681
        %v4683 = vpop.f32.mrb[0].mxu0
        %v4684 = vadd.f32 0.0, %v4683
        %4685 = vdwg.mxu0
        %4686 = vmatprep.subr.bf16.mxu0 0
        %4687 = vmatpush1.bf16.msra.mxu0 %v4606
        %4688 = vmatprep.subr.bf16.mxu0 0
        %4689 = vmatpush1.bf16.msra.mxu0 %v4609
        %4690 = vmatprep.subr.bf16.mxu0 0
        %4691 = vmatpush1.bf16.msra.mxu0 %v4612
        %4692 = vmatprep.subr.bf16.mxu0 0
        %4693 = vmatpush1.bf16.msra.mxu0 %v4615
        %4694 = vmatprep.subr.bf16.mxu0 0
        %4695 = vmatpush1.bf16.msra.mxu0 %v4618
        %4696 = vmatprep.subr.bf16.mxu0 0
        %4697 = vmatpush1.bf16.msra.mxu0 %v4621
        %4698 = vmatprep.subr.bf16.mxu0 0
        %4699 = vmatpush1.bf16.msra.mxu0 0
        %4700 = vmatprep.subr.bf16.mxu0 0
        %4701 = vmatpush1.bf16.msra.mxu0 0
        %4702 = vmatprep.subr.bf16.mxu0 0
        %4703 = vmatpush1.bf16.msra.mxu0 0
        %4704 = vmatprep.subr.bf16.mxu0 0
        %4705 = vmatpush1.bf16.msra.mxu0 0
        %4706 = vmatprep.subr.bf16.mxu0 0
        %4707 = vmatpush1.bf16.msra.mxu0 0
        %4708 = vmatprep.subr.bf16.mxu0 0
        %4709 = vmatpush1.bf16.msra.mxu0 0
        %4710 = vmatprep.subr.bf16.mxu0 0
        %4711 = vmatpush1.bf16.msra.mxu0 0
        %4712 = vmatprep.subr.bf16.mxu0 0
        %4713 = vmatpush1.bf16.msra.mxu0 0
        %4714 = vmatprep.subr.bf16.mxu0 0
        %4715 = vmatpush1.bf16.msra.mxu0 0
        %4716 = vmatprep.subr.bf16.mxu0 0
        %4717 = vmatpush1.bf16.msra.mxu0 0
        %4718 = vmatprep.mubr.bf16.mxu0 0
        %4719 = vmatmul.mubr.bf16.gmra.mrb[0].mxu0 %v4641
        %v4720 = vpop.f32.mrb[0].mxu0
        %v4721 = vadd.f32 0.0, %v4720
        %v4722 = vpop.f32.mrb[0].mxu0
        %v4723 = vpop.f32.mrb[0].mxu0
        %v4724 = vadd.f32 0.0, %v4723
        %v4725 = vpop.f32.mrb[0].mxu0
        %4726 = vdwg.mxu0
        %v4727 = vadd.f32 %v4460, %v4678
        %v4728 = vadd.f32 %v4461, %v4680
        %v4729 = vadd.f32 %v4462, %v4721
        %v4730 = vadd.f32 %v4463, %v4682
        %v4731 = vadd.f32 %v4464, %v4684
        %v4732 = vadd.f32 %v4465, %v4724
        %s4733 = scalar_lea.vmem %s6, 56
        %v4734 = vld [vmem:[%s4733] sm:$0xf]
        %v4735 = vld [vmem:[%s4733 + $0x4] sm:$0xf]
        %v4738 = vunpack.c.l.b16 %v4734
        %v4739 = vunpack.c.l.b16 %v4735
        %v4740 = vpack.c.b16 %v4739, %v4738
        %v4742 = vsel %vm2883, %v4740, 0
        %4744 = vmatprep.subr.bf16.mxu0 0
        %4745 = vmatpush1.bf16.msra.mxu0 %v2872
        %4746 = vmatprep.subr.bf16.mxu0 0
        %4747 = vmatpush1.bf16.msra.mxu0 %v2873
        %4748 = vmatprep.subr.bf16.mxu0 0
        %4749 = vmatpush1.bf16.msra.mxu0 %v2874
        %4750 = vmatprep.subr.bf16.mxu0 0
        %4751 = vmatpush1.bf16.msra.mxu0 %v2875
        %4752 = vmatprep.subr.bf16.mxu0 0
        %4753 = vmatpush1.bf16.msra.mxu0 0
        %4754 = vmatprep.subr.bf16.mxu0 0
        %4755 = vmatpush1.bf16.msra.mxu0 0
        %4756 = vmatprep.subr.bf16.mxu0 0
        %4757 = vmatpush1.bf16.msra.mxu0 0
        %4758 = vmatprep.subr.bf16.mxu0 0
        %4759 = vmatpush1.bf16.msra.mxu0 0
        %4760 = vmatprep.subr.bf16.mxu0 0
        %4761 = vmatpush1.bf16.msra.mxu0 0
        %4762 = vmatprep.subr.bf16.mxu0 0
        %4763 = vmatpush1.bf16.msra.mxu0 0
        %4764 = vmatprep.subr.bf16.mxu0 0
        %4765 = vmatpush1.bf16.msra.mxu0 0
        %4766 = vmatprep.subr.bf16.mxu0 0
        %4767 = vmatpush1.bf16.msra.mxu0 0
        %4768 = vmatprep.subr.bf16.mxu0 0
        %4769 = vmatpush1.bf16.msra.mxu0 0
        %4770 = vmatprep.subr.bf16.mxu0 0
        %4771 = vmatpush1.bf16.msra.mxu0 0
        %4772 = vmatprep.subr.bf16.mxu0 0
        %4773 = vmatpush1.bf16.msra.mxu0 0
        %4774 = vmatprep.subr.bf16.mxu0 0
        %4775 = vmatpush1.bf16.msra.mxu0 0
        %4776 = vmatprep.mubr.bf16.mxu0 0
        %4777 = vmatmul.mubr.bf16.gmra.mrb[0].mxu0 %v4742
        %v4778 = vpop.f32.mrb[0].mxu0
        %v4779 = vadd.f32 0.0, %v4778
        %v4780 = vpop.f32.mrb[0].mxu0
        %v4781 = vpop.f32.mrb[0].mxu0
        %v4782 = vadd.f32 0.0, %v4781
        %v4783 = vpop.f32.mrb[0].mxu0
        %4784 = vdwg.mxu0
        %v4785 = vpack.c.bf16 %v4782, %v4779
        %s4786 = scalar_lea.vmem %s7, 1008
        %v4787 = vld [vmem:[%s4786] sm:$0xff]
        %v4788 = vld [vmem:[%s4786 + $0x8] sm:$0xf]
        %v4789 = vld [vmem:[%s4786 + $0xc] sm:$0xff]
        %v4790 = vld [vmem:[%s4786 + $0x14] sm:$0xf]
        %v4791 = vld [vmem:[%s4786 + $0x18] sm:$0xff]
        %v4792 = vld [vmem:[%s4786 + $0x20] sm:$0xf]
        %v4793 = vld [vmem:[%s4786 + $0x24] sm:$0xff]
        %v4794 = vld [vmem:[%s4786 + $0x2c] sm:$0xf]
        %v4795 = vld [vmem:[%s4786 + $0x30] sm:$0xff]
        %v4796 = vld [vmem:[%s4786 + $0x38] sm:$0xf]
        %v4797 = vld [vmem:[%s4786 + $0x3c] sm:$0xff]
        %v4798 = vld [vmem:[%s4786 + $0x44] sm:$0xf]
        %v4799 = vld [vmem:[%s4786 + $0x48] sm:$0xff]
        %v4800 = vld [vmem:[%s4786 + $0x50] sm:$0xf]
        %v4801 = vld [vmem:[%s4786 + $0x54] sm:$0xff]
        %v4802 = vld [vmem:[%s4786 + $0x5c] sm:$0xf]
        %v4803 = vld [vmem:[%s4786 + $0x60] sm:$0xff]
        %v4804 = vld [vmem:[%s4786 + $0x68] sm:$0xf]
        %v4805 = vld [vmem:[%s4786 + $0x6c] sm:$0xff]
        %v4806 = vld [vmem:[%s4786 + $0x74] sm:$0xf]
        %v4807 = vld [vmem:[%s4786 + $0x78] sm:$0xff]
        %v4808 = vld [vmem:[%s4786 + $0x80] sm:$0xf]
        %v4809 = vld [vmem:[%s4786 + $0x84] sm:$0xff]
        %v4810 = vld [vmem:[%s4786 + $0x8c] sm:$0xf]
        %v4835 = vunpack.c.l.b16 %v4787
        %v4836 = vunpack.c.h.b16 %v4787
        %v4837 = vunpack.c.l.b16 %v4788
        %v4838 = vunpack.c.l.b16 %v4789
        %v4839 = vunpack.c.h.b16 %v4789
        %v4840 = vunpack.c.l.b16 %v4790
        %v4841 = vunpack.c.l.b16 %v4791
        %v4842 = vunpack.c.h.b16 %v4791
        %v4843 = vunpack.c.l.b16 %v4792
        %v4844 = vunpack.c.l.b16 %v4793
        %v4845 = vunpack.c.h.b16 %v4793
        %v4846 = vunpack.c.l.b16 %v4794
        %v4847 = vunpack.c.l.b16 %v4795
        %v4848 = vunpack.c.h.b16 %v4795
        %v4849 = vunpack.c.l.b16 %v4796
        %v4850 = vunpack.c.l.b16 %v4797
        %v4851 = vunpack.c.h.b16 %v4797
        %v4852 = vunpack.c.l.b16 %v4798
        %v4853 = vunpack.c.l.b16 %v4799
        %v4854 = vunpack.c.h.b16 %v4799
        %v4855 = vunpack.c.l.b16 %v4800
        %v4856 = vunpack.c.l.b16 %v4801
        %v4857 = vunpack.c.h.b16 %v4801
        %v4858 = vunpack.c.l.b16 %v4802
        %v4859 = vunpack.c.l.b16 %v4803
        %v4860 = vunpack.c.h.b16 %v4803
        %v4861 = vunpack.c.l.b16 %v4804
        %v4862 = vunpack.c.l.b16 %v4805
        %v4863 = vunpack.c.h.b16 %v4805
        %v4864 = vunpack.c.l.b16 %v4806
        %v4865 = vunpack.c.l.b16 %v4807
        %v4866 = vunpack.c.h.b16 %v4807
        %v4867 = vunpack.c.l.b16 %v4808
        %v4868 = vunpack.c.l.b16 %v4809
        %v4869 = vunpack.c.h.b16 %v4809
        %v4870 = vunpack.c.l.b16 %v4810
        %v4871 = vpack.c.b16 %v4838, %v4835
        %v4872 = vpack.c.b16 %v4839, %v4836
        %v4873 = vpack.c.b16 %v4840, %v4837
        %v4874 = vpack.c.b16 %v4844, %v4841
        %v4875 = vpack.c.b16 %v4845, %v4842
        %v4876 = vpack.c.b16 %v4846, %v4843
        %v4877 = vpack.c.b16 %v4850, %v4847
        %v4878 = vpack.c.b16 %v4851, %v4848
        %v4879 = vpack.c.b16 %v4852, %v4849
        %v4880 = vpack.c.b16 %v4856, %v4853
        %v4881 = vpack.c.b16 %v4857, %v4854
        %v4882 = vpack.c.b16 %v4858, %v4855
        %v4883 = vpack.c.b16 %v4862, %v4859
        %v4884 = vpack.c.b16 %v4863, %v4860
        %v4885 = vpack.c.b16 %v4864, %v4861
        %v4886 = vpack.c.b16 %v4868, %v4865
        %v4887 = vpack.c.b16 %v4869, %v4866
        %v4888 = vpack.c.b16 %v4870, %v4867
        %v4908 = vsel %vm3127, %v4785, 0
        %4910 = vmatprep.subr.bf16.mxu0 %v4872
        %4911 = vmatpush1.bf16.msra.mxu0 %v4871
        %4912 = vmatprep.subr.bf16.mxu0 %v4875
        %4913 = vmatpush1.bf16.msra.mxu0 %v4874
        %4914 = vmatprep.subr.bf16.mxu0 %v4878
        %4915 = vmatpush1.bf16.msra.mxu0 %v4877
        %4916 = vmatprep.subr.bf16.mxu0 %v4881
        %4917 = vmatpush1.bf16.msra.mxu0 %v4880
        %4918 = vmatprep.subr.bf16.mxu0 %v4884
        %4919 = vmatpush1.bf16.msra.mxu0 %v4883
        %4920 = vmatprep.subr.bf16.mxu0 %v4887
        %4921 = vmatpush1.bf16.msra.mxu0 %v4886
        %4922 = vmatprep.subr.bf16.mxu0 0
        %4923 = vmatpush1.bf16.msra.mxu0 0
        %4924 = vmatprep.subr.bf16.mxu0 0
        %4925 = vmatpush1.bf16.msra.mxu0 0
        %4926 = vmatprep.subr.bf16.mxu0 0
        %4927 = vmatpush1.bf16.msra.mxu0 0
        %4928 = vmatprep.subr.bf16.mxu0 0
        %4929 = vmatpush1.bf16.msra.mxu0 0
        %4930 = vmatprep.subr.bf16.mxu0 0
        %4931 = vmatpush1.bf16.msra.mxu0 0
        %4932 = vmatprep.subr.bf16.mxu0 0
        %4933 = vmatpush1.bf16.msra.mxu0 0
        %4934 = vmatprep.subr.bf16.mxu0 0
        %4935 = vmatpush1.bf16.msra.mxu0 0
        %4936 = vmatprep.subr.bf16.mxu0 0
        %4937 = vmatpush1.bf16.msra.mxu0 0
        %4938 = vmatprep.subr.bf16.mxu0 0
        %4939 = vmatpush1.bf16.msra.mxu0 0
        %4940 = vmatprep.subr.bf16.mxu0 0
        %4941 = vmatpush1.bf16.msra.mxu0 0
        %4942 = vmatprep.mubr.bf16.mxu0 0
        %4943 = vmatmul.mubr.bf16.gmra.mrb[0].mxu0 %v4908
        %v4944 = vpop.f32.mrb[0].mxu0
        %v4945 = vadd.f32 0.0, %v4944
        %v4946 = vpop.f32.mrb[0].mxu0
        %v4947 = vadd.f32 0.0, %v4946
        %v4948 = vpop.f32.mrb[0].mxu0
        %v4949 = vadd.f32 0.0, %v4948
        %v4950 = vpop.f32.mrb[0].mxu0
        %v4951 = vadd.f32 0.0, %v4950
        %4952 = vdwg.mxu0
        %4953 = vmatprep.subr.bf16.mxu0 0
        %4954 = vmatpush1.bf16.msra.mxu0 %v4873
        %4955 = vmatprep.subr.bf16.mxu0 0
        %4956 = vmatpush1.bf16.msra.mxu0 %v4876
        %4957 = vmatprep.subr.bf16.mxu0 0
        %4958 = vmatpush1.bf16.msra.mxu0 %v4879
        %4959 = vmatprep.subr.bf16.mxu0 0
        %4960 = vmatpush1.bf16.msra.mxu0 %v4882
        %4961 = vmatprep.subr.bf16.mxu0 0
        %4962 = vmatpush1.bf16.msra.mxu0 %v4885
        %4963 = vmatprep.subr.bf16.mxu0 0
        %4964 = vmatpush1.bf16.msra.mxu0 %v4888
        %4965 = vmatprep.subr.bf16.mxu0 0
        %4966 = vmatpush1.bf16.msra.mxu0 0
        %4967 = vmatprep.subr.bf16.mxu0 0
        %4968 = vmatpush1.bf16.msra.mxu0 0
        %4969 = vmatprep.subr.bf16.mxu0 0
        %4970 = vmatpush1.bf16.msra.mxu0 0
        %4971 = vmatprep.subr.bf16.mxu0 0
        %4972 = vmatpush1.bf16.msra.mxu0 0
        %4973 = vmatprep.subr.bf16.mxu0 0
        %4974 = vmatpush1.bf16.msra.mxu0 0
        %4975 = vmatprep.subr.bf16.mxu0 0
        %4976 = vmatpush1.bf16.msra.mxu0 0
        %4977 = vmatprep.subr.bf16.mxu0 0
        %4978 = vmatpush1.bf16.msra.mxu0 0
        %4979 = vmatprep.subr.bf16.mxu0 0
        %4980 = vmatpush1.bf16.msra.mxu0 0
        %4981 = vmatprep.subr.bf16.mxu0 0
        %4982 = vmatpush1.bf16.msra.mxu0 0
        %4983 = vmatprep.subr.bf16.mxu0 0
        %4984 = vmatpush1.bf16.msra.mxu0 0
        %4985 = vmatprep.mubr.bf16.mxu0 0
        %4986 = vmatmul.mubr.bf16.gmra.mrb[0].mxu0 %v4908
        %v4987 = vpop.f32.mrb[0].mxu0
        %v4988 = vadd.f32 0.0, %v4987
        %v4989 = vpop.f32.mrb[0].mxu0
        %v4990 = vpop.f32.mrb[0].mxu0
        %v4991 = vadd.f32 0.0, %v4990
        %v4992 = vpop.f32.mrb[0].mxu0
        %4993 = vdwg.mxu0
        %v4994 = vadd.f32 %v4727, %v4945
        %v4995 = vadd.f32 %v4728, %v4947
        %v4996 = vadd.f32 %v4729, %v4988
        %v4997 = vadd.f32 %v4730, %v4949
        %v4998 = vadd.f32 %v4731, %v4951
        %v4999 = vadd.f32 %v4732, %v4991
        %s5000 = scalar_lea.vmem %s6, 64
        %v5001 = vld [vmem:[%s5000] sm:$0xf]
        %v5002 = vld [vmem:[%s5000 + $0x4] sm:$0xf]
        %v5005 = vunpack.c.l.b16 %v5001
        %v5006 = vunpack.c.l.b16 %v5002
        %v5007 = vpack.c.b16 %v5006, %v5005
        %v5009 = vsel %vm2883, %v5007, 0
        %5011 = vmatprep.subr.bf16.mxu0 0
        %5012 = vmatpush1.bf16.msra.mxu0 %v2872
        %5013 = vmatprep.subr.bf16.mxu0 0
        %5014 = vmatpush1.bf16.msra.mxu0 %v2873
        %5015 = vmatprep.subr.bf16.mxu0 0
        %5016 = vmatpush1.bf16.msra.mxu0 %v2874
        %5017 = vmatprep.subr.bf16.mxu0 0
        %5018 = vmatpush1.bf16.msra.mxu0 %v2875
        %5019 = vmatprep.subr.bf16.mxu0 0
        %5020 = vmatpush1.bf16.msra.mxu0 0
        %5021 = vmatprep.subr.bf16.mxu0 0
        %5022 = vmatpush1.bf16.msra.mxu0 0
        %5023 = vmatprep.subr.bf16.mxu0 0
        %5024 = vmatpush1.bf16.msra.mxu0 0
        %5025 = vmatprep.subr.bf16.mxu0 0
        %5026 = vmatpush1.bf16.msra.mxu0 0
        %5027 = vmatprep.subr.bf16.mxu0 0
        %5028 = vmatpush1.bf16.msra.mxu0 0
        %5029 = vmatprep.subr.bf16.mxu0 0
        %5030 = vmatpush1.bf16.msra.mxu0 0
        %5031 = vmatprep.subr.bf16.mxu0 0
        %5032 = vmatpush1.bf16.msra.mxu0 0
        %5033 = vmatprep.subr.bf16.mxu0 0
        %5034 = vmatpush1.bf16.msra.mxu0 0
        %5035 = vmatprep.subr.bf16.mxu0 0
        %5036 = vmatpush1.bf16.msra.mxu0 0
        %5037 = vmatprep.subr.bf16.mxu0 0
        %5038 = vmatpush1.bf16.msra.mxu0 0
        %5039 = vmatprep.subr.bf16.mxu0 0
        %5040 = vmatpush1.bf16.msra.mxu0 0
        %5041 = vmatprep.subr.bf16.mxu0 0
        %5042 = vmatpush1.bf16.msra.mxu0 0
        %5043 = vmatprep.mubr.bf16.mxu0 0
        %5044 = vmatmul.mubr.bf16.gmra.mrb[0].mxu0 %v5009
        %v5045 = vpop.f32.mrb[0].mxu0
        %v5046 = vadd.f32 0.0, %v5045
        %v5047 = vpop.f32.mrb[0].mxu0
        %v5048 = vpop.f32.mrb[0].mxu0
        %v5049 = vadd.f32 0.0, %v5048
        %v5050 = vpop.f32.mrb[0].mxu0
        %5051 = vdwg.mxu0
        %v5052 = vpack.c.bf16 %v5049, %v5046
        %s5053 = scalar_lea.vmem %s7, 1152
        %v5054 = vld [vmem:[%s5053] sm:$0xff]
        %v5055 = vld [vmem:[%s5053 + $0x8] sm:$0xf]
        %v5056 = vld [vmem:[%s5053 + $0xc] sm:$0xff]
        %v5057 = vld [vmem:[%s5053 + $0x14] sm:$0xf]
        %v5058 = vld [vmem:[%s5053 + $0x18] sm:$0xff]
        %v5059 = vld [vmem:[%s5053 + $0x20] sm:$0xf]
        %v5060 = vld [vmem:[%s5053 + $0x24] sm:$0xff]
        %v5061 = vld [vmem:[%s5053 + $0x2c] sm:$0xf]
        %v5062 = vld [vmem:[%s5053 + $0x30] sm:$0xff]
        %v5063 = vld [vmem:[%s5053 + $0x38] sm:$0xf]
        %v5064 = vld [vmem:[%s5053 + $0x3c] sm:$0xff]
        %v5065 = vld [vmem:[%s5053 + $0x44] sm:$0xf]
        %v5066 = vld [vmem:[%s5053 + $0x48] sm:$0xff]
        %v5067 = vld [vmem:[%s5053 + $0x50] sm:$0xf]
        %v5068 = vld [vmem:[%s5053 + $0x54] sm:$0xff]
        %v5069 = vld [vmem:[%s5053 + $0x5c] sm:$0xf]
        %v5070 = vld [vmem:[%s5053 + $0x60] sm:$0xff]
        %v5071 = vld [vmem:[%s5053 + $0x68] sm:$0xf]
        %v5072 = vld [vmem:[%s5053 + $0x6c] sm:$0xff]
        %v5073 = vld [vmem:[%s5053 + $0x74] sm:$0xf]
        %v5074 = vld [vmem:[%s5053 + $0x78] sm:$0xff]
        %v5075 = vld [vmem:[%s5053 + $0x80] sm:$0xf]
        %v5076 = vld [vmem:[%s5053 + $0x84] sm:$0xff]
        %v5077 = vld [vmem:[%s5053 + $0x8c] sm:$0xf]
        %v5102 = vunpack.c.l.b16 %v5054
        %v5103 = vunpack.c.h.b16 %v5054
        %v5104 = vunpack.c.l.b16 %v5055
        %v5105 = vunpack.c.l.b16 %v5056
        %v5106 = vunpack.c.h.b16 %v5056
        %v5107 = vunpack.c.l.b16 %v5057
        %v5108 = vunpack.c.l.b16 %v5058
        %v5109 = vunpack.c.h.b16 %v5058
        %v5110 = vunpack.c.l.b16 %v5059
        %v5111 = vunpack.c.l.b16 %v5060
        %v5112 = vunpack.c.h.b16 %v5060
        %v5113 = vunpack.c.l.b16 %v5061
        %v5114 = vunpack.c.l.b16 %v5062
        %v5115 = vunpack.c.h.b16 %v5062
        %v5116 = vunpack.c.l.b16 %v5063
        %v5117 = vunpack.c.l.b16 %v5064
        %v5118 = vunpack.c.h.b16 %v5064
        %v5119 = vunpack.c.l.b16 %v5065
        %v5120 = vunpack.c.l.b16 %v5066
        %v5121 = vunpack.c.h.b16 %v5066
        %v5122 = vunpack.c.l.b16 %v5067
        %v5123 = vunpack.c.l.b16 %v5068
        %v5124 = vunpack.c.h.b16 %v5068
        %v5125 = vunpack.c.l.b16 %v5069
        %v5126 = vunpack.c.l.b16 %v5070
        %v5127 = vunpack.c.h.b16 %v5070
        %v5128 = vunpack.c.l.b16 %v5071
        %v5129 = vunpack.c.l.b16 %v5072
        %v5130 = vunpack.c.h.b16 %v5072
        %v5131 = vunpack.c.l.b16 %v5073
        %v5132 = vunpack.c.l.b16 %v5074
        %v5133 = vunpack.c.h.b16 %v5074
        %v5134 = vunpack.c.l.b16 %v5075
        %v5135 = vunpack.c.l.b16 %v5076
        %v5136 = vunpack.c.h.b16 %v5076
        %v5137 = vunpack.c.l.b16 %v5077
        %v5138 = vpack.c.b16 %v5105, %v5102
        %v5139 = vpack.c.b16 %v5106, %v5103
        %v5140 = vpack.c.b16 %v5107, %v5104
        %v5141 = vpack.c.b16 %v5111, %v5108
        %v5142 = vpack.c.b16 %v5112, %v5109
        %v5143 = vpack.c.b16 %v5113, %v5110
        %v5144 = vpack.c.b16 %v5117, %v5114
        %v5145 = vpack.c.b16 %v5118, %v5115
        %v5146 = vpack.c.b16 %v5119, %v5116
        %v5147 = vpack.c.b16 %v5123, %v5120
        %v5148 = vpack.c.b16 %v5124, %v5121
        %v5149 = vpack.c.b16 %v5125, %v5122
        %v5150 = vpack.c.b16 %v5129, %v5126
        %v5151 = vpack.c.b16 %v5130, %v5127
        %v5152 = vpack.c.b16 %v5131, %v5128
        %v5153 = vpack.c.b16 %v5135, %v5132
        %v5154 = vpack.c.b16 %v5136, %v5133
        %v5155 = vpack.c.b16 %v5137, %v5134
        %v5175 = vsel %vm3127, %v5052, 0
        %5177 = vmatprep.subr.bf16.mxu0 %v5139
        %5178 = vmatpush1.bf16.msra.mxu0 %v5138
        %5179 = vmatprep.subr.bf16.mxu0 %v5142
        %5180 = vmatpush1.bf16.msra.mxu0 %v5141
        %5181 = vmatprep.subr.bf16.mxu0 %v5145
        %5182 = vmatpush1.bf16.msra.mxu0 %v5144
        %5183 = vmatprep.subr.bf16.mxu0 %v5148
        %5184 = vmatpush1.bf16.msra.mxu0 %v5147
        %5185 = vmatprep.subr.bf16.mxu0 %v5151
        %5186 = vmatpush1.bf16.msra.mxu0 %v5150
        %5187 = vmatprep.subr.bf16.mxu0 %v5154
        %5188 = vmatpush1.bf16.msra.mxu0 %v5153
        %5189 = vmatprep.subr.bf16.mxu0 0
        %5190 = vmatpush1.bf16.msra.mxu0 0
        %5191 = vmatprep.subr.bf16.mxu0 0
        %5192 = vmatpush1.bf16.msra.mxu0 0
        %5193 = vmatprep.subr.bf16.mxu0 0
        %5194 = vmatpush1.bf16.msra.mxu0 0
        %5195 = vmatprep.subr.bf16.mxu0 0
        %5196 = vmatpush1.bf16.msra.mxu0 0
        %5197 = vmatprep.subr.bf16.mxu0 0
        %5198 = vmatpush1.bf16.msra.mxu0 0
        %5199 = vmatprep.subr.bf16.mxu0 0
        %5200 = vmatpush1.bf16.msra.mxu0 0
        %5201 = vmatprep.subr.bf16.mxu0 0
        %5202 = vmatpush1.bf16.msra.mxu0 0
        %5203 = vmatprep.subr.bf16.mxu0 0
        %5204 = vmatpush1.bf16.msra.mxu0 0
        %5205 = vmatprep.subr.bf16.mxu0 0
        %5206 = vmatpush1.bf16.msra.mxu0 0
        %5207 = vmatprep.subr.bf16.mxu0 0
        %5208 = vmatpush1.bf16.msra.mxu0 0
        %5209 = vmatprep.mubr.bf16.mxu0 0
        %5210 = vmatmul.mubr.bf16.gmra.mrb[0].mxu0 %v5175
        %v5211 = vpop.f32.mrb[0].mxu0
        %v5212 = vadd.f32 0.0, %v5211
        %v5213 = vpop.f32.mrb[0].mxu0
        %v5214 = vadd.f32 0.0, %v5213
        %v5215 = vpop.f32.mrb[0].mxu0
        %v5216 = vadd.f32 0.0, %v5215
        %v5217 = vpop.f32.mrb[0].mxu0
        %v5218 = vadd.f32 0.0, %v5217
        %5219 = vdwg.mxu0
        %5220 = vmatprep.subr.bf16.mxu0 0
        %5221 = vmatpush1.bf16.msra.mxu0 %v5140
        %5222 = vmatprep.subr.bf16.mxu0 0
        %5223 = vmatpush1.bf16.msra.mxu0 %v5143
        %5224 = vmatprep.subr.bf16.mxu0 0
        %5225 = vmatpush1.bf16.msra.mxu0 %v5146
        %5226 = vmatprep.subr.bf16.mxu0 0
        %5227 = vmatpush1.bf16.msra.mxu0 %v5149
        %5228 = vmatprep.subr.bf16.mxu0 0
        %5229 = vmatpush1.bf16.msra.mxu0 %v5152
        %5230 = vmatprep.subr.bf16.mxu0 0
        %5231 = vmatpush1.bf16.msra.mxu0 %v5155
        %5232 = vmatprep.subr.bf16.mxu0 0
        %5233 = vmatpush1.bf16.msra.mxu0 0
        %5234 = vmatprep.subr.bf16.mxu0 0
        %5235 = vmatpush1.bf16.msra.mxu0 0
        %5236 = vmatprep.subr.bf16.mxu0 0
        %5237 = vmatpush1.bf16.msra.mxu0 0
        %5238 = vmatprep.subr.bf16.mxu0 0
        %5239 = vmatpush1.bf16.msra.mxu0 0
        %5240 = vmatprep.subr.bf16.mxu0 0
        %5241 = vmatpush1.bf16.msra.mxu0 0
        %5242 = vmatprep.subr.bf16.mxu0 0
        %5243 = vmatpush1.bf16.msra.mxu0 0
        %5244 = vmatprep.subr.bf16.mxu0 0
        %5245 = vmatpush1.bf16.msra.mxu0 0
        %5246 = vmatprep.subr.bf16.mxu0 0
        %5247 = vmatpush1.bf16.msra.mxu0 0
        %5248 = vmatprep.subr.bf16.mxu0 0
        %5249 = vmatpush1.bf16.msra.mxu0 0
        %5250 = vmatprep.subr.bf16.mxu0 0
        %5251 = vmatpush1.bf16.msra.mxu0 0
        %5252 = vmatprep.mubr.bf16.mxu0 0
        %5253 = vmatmul.mubr.bf16.gmra.mrb[0].mxu0 %v5175
        %v5254 = vpop.f32.mrb[0].mxu0
        %v5255 = vadd.f32 0.0, %v5254
        %v5256 = vpop.f32.mrb[0].mxu0
        %v5257 = vpop.f32.mrb[0].mxu0
        %v5258 = vadd.f32 0.0, %v5257
        %v5259 = vpop.f32.mrb[0].mxu0
        %5260 = vdwg.mxu0
        %v5261 = vadd.f32 %v4994, %v5212
        %v5262 = vadd.f32 %v4995, %v5214
        %v5263 = vadd.f32 %v4996, %v5255
        %v5264 = vadd.f32 %v4997, %v5216
        %v5265 = vadd.f32 %v4998, %v5218
        %v5266 = vadd.f32 %v4999, %v5258
        %v5267 = vld [vmem:[%s8] sm:$0x7]
        %v5269 = vlaneseq
        %v5270 = vshrl.u32 %v5269, 7
        %v5271 = vsub.s32 0, %v5270
        %v5272 = vrot.slane %v5267, %v5271
        %v5273 = vlaneseq
        %v5274 = vshrl.u32 %v5273, 7
        %v5275 = vsub.s32 1, %v5274
        %v5276 = vrot.slane %v5267, %v5275
        %v5277 = vlaneseq
        %v5278 = vshrl.u32 %v5277, 7
        %v5279 = vsub.s32 2, %v5278
        %v5280 = vrot.slane %v5267, %v5279
        %v5284 = vadd.f32 %v5261, %v5272
        %v5285 = vadd.f32 %v5262, %v5276
        %v5286 = vadd.f32 %v5263, %v5280
        %v5287 = vadd.f32 %v5264, %v5272
        %v5288 = vadd.f32 %v5265, %v5276
        %v5289 = vadd.f32 %v5266, %v5280
        %v5290 = vmax.f32 %v5284, 0.0
        %v5291 = vmax.f32 %v5285, 0.0
        %v5292 = vmax.f32 %v5286, 0.0
        %v5293 = vmax.f32 %v5287, 0.0
        %v5294 = vmax.f32 %v5288, 0.0
        %v5295 = vmax.f32 %v5289, 0.0
        %v5296 = vadd.f32 %v5290, %v5293
        %v5297 = vrot.slane %v5296, 4
        %v5298 = vadd.f32 %v5296, %v5297
        %v5299 = vrot.slane %v5298, 2
        %v5300 = vadd.f32 %v5298, %v5299
        %v5301 = vrot.slane %v5300, 1
        %v5302 = vadd.f32 %v5300, %v5301
        %v5303 = vadd.f32 %v5291, %v5294
        %v5304 = vrot.slane %v5303, 4
        %v5305 = vadd.f32 %v5303, %v5304
        %v5306 = vrot.slane %v5305, 2
        %v5307 = vadd.f32 %v5305, %v5306
        %v5308 = vrot.slane %v5307, 1
        %v5309 = vadd.f32 %v5307, %v5308
        %v5310 = vadd.f32 %v5292, %v5295
        %v5311 = vrot.slane %v5310, 4
        %v5312 = vadd.f32 %v5310, %v5311
        %v5313 = vrot.slane %v5312, 2
        %v5314 = vadd.f32 %v5312, %v5313
        %v5315 = vrot.slane %v5314, 1
        %v5316 = vadd.f32 %v5314, %v5315
        %v5317 = vrcp.pop 16.0
        %v5318 = vmul.f32 %v5302, %v5317
        %v5319 = vmul.f32 %v5309, %v5317
        %v5320 = vmul.f32 %v5316, %v5317
        %v5321 = vpack.c.bf16 %v5318, %v5318
        %v5322 = vpack.c.bf16 %v5319, %v5319
        %v5323 = vpack.c.bf16 %v5320, %v5320
        %v5324 = vld [vmem:[#allocation7] sm:$0xf]
        %v5325 = vld [vmem:[#allocation7 + $0x4] sm:$0xf]
        %v5326 = vld [vmem:[#allocation7 + $0x8] sm:$0xf]
        %v5327 = vld [vmem:[#allocation7 + $0xc] sm:$0xf]
        %v5328 = vld [vmem:[#allocation7 + $0x10] sm:$0xf]
        %v5329 = vld [vmem:[#allocation7 + $0x14] sm:$0xf]
        %v5330 = vld [vmem:[#allocation7 + $0x18] sm:$0xf]
        %v5331 = vld [vmem:[#allocation7 + $0x1c] sm:$0xf]
        %v5332 = vld [vmem:[#allocation7 + $0x20] sm:$0xf]
        %v5333 = vld [vmem:[#allocation7 + $0x24] sm:$0xf]
        %v5334 = vld [vmem:[#allocation7 + $0x28] sm:$0xf]
        %v5335 = vld [vmem:[#allocation7 + $0x2c] sm:$0xf]
        %v5336 = vld [vmem:[#allocation7 + $0x30] sm:$0xf]
        %v5337 = vld [vmem:[#allocation7 + $0x34] sm:$0xf]
        %v5338 = vld [vmem:[#allocation7 + $0x38] sm:$0xf]
        %v5339 = vld [vmem:[#allocation7 + $0x3c] sm:$0xf]
        %v5340 = vld [vmem:[#allocation7 + $0x40] sm:$0xf]
        %v5341 = vld [vmem:[#allocation7 + $0x44] sm:$0xf]
        %v5342 = vld [vmem:[#allocation7 + $0x48] sm:$0xf]
        %v5343 = vld [vmem:[#allocation7 + $0x4c] sm:$0xf]
        %v5344 = vld [vmem:[#allocation7 + $0x50] sm:$0xf]
        %v5345 = vld [vmem:[#allocation7 + $0x54] sm:$0xf]
        %v5346 = vld [vmem:[#allocation7 + $0x58] sm:$0xf]
        %v5347 = vld [vmem:[#allocation7 + $0x5c] sm:$0xf]
        %v5348 = vld [vmem:[#allocation7 + $0x60] sm:$0xf]
        %v5349 = vld [vmem:[#allocation7 + $0x64] sm:$0xf]
        %v5350 = vld [vmem:[#allocation7 + $0x68] sm:$0xf]
        %v5351 = vld [vmem:[#allocation7 + $0x6c] sm:$0xf]
        %v5352 = vld [vmem:[#allocation7 + $0x70] sm:$0xf]
        %v5353 = vld [vmem:[#allocation7 + $0x74] sm:$0xf]
        %v5354 = vld [vmem:[#allocation7 + $0x78] sm:$0xf]
        %v5355 = vld [vmem:[#allocation7 + $0x7c] sm:$0xf]
        %v5356 = vld [vmem:[#allocation7 + $0x80] sm:$0xf]
        %v5357 = vld [vmem:[#allocation7 + $0x84] sm:$0xf]
        %v5358 = vld [vmem:[#allocation7 + $0x88] sm:$0xf]
        %v5359 = vld [vmem:[#allocation7 + $0x8c] sm:$0xf]
        %v5360 = vld [vmem:[#allocation7 + $0x90] sm:$0xf]
        %v5361 = vld [vmem:[#allocation7 + $0x94] sm:$0xf]
        %v5362 = vld [vmem:[#allocation7 + $0x98] sm:$0xf]
        %v5363 = vld [vmem:[#allocation7 + $0x9c] sm:$0xf]
        %v5364 = vld [vmem:[#allocation7 + $0xa0] sm:$0xf]
        %v5365 = vld [vmem:[#allocation7 + $0xa4] sm:$0xf]
        %v5366 = vld [vmem:[#allocation7 + $0xa8] sm:$0xf]
        %v5367 = vld [vmem:[#allocation7 + $0xac] sm:$0xf]
        %v5368 = vld [vmem:[#allocation7 + $0xb0] sm:$0xf]
        %v5369 = vld [vmem:[#allocation7 + $0xb4] sm:$0xf]
        %v5370 = vld [vmem:[#allocation7 + $0xb8] sm:$0xf]
        %v5371 = vld [vmem:[#allocation7 + $0xbc] sm:$0xf]
        %v5372 = vld [vmem:[%s10] sm:$0x1]
        %v5421 = vunpack.c.l.b16 %v5324
        %v5422 = vunpack.c.l.b16 %v5325
        %v5423 = vunpack.c.l.b16 %v5326
        %v5424 = vunpack.c.l.b16 %v5327
        %v5425 = vunpack.c.l.b16 %v5328
        %v5426 = vunpack.c.l.b16 %v5329
        %v5427 = vunpack.c.l.b16 %v5330
        %v5428 = vunpack.c.l.b16 %v5331
        %v5429 = vunpack.c.l.b16 %v5332
        %v5430 = vunpack.c.l.b16 %v5333
        %v5431 = vunpack.c.l.b16 %v5334
        %v5432 = vunpack.c.l.b16 %v5335
        %v5433 = vunpack.c.l.b16 %v5336
        %v5434 = vunpack.c.l.b16 %v5337
        %v5435 = vunpack.c.l.b16 %v5338
        %v5436 = vunpack.c.l.b16 %v5339
        %v5437 = vunpack.c.l.b16 %v5340
        %v5438 = vunpack.c.l.b16 %v5341
        %v5439 = vunpack.c.l.b16 %v5342
        %v5440 = vunpack.c.l.b16 %v5343
        %v5441 = vunpack.c.l.b16 %v5344
        %v5442 = vunpack.c.l.b16 %v5345
        %v5443 = vunpack.c.l.b16 %v5346
        %v5444 = vunpack.c.l.b16 %v5347
        %v5445 = vunpack.c.l.b16 %v5348
        %v5446 = vunpack.c.l.b16 %v5349
        %v5447 = vunpack.c.l.b16 %v5350
        %v5448 = vunpack.c.l.b16 %v5351
        %v5449 = vunpack.c.l.b16 %v5352
        %v5450 = vunpack.c.l.b16 %v5353
        %v5451 = vunpack.c.l.b16 %v5354
        %v5452 = vunpack.c.l.b16 %v5355
        %v5453 = vunpack.c.l.b16 %v5356
        %v5454 = vunpack.c.l.b16 %v5357
        %v5455 = vunpack.c.l.b16 %v5358
        %v5456 = vunpack.c.l.b16 %v5359
        %v5457 = vunpack.c.l.b16 %v5360
        %v5458 = vunpack.c.l.b16 %v5361
        %v5459 = vunpack.c.l.b16 %v5362
        %v5460 = vunpack.c.l.b16 %v5363
        %v5461 = vunpack.c.l.b16 %v5364
        %v5462 = vunpack.c.l.b16 %v5365
        %v5463 = vunpack.c.l.b16 %v5366
        %v5464 = vunpack.c.l.b16 %v5367
        %v5465 = vunpack.c.l.b16 %v5368
        %v5466 = vunpack.c.l.b16 %v5369
        %v5467 = vunpack.c.l.b16 %v5370
        %v5468 = vunpack.c.l.b16 %v5371
        %v5469 = vpack.c.b16 %v5422, %v5421
        %v5470 = vpack.c.b16 %v5424, %v5423
        %v5471 = vpack.c.b16 %v5426, %v5425
        %v5472 = vpack.c.b16 %v5428, %v5427
        %v5473 = vpack.c.b16 %v5430, %v5429
        %v5474 = vpack.c.b16 %v5432, %v5431
        %v5475 = vpack.c.b16 %v5434, %v5433
        %v5476 = vpack.c.b16 %v5436, %v5435
        %v5477 = vpack.c.b16 %v5438, %v5437
        %v5478 = vpack.c.b16 %v5440, %v5439
        %v5479 = vpack.c.b16 %v5442, %v5441
        %v5480 = vpack.c.b16 %v5444, %v5443
        %v5481 = vpack.c.b16 %v5446, %v5445
        %v5482 = vpack.c.b16 %v5448, %v5447
        %v5483 = vpack.c.b16 %v5450, %v5449
        %v5484 = vpack.c.b16 %v5452, %v5451
        %v5485 = vpack.c.b16 %v5454, %v5453
        %v5486 = vpack.c.b16 %v5456, %v5455
        %v5487 = vpack.c.b16 %v5458, %v5457
        %v5488 = vpack.c.b16 %v5460, %v5459
        %v5489 = vpack.c.b16 %v5462, %v5461
        %v5490 = vpack.c.b16 %v5464, %v5463
        %v5491 = vpack.c.b16 %v5466, %v5465
        %v5492 = vpack.c.b16 %v5468, %v5467
        %5517 = vmatprep.subr.bf16.mxu0 0
        %5518 = vmatpush1.bf16.msra.mxu0 %v5469
        %5519 = vmatprep.subr.bf16.mxu0 0
        %5520 = vmatpush1.bf16.msra.mxu0 %v5470
        %5521 = vmatprep.subr.bf16.mxu0 0
        %5522 = vmatpush1.bf16.msra.mxu0 %v5471
        %5523 = vmatprep.subr.bf16.mxu0 0
        %5524 = vmatpush1.bf16.msra.mxu0 %v5472
        %5525 = vmatprep.subr.bf16.mxu0 0
        %5526 = vmatpush1.bf16.msra.mxu0 %v5473
        %5527 = vmatprep.subr.bf16.mxu0 0
        %5528 = vmatpush1.bf16.msra.mxu0 %v5474
        %5529 = vmatprep.subr.bf16.mxu0 0
        %5530 = vmatpush1.bf16.msra.mxu0 %v5475
        %5531 = vmatprep.subr.bf16.mxu0 0
        %5532 = vmatpush1.bf16.msra.mxu0 %v5476
        %5533 = vmatprep.subr.bf16.mxu0 0
        %5534 = vmatpush1.bf16.msra.mxu0 %v5477
        %5535 = vmatprep.subr.bf16.mxu0 0
        %5536 = vmatpush1.bf16.msra.mxu0 %v5478
        %5537 = vmatprep.subr.bf16.mxu0 0
        %5538 = vmatpush1.bf16.msra.mxu0 %v5479
        %5539 = vmatprep.subr.bf16.mxu0 0
        %5540 = vmatpush1.bf16.msra.mxu0 %v5480
        %5541 = vmatprep.subr.bf16.mxu0 0
        %5542 = vmatpush1.bf16.msra.mxu0 %v5481
        %5543 = vmatprep.subr.bf16.mxu0 0
        %5544 = vmatpush1.bf16.msra.mxu0 %v5482
        %5545 = vmatprep.subr.bf16.mxu0 0
        %5546 = vmatpush1.bf16.msra.mxu0 %v5483
        %5547 = vmatprep.subr.bf16.mxu0 0
        %5548 = vmatpush1.bf16.msra.mxu0 %v5484
        %5549 = vmatprep.mubr.bf16.mxu0 %v5322
        %5550 = vmatmul.mubr.bf16.gmra.mrb[0].mxu0 %v5321
        %v5551 = vpop.f32.mrb[0].mxu0
        %v5552 = vadd.f32 %v5372, %v5551
        %v5553 = vpop.f32.mrb[0].mxu0
        %v5554 = vpop.f32.mrb[0].mxu0
        %v5555 = vpop.f32.mrb[0].mxu0
        %5556 = vdwg.mxu0
        %5557 = vmatprep.subr.bf16.mxu0 0
        %5558 = vmatpush1.bf16.msra.mxu0 %v5485
        %5559 = vmatprep.subr.bf16.mxu0 0
        %5560 = vmatpush1.bf16.msra.mxu0 %v5486
        %5561 = vmatprep.subr.bf16.mxu0 0
        %5562 = vmatpush1.bf16.msra.mxu0 %v5487
        %5563 = vmatprep.subr.bf16.mxu0 0
        %5564 = vmatpush1.bf16.msra.mxu0 %v5488
        %5565 = vmatprep.subr.bf16.mxu0 0
        %5566 = vmatpush1.bf16.msra.mxu0 %v5489
        %5567 = vmatprep.subr.bf16.mxu0 0
        %5568 = vmatpush1.bf16.msra.mxu0 %v5490
        %5569 = vmatprep.subr.bf16.mxu0 0
        %5570 = vmatpush1.bf16.msra.mxu0 %v5491
        %5571 = vmatprep.subr.bf16.mxu0 0
        %5572 = vmatpush1.bf16.msra.mxu0 %v5492
        %5573 = vmatprep.subr.bf16.mxu0 0
        %5574 = vmatpush1.bf16.msra.mxu0 0
        %5575 = vmatprep.subr.bf16.mxu0 0
        %5576 = vmatpush1.bf16.msra.mxu0 0
        %5577 = vmatprep.subr.bf16.mxu0 0
        %5578 = vmatpush1.bf16.msra.mxu0 0
        %5579 = vmatprep.subr.bf16.mxu0 0
        %5580 = vmatpush1.bf16.msra.mxu0 0
        %5581 = vmatprep.subr.bf16.mxu0 0
        %5582 = vmatpush1.bf16.msra.mxu0 0
        %5583 = vmatprep.subr.bf16.mxu0 0
        %5584 = vmatpush1.bf16.msra.mxu0 0
        %5585 = vmatprep.subr.bf16.mxu0 0
        %5586 = vmatpush1.bf16.msra.mxu0 0
        %5587 = vmatprep.subr.bf16.mxu0 0
        %5588 = vmatpush1.bf16.msra.mxu0 0
        %5589 = vmatprep.mubr.bf16.mxu0 0
        %5590 = vmatmul.mubr.bf16.gmra.mrb[0].mxu0 %v5323
        %v5591 = vpop.f32.mrb[0].mxu0
        %v5592 = vadd.f32 %v5552, %v5591
        %v5593 = vpop.f32.mrb[0].mxu0
        %v5594 = vpop.f32.mrb[0].mxu0
        %v5595 = vpop.f32.mrb[0].mxu0
        %5596 = vdwg.mxu0
        %v5597 = vmax.f32 %v5592, 0.0
        %5598 = vst [vmem:[%s422] sm:$0x1] %v5597
        %s5599 = sand.u32 %s271, 1
        %s5600 = scalar_lea.sflag [#allocation4], %s5599
        %s5601 = sand.u32 %s271, 1
        %s5602 = scalar_lea.vmem [#allocation8], %s5601
        // Predicated region
        $region77: #{style_encoder_forward.1} parent=63 // pred_check
          %p5603 = pneg %p281
        $region78: #{style_encoder_forward.1} parent=63 // pred_check_branch
          %5605 = sbr.rel (%p5603) target = $region80
        $region79: #{style_encoder_forward.1} parent=63 // pred_region
          %s5607 = ssub.s32 16, 16
          %5608 = vsyncadd %s5600, %s5607
          %s5609 = smul.addr %s27, 16
          %s5610 = scalar_lea.hbm %s11, %s5609
          %s5612 = sshll.u32 %s5602, 4
          %s5613 = int_to_ptr.vmem [resolvable:$true] %s5612
          %5615 = dma.vmem_to_hbm [thread:$0]  %s5613, 16, %s5610, %s5600
        $region80: #{style_encoder_forward.1} parent=63 // pred_fallthru
          _
      $region64: #{style_encoder_forward.1} parent=5 // pred_fallthru
        _
      %p5616 = scmp.le.s32.totalorder 2, %s22
      // Predicated region
      $region81: #{style_encoder_forward.1} parent=5 // pred_check
        %p5617 = pneg %p5616
      $region82: #{style_encoder_forward.1} parent=5 // pred_check_branch
        %5619 = sbr.rel (%p5617) target = $region84
      $region83: #{style_encoder_forward.1} parent=5 // pred_region
        %s5620 = ssub.s32 %s22, 2
        // Predicated region
        $region85: #{style_encoder_forward.1} parent=83 // pred_check
          %p5621 = pneg %p287
        $region86: #{style_encoder_forward.1} parent=83 // pred_check_branch
          %5623 = sbr.rel (%p5621) target = $region88
        $region87: #{style_encoder_forward.1} parent=83 // pred_region
          %s5624 = sand.u32 %s272, 1
          %s5625 = scalar_lea.sflag [#allocation4], %s5624
          %s5626 = sand.u32 %s272, 1
          %s5627 = scalar_lea.vmem [#allocation8], %s5626
          %5628 = dma.done %s5625, 16
        $region88: #{style_encoder_forward.1} parent=83 // pred_fallthru
          _
      $region84: #{style_encoder_forward.1} parent=5 // pred_fallthru
        _
    $region6: #{style_encoder_forward.1} parent=1 // loop_footer
      %s26 = sadd.s32 1, %s22
    $region7: #{style_encoder_forward.1} parent=1 // loop_footer_branch
      %21 = sbr.rel target = $region3
    $region8: #{style_encoder_forward.1} parent=1 // loop_exit
      _
    %5629 = vsyncpa [#allocation3], 1
    %s5630 = scalar_lea.sflag [#allocation3], 1
    %5631 = vsyncpa %s5630, 1
    %5632 = vsyncpa [#allocation6], 1
    %5633 = vsyncpa [#allocation4], 1
    %s5634 = scalar_lea.sflag [#allocation4], 1
    %5635 = vsyncpa %s5634, 1

</llo_original>
